<compile_context>
chip_gen: v7x
topology: tpu7x:2x2x1
jax: 0.10.0
libtpu: 0.0.40
codegen_flags: <defaults>
</compile_context>

<pallas_src>
import functools

import jax
import jax.numpy as jnp
from jax import lax
from jax.experimental import pallas as pl
from jax.experimental.pallas import tpu as pltpu


_TN_CAP = 256            # compute-bound: larger batch tiles only inflate live ranges
_STRIP_FULL_UNROLL = 16  # P1 <= this -> strip loops fully unrolled at trace time


def _vmem_limits():
    """Return (vmem_limit_bytes request, per-tile working-set budget)."""
    phys = 64 * 1024 * 1024            # conservative fallback (v7x-sized VMEM)
    try:
        info = pltpu.get_tpu_info()
        phys = int(getattr(info, "vmem_capacity_bytes", phys))
    except Exception:
        pass
    # 128 MiB parts (v5e/v6e) -> 96 MiB scoped request; 64 MiB parts (v7x) -> 32 MiB.
    limit = min(max(phys - 32 * 1024 * 1024, 32 * 1024 * 1024), 96 * 1024 * 1024)
    budget = max(8 * 1024 * 1024, (limit * 3) // 4)
    return limit, budget


def _auto_tile_n(N, P1, P2, budget_bytes):
    """Lane-aligned batch tile: capped small (compute-bound) and VMEM-feasible."""
    # per-lane f32 words: double-buffered C + pi tiles, mu/nu/cost tiles, dual/marginal scratch
    bytes_per_col = 4 * (4 * P1 * P2 + 6 * (P1 + P2) + 4)
    cap = max(1, budget_bytes // bytes_per_col)
    cap = min(cap, _TN_CAP)
    if N < 256 and N <= cap:
        return N                        # one tile; block == full batch dim
    # TODO(synk): for very large P1*P2 (cap < 128) an online-logsumexp over P2 chunks
    # is needed instead of whole (P2, TN) strips.
    tn = max(128, (min(cap, N) // 128) * 128)
    if N >= 256:
        # guarantee >= 2 grid steps so both v7x TensorCores are busy
        tn = min(tn, max(128, ((N // 2) // 128) * 128))
    return tn


def _sinkhorn_kernel(mu_ref, nu_ref, c_ref, cost_ref, pi_ref,
                     u_sc, v_sc, u_prev_sc, elog_mu_sc, elog_nu_sc,
                     *, eps, thresh, check_every, n_full, rem):
    """One batch tile, batch on the lane axis.
       mu_ref:(P1,TN) nu_ref:(P2,TN) c_ref:(P1,P2,TN) cost_ref:(1,TN) pi_ref:(P1,P2,TN)
       scratch: u/u_prev/elog_mu:(P1,TN)  v/elog_nu:(P2,TN)
    """
    p1, p2, tn = c_ref.shape
    f_eps = jnp.float32(eps)
    inv_eps = jnp.float32(1.0 / eps)
    # sum|du| over (P1,TN) >= thresh*TN  <=>  tile mean over batch of sum_i|du_i| >= thresh
    err_thresh = jnp.float32(thresh * tn)

    # --- once per tile: eps*log(marginal + 1e-8) into scratch (re-read per strip,
    # keeps them out of the vreg live set across the hot loop); re-zero the duals
    # (scratch persists across grid steps).
    elog_mu_sc[...] = f_eps * jnp.log(mu_ref[...] + 1e-8)
    elog_nu_sc[...] = f_eps * jnp.log(nu_ref[...] + 1e-8)
    u_sc[...] = jnp.zeros_like(u_sc)
    v_sc[...] = jnp.zeros_like(v_sc)

    def strip_loop(body, init):
        # body(i, carry) -> carry, where i indexes P1 strips of shape (P2, TN).
        if p1 <= _STRIP_FULL_UNROLL:
            carry = init
            for i in range(p1):
                carry = body(i, carry)
            return carry
        return lax.fori_loop(0, p1, body, init,
                             unroll=8 if p1 % 8 == 0 else 1)

    def one_iter():
        # Sinkhorn identity (the "+u"/"+v" of the textbook update cancels):
        #   u_i = eps*log(mu_i) - eps*lse_j((v_j - C_ij)/eps)
        #   v_j = eps*log(nu_j) - eps*lse_i((u_i - C_ij)/eps)   (uses the new u)
        def u_strip(i, carry):
            m = (v_sc[...] - c_ref[i]) * inv_eps                           # (P2, TN)
            mx = jnp.max(m, axis=0, keepdims=True)                         # (1, TN)
            lse = mx + jnp.log(jnp.sum(jnp.exp(m - mx), axis=0, keepdims=True))
            u_sc[pl.ds(i, 1), :] = elog_mu_sc[pl.ds(i, 1), :] - f_eps * lse
            return carry
        strip_loop(u_strip, jnp.int32(0))

        # v-update reduces over P1 (the strip axis): two passes (max, then sum-exp)
        # so each element costs a single EUP exp; vld slots have slack for the re-read.
        def v_max_strip(i, mx):
            m = (u_sc[pl.ds(i, 1), :] - c_ref[i]) * inv_eps                # (P2, TN)
            return jnp.maximum(mx, m)
        mx = strip_loop(v_max_strip, jnp.full((p2, tn), -jnp.inf, jnp.float32))

        def v_sum_strip(i, s):
            m = (u_sc[pl.ds(i, 1), :] - c_ref[i]) * inv_eps
            return s + jnp.exp(m - mx)
        s = strip_loop(v_sum_strip, jnp.zeros((p2, tn), jnp.float32))
        v_sc[...] = elog_nu_sc[...] - f_eps * (mx + jnp.log(s))

    def check_block(n_iters):
        # n_iters is a static Python int -> fully unrolled at trace time.
        u_prev_sc[...] = u_sc[...]
        for _ in range(n_iters):
            one_iter()
        return jnp.sum(jnp.abs(u_sc[...] - u_prev_sc[...]))

    def cond(carry):
        blk, err = carry
        return jnp.logical_and(blk < n_full, err >= err_thresh)

    def body(carry):
        blk, _ = carry
        return blk + 1, check_block(check_every)

    _, err = lax.while_loop(cond, body, (jnp.int32(0), jnp.float32(jnp.inf)))

    if rem > 0:  # static remainder block (max_iter % check_every)
        @pl.when(err >= err_thresh)
        def _():
            check_block(rem)

    # TODO(synk): actual_nits (PyTorch side attribute) is not exposed; it would need
    # an extra SMEM scalar output.

    # --- epilogue: pi = exp((u_i + v_j - C_ij)/eps); cost = sum_ij pi*C, lane-dense.
    def final_strip(i, cost_acc):
        m = (u_sc[pl.ds(i, 1), :] + v_sc[...] - c_ref[i]) * inv_eps
        p = jnp.exp(m)                                                     # (P2, TN)
        pi_ref[i, :, :] = p
        return cost_acc + jnp.sum(p * c_ref[i], axis=0, keepdims=True)
    cost_ref[...] = strip_loop(final_strip, jnp.zeros((1, tn), jnp.float32))


def sinkhorn_distance(mu, nu, C, *, eps, max_iter, reduction="none",
                      thresh=0.1, check_every=4, tile_n=None):
    """Forward pass of SinkhornDistance. Returns (cost, pi, C) like the PyTorch module.

    Early stopping is evaluated every `check_every` iterations per batch tile
    (PyTorch checks a whole-batch mean every iteration), so iteration counts can
    differ slightly; converged results agree to tolerance.  `tile_n`, if given,
    should be a multiple of 128 or >= N.
    """
    mu = jnp.asarray(mu, jnp.float32)
    nu = jnp.asarray(nu, jnp.float32)
    C = jnp.asarray(C, jnp.float32)
    N, P1 = mu.shape
    P2 = nu.shape[1]
    max_iter = int(max_iter)
    check_every = max(1, min(int(check_every), max(1, max_iter)))
    n_full = max_iter // check_every
    rem = max_iter % check_every

    vmem_limit, tile_budget = _vmem_limits()

    # Batch-on-lanes layout (layout plumbing only; outputs come back lane-dense).
    mu_t = mu.T                          # (P1, N)
    nu_t = nu.T                          # (P2, N)
    C_t = jnp.transpose(C, (1, 2, 0))    # (P1, P2, N)

    tn = int(tile_n) if tile_n is not None else _auto_tile_n(N, P1, P2, tile_budget)
    n_pad = (-N) % tn
    if n_pad:
        # Pad with a trivially-converging problem (uniform marginals, zero cost).
        # TODO(synk): padded lanes dilute the last tile's mean |du|, so that tile can
        # early-stop one check interval sooner than an unpadded run of the same data.
        mu_t = jnp.pad(mu_t, ((0, 0), (0, n_pad)), constant_values=1.0 / P1)
        nu_t = jnp.pad(nu_t, ((0, 0), (0, n_pad)), constant_values=1.0 / P2)
        C_t = jnp.pad(C_t, ((0, 0), (0, 0), (0, n_pad)))
    n_total = N + n_pad
    grid = (n_total // tn,)

    kernel = functools.partial(
        _sinkhorn_kernel, eps=float(eps), thresh=float(thresh),
        check_every=check_every, n_full=n_full, rem=rem)

    cost_t, pi_t = pl.pallas_call(
        kernel,
        grid=grid,
        out_shape=(
            jax.ShapeDtypeStruct((1, n_total), jnp.float32),        # cost (lane-dense)
            jax.ShapeDtypeStruct((P1, P2, n_total), jnp.float32),   # transport plan
        ),
        in_specs=[
            pl.BlockSpec((P1, tn), lambda b: (0, b)),
            pl.BlockSpec((P2, tn), lambda b: (0, b)),
            pl.BlockSpec((P1, P2, tn), lambda b: (0, 0, b)),
        ],
        out_specs=(
            pl.BlockSpec((1, tn), lambda b: (0, b)),
            pl.BlockSpec((P1, P2, tn), lambda b: (0, 0, b)),
        ),
        scratch_shapes=[
            pltpu.VMEM((P1, tn), jnp.float32),   # u
            pltpu.VMEM((P2, tn), jnp.float32),   # v
            pltpu.VMEM((P1, tn), jnp.float32),   # u_prev (early-stop err)
            pltpu.VMEM((P1, tn), jnp.float32),   # eps*log(mu + 1e-8)
            pltpu.VMEM((P2, tn), jnp.float32),   # eps*log(nu + 1e-8)
        ],
        compiler_params=pltpu.CompilerParams(
            dimension_semantics=("parallel",),
            vmem_limit_bytes=vmem_limit,
        ),
    )(mu_t, nu_t, C_t)

    cost = cost_t[0, :N]                              # (N,)
    pi = jnp.transpose(pi_t[:, :, :N], (2, 0, 1))     # (N, P1, P2)
    if reduction == "mean":
        cost = cost.mean()
    elif reduction == "sum":
        cost = cost.sum()
    return cost, pi, C


def _reference(mu, nu, C, *, eps, max_iter, thresh=0.1, check_every=4):
    """Pure-JAX reference mirroring the PyTorch forward with the kernel's
    every-`check_every`-iterations early-stop cadence."""
    n = mu.shape[0]
    log_mu = jnp.log(mu + 1e-8)
    log_nu = jnp.log(nu + 1e-8)
    max_iter = int(max_iter)
    check_every = max(1, min(int(check_every), max(1, max_iter)))
    n_full = max_iter // check_every
    rem = max_iter % check_every

    def M(u, v):
        return (-C + u[:, :, None] + v[:, None, :]) / eps

    def lse(m, axis):
        mx = jnp.max(m, axis=axis, keepdims=True)
        return jnp.squeeze(mx, axis) + jnp.log(jnp.sum(jnp.exp(m - mx), axis=axis))

    def one_iter(u, v):
        u = eps * (log_mu - lse(M(u, v), -1)) + u
        v = eps * (log_nu - lse(M(u, v), 1)) + v
        return u, v

    def block(u, v, k):
        for _ in range(k):
            u, v = one_iter(u, v)
        return u, v

    def cond(c):
        _, _, i, err = c
        return jnp.logical_and(i < n_full, err >= thresh)

    def body(c):
        u, v, i, _ = c
        u1 = u
        u, v = block(u, v, check_every)
        err = jnp.sum(jnp.abs(u - u1)) / n
        return u, v, i + 1, err

    u0 = jnp.zeros_like(mu)
    v0 = jnp.zeros_like(nu)
    u, v, _, err = lax.while_loop(cond, body, (u0, v0, jnp.int32(0), jnp.float32(jnp.inf)))
    if rem > 0:
        u, v = lax.cond(err >= thresh,
                        lambda uv: block(uv[0], uv[1], rem),
                        lambda uv: uv, (u, v))
    pi = jnp.exp(M(u, v))
    cost = jnp.sum(pi * C, axis=(-2, -1))
    return cost, pi


if __name__ == "__main__":
    key = jax.random.PRNGKey(0)
    eps, max_iter = 0.1, 100

    # --- small test: single batch tile --------------------------------------
    N, P1, P2, D = 4, 8, 16, 4
    kx, ky = jax.random.split(key)
    x = jax.random.normal(kx, (N, P1, D), jnp.float32)
    y = jax.random.normal(ky, (N, P2, D), jnp.float32)
    C = jnp.sum((x[:, :, None, :] - y[:, None, :, :]) ** 2, axis=-1)   # (N, P1, P2)
    mu = jnp.full((N, P1), 1.0 / P1, jnp.float32)
    nu = jnp.full((N, P2), 1.0 / P2, jnp.float32)

    cost, pi, C_out = sinkhorn_distance(mu, nu, C, eps=eps, max_iter=max_iter)
    jax.block_until_ready((cost, pi, C_out))

    cost_ref, pi_ref = _reference(mu, nu, C, eps=eps, max_iter=max_iter, check_every=4)
    assert cost.shape == (N,) and pi.shape == (N, P1, P2) and C_out.shape == (N, P1, P2)
    assert jnp.allclose(cost, cost_ref, rtol=1e-3, atol=1e-4), (cost, cost_ref)
    assert jnp.allclose(pi, pi_ref, rtol=1e-3, atol=1e-5)
    assert jnp.allclose(C_out, C)

    # 'mean' / 'sum' reductions
    cost_m, _, _ = sinkhorn_distance(mu, nu, C, eps=eps, max_iter=max_iter, reduction="mean")
    cost_s, _, _ = sinkhorn_distance(mu, nu, C, eps=eps, max_iter=max_iter, reduction="sum")
    assert jnp.allclose(cost_m, cost_ref.mean(), rtol=1e-3, atol=1e-4)
    assert jnp.allclose(cost_s, cost_ref.sum(), rtol=1e-3, atol=1e-4)

    # --- gridded test: batch tiled on the 128-lane axis (2 grid steps) ------
    N2, tile = 256, 128
    k1, k2 = jax.random.split(jax.random.PRNGKey(1))
    x2 = jax.random.normal(k1, (N2, P1, D), jnp.float32)
    y2 = jax.random.normal(k2, (N2, P2, D), jnp.float32)
    C2 = jnp.sum((x2[:, :, None, :] - y2[:, None, :, :]) ** 2, axis=-1)
    mu2 = jnp.full((N2, P1), 1.0 / P1, jnp.float32)
    nu2 = jnp.full((N2, P2), 1.0 / P2, jnp.float32)

    cost2, pi2, _ = sinkhorn_distance(mu2, nu2, C2, eps=eps, max_iter=max_iter, tile_n=tile)
    jax.block_until_ready((cost2, pi2))

    # Reference with the same per-tile early-stop semantics.
    cr, pr = [], []
    for s in range(0, N2, tile):
        c_r, p_r = _reference(mu2[s:s + tile], nu2[s:s + tile], C2[s:s + tile],
                              eps=eps, max_iter=max_iter, check_every=4)
        cr.append(c_r)
        pr.append(p_r)
    cost2_ref = jnp.concatenate(cr)
    pi2_ref = jnp.concatenate(pr)
    assert jnp.allclose(cost2, cost2_ref, rtol=1e-3, atol=1e-4)
    assert jnp.allclose(pi2, pi2_ref, rtol=1e-3, atol=1e-5)

    print("KERNEL_OK")
</pallas_src>

<mosaic_0001>
module attributes {stable_mosaic.version = 11 : i64} {
  func.func @_sinkhorn_kernel(%arg0: i32, %arg1: memref<8x4xf32, #tpu.memory_space<vmem>>, %arg2: memref<16x4xf32, #tpu.memory_space<vmem>>, %arg3: memref<8x16x4xf32, #tpu.memory_space<vmem>>, %arg4: memref<1x4xf32, #tpu.memory_space<vmem>>, %arg5: memref<8x16x4xf32, #tpu.memory_space<vmem>>, %arg6: memref<8x4xf32, #tpu.memory_space<vmem>>, %arg7: memref<16x4xf32, #tpu.memory_space<vmem>>, %arg8: memref<8x4xf32, #tpu.memory_space<vmem>>, %arg9: memref<8x4xf32, #tpu.memory_space<vmem>>, %arg10: memref<16x4xf32, #tpu.memory_space<vmem>>) attributes {dimension_semantics = [#tpu.dimension_semantics<parallel>], iteration_bounds = array<i64: 1>, scalar_prefetch = 0 : i64, scratch_operands = 5 : i64, tpu.core_type = #tpu.core_type<tc>, window_params = [{transform_indices = @transform_0, window_bounds = array<i64: 8, 4>}, {transform_indices = @transform_1, window_bounds = array<i64: 16, 4>}, {transform_indices = @transform_2, window_bounds = array<i64: 8, 16, 4>}, {transform_indices = @transform_3, window_bounds = array<i64: 1, 4>}, {transform_indices = @transform_4, window_bounds = array<i64: 8, 16, 4>}]} {
    %c0 = arith.constant 0 : index
    %c0_0 = arith.constant 0 : index
    %0 = vector.load %arg1[%c0, %c0_0] : memref<8x4xf32, #tpu.memory_space<vmem>>, vector<8x4xf32>
    %cst = arith.constant 9.99999993E-9 : f32
    %1 = vector.broadcast %cst : f32 to vector<8x4xf32>
    %2 = arith.addf %0, %1 : vector<8x4xf32>
    %3 = math.log %2 : vector<8x4xf32>
    %cst_1 = arith.constant 1.000000e-01 : f32
    %4 = vector.broadcast %cst_1 : f32 to vector<8x4xf32>
    %5 = arith.mulf %4, %3 : vector<8x4xf32>
    %c0_2 = arith.constant 0 : index
    %c0_3 = arith.constant 0 : index
    %6 = vector.load %arg9[%c0_2, %c0_3] : memref<8x4xf32, #tpu.memory_space<vmem>>, vector<8x4xf32>
    tpu.vector_store %arg9[%c0_2, %c0_3], %5 {strides = array<i32>} : memref<8x4xf32, #tpu.memory_space<vmem>>, vector<8x4xf32>,
    %c0_4 = arith.constant 0 : index
    %c0_5 = arith.constant 0 : index
    %7 = vector.load %arg2[%c0_4, %c0_5] : memref<16x4xf32, #tpu.memory_space<vmem>>, vector<16x4xf32>
    %cst_6 = arith.constant 9.99999993E-9 : f32
    %8 = vector.broadcast %cst_6 : f32 to vector<16x4xf32>
    %9 = arith.addf %7, %8 : vector<16x4xf32>
    %10 = math.log %9 : vector<16x4xf32>
    %cst_7 = arith.constant 1.000000e-01 : f32
    %11 = vector.broadcast %cst_7 : f32 to vector<16x4xf32>
    %12 = arith.mulf %11, %10 : vector<16x4xf32>
    %c0_8 = arith.constant 0 : index
    %c0_9 = arith.constant 0 : index
    %13 = vector.load %arg10[%c0_8, %c0_9] : memref<16x4xf32, #tpu.memory_space<vmem>>, vector<16x4xf32>
    tpu.vector_store %arg10[%c0_8, %c0_9], %12 {strides = array<i32>} : memref<16x4xf32, #tpu.memory_space<vmem>>, vector<16x4xf32>,
    %cst_10 = arith.constant 0.000000e+00 : f32
    %14 = vector.broadcast %cst_10 : f32 to vector<8x4xf32>
    %c0_11 = arith.constant 0 : index
    %c0_12 = arith.constant 0 : index
    %15 = vector.load %arg6[%c0_11, %c0_12] : memref<8x4xf32, #tpu.memory_space<vmem>>, vector<8x4xf32>
    tpu.vector_store %arg6[%c0_11, %c0_12], %14 {strides = array<i32>} : memref<8x4xf32, #tpu.memory_space<vmem>>, vector<8x4xf32>,
    %cst_13 = arith.constant 0.000000e+00 : f32
    %16 = vector.broadcast %cst_13 : f32 to vector<16x4xf32>
    %c0_14 = arith.constant 0 : index
    %c0_15 = arith.constant 0 : index
    %17 = vector.load %arg7[%c0_14, %c0_15] : memref<16x4xf32, #tpu.memory_space<vmem>>, vector<16x4xf32>
    tpu.vector_store %arg7[%c0_14, %c0_15], %16 {strides = array<i32>} : memref<16x4xf32, #tpu.memory_space<vmem>>, vector<16x4xf32>,
    %cst_16 = arith.constant 4.000000e-01 : f32
    %cst_17 = arith.constant 1.000000e+01 : f32
    %cst_18 = arith.constant 1.000000e-01 : f32
    %c0_i32 = arith.constant 0 : i32
    %cst_19 = arith.constant 0x7F800000 : f32
    %18:2 = scf.while (%arg11 = %c0_i32, %arg12 = %cst_19) : (i32, f32) -> (i32, f32) {
      %c25_i32 = arith.constant 25 : i32
      %173 = arith.cmpi slt, %arg11, %c25_i32 : i32
      %174 = arith.cmpf oge, %arg12, %cst_16 : f32
      %175 = arith.andi %173, %174 : i1
      scf.condition(%175) %arg11, %arg12 : i32, f32
    } do {
    ^bb0(%arg11: i32, %arg12: f32):
      %c1_i32 = arith.constant 1 : i32
      %173 = arith.addi %arg11, %c1_i32 : i32
      %c0_136 = arith.constant 0 : index
      %c0_137 = arith.constant 0 : index
      %174 = vector.load %arg6[%c0_136, %c0_137] : memref<8x4xf32, #tpu.memory_space<vmem>>, vector<8x4xf32>
      %c0_138 = arith.constant 0 : index
      %c0_139 = arith.constant 0 : index
      %175 = vector.load %arg8[%c0_138, %c0_139] : memref<8x4xf32, #tpu.memory_space<vmem>>, vector<8x4xf32>
      tpu.vector_store %arg8[%c0_138, %c0_139], %174 {strides = array<i32>} : memref<8x4xf32, #tpu.memory_space<vmem>>, vector<8x4xf32>,
      %c0_140 = arith.constant 0 : index
      %c0_141 = arith.constant 0 : index
      %176 = vector.load %arg7[%c0_140, %c0_141] : memref<16x4xf32, #tpu.memory_space<vmem>>, vector<16x4xf32>
      %c0_142 = arith.constant 0 : index
      %c0_143 = arith.constant 0 : index
      %c0_144 = arith.constant 0 : index
      %177 = vector.load %arg3[%c0_142, %c0_143, %c0_144] : memref<8x16x4xf32, #tpu.memory_space<vmem>>, vector<1x16x4xf32>
      %178 = vector.shape_cast %177 : vector<1x16x4xf32> to vector<16x4xf32>
      %179 = arith.subf %176, %178 : vector<16x4xf32>
      %180 = vector.broadcast %cst_17 : f32 to vector<16x4xf32>
      %181 = arith.mulf %179, %180 : vector<16x4xf32>
      %cst_145 = arith.constant dense<0xFF800000> : vector<4xf32>
      %182 = vector.multi_reduction <maximumf>, %181, %cst_145 [0] : vector<16x4xf32> to vector<4xf32>
      %183 = vector.shape_cast %182 : vector<4xf32> to vector<1x4xf32>
      %184 = vector.broadcast %183 : vector<1x4xf32> to vector<16x4xf32>
      %185 = arith.subf %181, %184 : vector<16x4xf32>
      %186 = math.exp %185 : vector<16x4xf32>
      %cst_146 = arith.constant dense<0.000000e+00> : vector<4xf32>
      %187 = vector.multi_reduction <add>, %186, %cst_146 [0] : vector<16x4xf32> to vector<4xf32>
      %188 = vector.shape_cast %187 : vector<4xf32> to vector<1x4xf32>
      %189 = math.log %188 : vector<1x4xf32>
      %190 = arith.addf %183, %189 : vector<1x4xf32>
      %c0_147 = arith.constant 0 : index
      %c0_148 = arith.constant 0 : index
      %191 = vector.load %arg9[%c0_147, %c0_148] : memref<8x4xf32, #tpu.memory_space<vmem>>, vector<1x4xf32>
      %192 = vector.broadcast %cst_18 : f32 to vector<1x4xf32>
      %193 = arith.mulf %192, %190 : vector<1x4xf32>
      %194 = arith.subf %191, %193 : vector<1x4xf32>
      %c0_149 = arith.constant 0 : index
      %c0_150 = arith.constant 0 : index
      %195 = vector.load %arg6[%c0_149, %c0_150] : memref<8x4xf32, #tpu.memory_space<vmem>>, vector<1x4xf32>
      tpu.vector_store %arg6[%c0_149, %c0_150], %194 {strides = array<i32>} : memref<8x4xf32, #tpu.memory_space<vmem>>, vector<1x4xf32>,
      %c0_151 = arith.constant 0 : index
      %c0_152 = arith.constant 0 : index
      %196 = vector.load %arg7[%c0_151, %c0_152] : memref<16x4xf32, #tpu.memory_space<vmem>>, vector<16x4xf32>
      %c1_153 = arith.constant 1 : index
      %c0_154 = arith.constant 0 : index
      %c0_155 = arith.constant 0 : index
      %197 = vector.load %arg3[%c1_153, %c0_154, %c0_155] : memref<8x16x4xf32, #tpu.memory_space<vmem>>, vector<1x16x4xf32>
      %198 = vector.shape_cast %197 : vector<1x16x4xf32> to vector<16x4xf32>
      %199 = arith.subf %196, %198 : vector<16x4xf32>
      %200 = vector.broadcast %cst_17 : f32 to vector<16x4xf32>
      %201 = arith.mulf %199, %200 : vector<16x4xf32>
      %cst_156 = arith.constant dense<0xFF800000> : vector<4xf32>
      %202 = vector.multi_reduction <maximumf>, %201, %cst_156 [0] : vector<16x4xf32> to vector<4xf32>
      %203 = vector.shape_cast %202 : vector<4xf32> to vector<1x4xf32>
      %204 = vector.broadcast %203 : vector<1x4xf32> to vector<16x4xf32>
      %205 = arith.subf %201, %204 : vector<16x4xf32>
      %206 = math.exp %205 : vector<16x4xf32>
      %cst_157 = arith.constant dense<0.000000e+00> : vector<4xf32>
      %207 = vector.multi_reduction <add>, %206, %cst_157 [0] : vector<16x4xf32> to vector<4xf32>
      %208 = vector.shape_cast %207 : vector<4xf32> to vector<1x4xf32>
      %209 = math.log %208 : vector<1x4xf32>
      %210 = arith.addf %203, %209 : vector<1x4xf32>
      %c1_158 = arith.constant 1 : index
      %c0_159 = arith.constant 0 : index
      %211 = vector.load %arg9[%c1_158, %c0_159] : memref<8x4xf32, #tpu.memory_space<vmem>>, vector<1x4xf32>
      %212 = vector.broadcast %cst_18 : f32 to vector<1x4xf32>
      %213 = arith.mulf %212, %210 : vector<1x4xf32>
      %214 = arith.subf %211, %213 : vector<1x4xf32>
      %c1_160 = arith.constant 1 : index
      %c0_161 = arith.constant 0 : index
      %215 = vector.load %arg6[%c1_160, %c0_161] : memref<8x4xf32, #tpu.memory_space<vmem>>, vector<1x4xf32>
      tpu.vector_store %arg6[%c1_160, %c0_161], %214 {strides = array<i32>} : memref<8x4xf32, #tpu.memory_space<vmem>>, vector<1x4xf32>,
      %c0_162 = arith.constant 0 : index
      %c0_163 = arith.constant 0 : index
      %216 = vector.load %arg7[%c0_162, %c0_163] : memref<16x4xf32, #tpu.memory_space<vmem>>, vector<16x4xf32>
      %c2_164 = arith.constant 2 : index
      %c0_165 = arith.constant 0 : index
      %c0_166 = arith.constant 0 : index
      %217 = vector.load %arg3[%c2_164, %c0_165, %c0_166] : memref<8x16x4xf32, #tpu.memory_space<vmem>>, vector<1x16x4xf32>
      %218 = vector.shape_cast %217 : vector<1x16x4xf32> to vector<16x4xf32>
      %219 = arith.subf %216, %218 : vector<16x4xf32>
      %220 = vector.broadcast %cst_17 : f32 to vector<16x4xf32>
      %221 = arith.mulf %219, %220 : vector<16x4xf32>
      %cst_167 = arith.constant dense<0xFF800000> : vector<4xf32>
      %222 = vector.multi_reduction <maximumf>, %221, %cst_167 [0] : vector<16x4xf32> to vector<4xf32>
      %223 = vector.shape_cast %222 : vector<4xf32> to vector<1x4xf32>
      %224 = vector.broadcast %223 : vector<1x4xf32> to vector<16x4xf32>
      %225 = arith.subf %221, %224 : vector<16x4xf32>
      %226 = math.exp %225 : vector<16x4xf32>
      %cst_168 = arith.constant dense<0.000000e+00> : vector<4xf32>
      %227 = vector.multi_reduction <add>, %226, %cst_168 [0] : vector<16x4xf32> to vector<4xf32>
      %228 = vector.shape_cast %227 : vector<4xf32> to vector<1x4xf32>
      %229 = math.log %228 : vector<1x4xf32>
      %230 = arith.addf %223, %229 : vector<1x4xf32>
      %c2_169 = arith.constant 2 : index
      %c0_170 = arith.constant 0 : index
      %231 = vector.load %arg9[%c2_169, %c0_170] : memref<8x4xf32, #tpu.memory_space<vmem>>, vector<1x4xf32>
      %232 = vector.broadcast %cst_18 : f32 to vector<1x4xf32>
      %233 = arith.mulf %232, %230 : vector<1x4xf32>
      %234 = arith.subf %231, %233 : vector<1x4xf32>
      %c2_171 = arith.constant 2 : index
      %c0_172 = arith.constant 0 : index
      %235 = vector.load %arg6[%c2_171, %c0_172] : memref<8x4xf32, #tpu.memory_space<vmem>>, vector<1x4xf32>
      tpu.vector_store %arg6[%c2_171, %c0_172], %234 {strides = array<i32>} : memref<8x4xf32, #tpu.memory_space<vmem>>, vector<1x4xf32>,
      %c0_173 = arith.constant 0 : index
      %c0_174 = arith.constant 0 : index
      %236 = vector.load %arg7[%c0_173, %c0_174] : memref<16x4xf32, #tpu.memory_space<vmem>>, vector<16x4xf32>
      %c3_175 = arith.constant 3 : index
      %c0_176 = arith.constant 0 : index
      %c0_177 = arith.constant 0 : index
      %237 = vector.load %arg3[%c3_175, %c0_176, %c0_177] : memref<8x16x4xf32, #tpu.memory_space<vmem>>, vector<1x16x4xf32>
      %238 = vector.shape_cast %237 : vector<1x16x4xf32> to vector<16x4xf32>
      %239 = arith.subf %236, %238 : vector<16x4xf32>
      %240 = vector.broadcast %cst_17 : f32 to vector<16x4xf32>
      %241 = arith.mulf %239, %240 : vector<16x4xf32>
      %cst_178 = arith.constant dense<0xFF800000> : vector<4xf32>
      %242 = vector.multi_reduction <maximumf>, %241, %cst_178 [0] : vector<16x4xf32> to vector<4xf32>
      %243 = vector.shape_cast %242 : vector<4xf32> to vector<1x4xf32>
      %244 = vector.broadcast %243 : vector<1x4xf32> to vector<16x4xf32>
      %245 = arith.subf %241, %244 : vector<16x4xf32>
      %246 = math.exp %245 : vector<16x4xf32>
      %cst_179 = arith.constant dense<0.000000e+00> : vector<4xf32>
      %247 = vector.multi_reduction <add>, %246, %cst_179 [0] : vector<16x4xf32> to vector<4xf32>
      %248 = vector.shape_cast %247 : vector<4xf32> to vector<1x4xf32>
      %249 = math.log %248 : vector<1x4xf32>
      %250 = arith.addf %243, %249 : vector<1x4xf32>
      %c3_180 = arith.constant 3 : index
      %c0_181 = arith.constant 0 : index
      %251 = vector.load %arg9[%c3_180, %c0_181] : memref<8x4xf32, #tpu.memory_space<vmem>>, vector<1x4xf32>
      %252 = vector.broadcast %cst_18 : f32 to vector<1x4xf32>
      %253 = arith.mulf %252, %250 : vector<1x4xf32>
      %254 = arith.subf %251, %253 : vector<1x4xf32>
      %c3_182 = arith.constant 3 : index
      %c0_183 = arith.constant 0 : index
      %255 = vector.load %arg6[%c3_182, %c0_183] : memref<8x4xf32, #tpu.memory_space<vmem>>, vector<1x4xf32>
      tpu.vector_store %arg6[%c3_182, %c0_183], %254 {strides = array<i32>} : memref<8x4xf32, #tpu.memory_space<vmem>>, vector<1x4xf32>,
      %c0_184 = arith.constant 0 : index
      %c0_185 = arith.constant 0 : index
      %256 = vector.load %arg7[%c0_184, %c0_185] : memref<16x4xf32, #tpu.memory_space<vmem>>, vector<16x4xf32>
      %c4_186 = arith.constant 4 : index
      %c0_187 = arith.constant 0 : index
      %c0_188 = arith.constant 0 : index
      %257 = vector.load %arg3[%c4_186, %c0_187, %c0_188] : memref<8x16x4xf32, #tpu.memory_space<vmem>>, vector<1x16x4xf32>
      %258 = vector.shape_cast %257 : vector<1x16x4xf32> to vector<16x4xf32>
      %259 = arith.subf %256, %258 : vector<16x4xf32>
      %260 = vector.broadcast %cst_17 : f32 to vector<16x4xf32>
      %261 = arith.mulf %259, %260 : vector<16x4xf32>
      %cst_189 = arith.constant dense<0xFF800000> : vector<4xf32>
      %262 = vector.multi_reduction <maximumf>, %261, %cst_189 [0] : vector<16x4xf32> to vector<4xf32>
      %263 = vector.shape_cast %262 : vector<4xf32> to vector<1x4xf32>
      %264 = vector.broadcast %263 : vector<1x4xf32> to vector<16x4xf32>
      %265 = arith.subf %261, %264 : vector<16x4xf32>
      %266 = math.exp %265 : vector<16x4xf32>
      %cst_190 = arith.constant dense<0.000000e+00> : vector<4xf32>
      %267 = vector.multi_reduction <add>, %266, %cst_190 [0] : vector<16x4xf32> to vector<4xf32>
      %268 = vector.shape_cast %267 : vector<4xf32> to vector<1x4xf32>
      %269 = math.log %268 : vector<1x4xf32>
      %270 = arith.addf %263, %269 : vector<1x4xf32>
      %c4_191 = arith.constant 4 : index
      %c0_192 = arith.constant 0 : index
      %271 = vector.load %arg9[%c4_191, %c0_192] : memref<8x4xf32, #tpu.memory_space<vmem>>, vector<1x4xf32>
      %272 = vector.broadcast %cst_18 : f32 to vector<1x4xf32>
      %273 = arith.mulf %272, %270 : vector<1x4xf32>
      %274 = arith.subf %271, %273 : vector<1x4xf32>
      %c4_193 = arith.constant 4 : index
      %c0_194 = arith.constant 0 : index
      %275 = vector.load %arg6[%c4_193, %c0_194] : memref<8x4xf32, #tpu.memory_space<vmem>>, vector<1x4xf32>
      tpu.vector_store %arg6[%c4_193, %c0_194], %274 {strides = array<i32>} : memref<8x4xf32, #tpu.memory_space<vmem>>, vector<1x4xf32>,
      %c0_195 = arith.constant 0 : index
      %c0_196 = arith.constant 0 : index
      %276 = vector.load %arg7[%c0_195, %c0_196] : memref<16x4xf32, #tpu.memory_space<vmem>>, vector<16x4xf32>
      %c5_197 = arith.constant 5 : index
      %c0_198 = arith.constant 0 : index
      %c0_199 = arith.constant 0 : index
      %277 = vector.load %arg3[%c5_197, %c0_198, %c0_199] : memref<8x16x4xf32, #tpu.memory_space<vmem>>, vector<1x16x4xf32>
      %278 = vector.shape_cast %277 : vector<1x16x4xf32> to vector<16x4xf32>
      %279 = arith.subf %276, %278 : vector<16x4xf32>
      %280 = vector.broadcast %cst_17 : f32 to vector<16x4xf32>
      %281 = arith.mulf %279, %280 : vector<16x4xf32>
      %cst_200 = arith.constant dense<0xFF800000> : vector<4xf32>
      %282 = vector.multi_reduction <maximumf>, %281, %cst_200 [0] : vector<16x4xf32> to vector<4xf32>
      %283 = vector.shape_cast %282 : vector<4xf32> to vector<1x4xf32>
      %284 = vector.broadcast %283 : vector<1x4xf32> to vector<16x4xf32>
      %285 = arith.subf %281, %284 : vector<16x4xf32>
      %286 = math.exp %285 : vector<16x4xf32>
      %cst_201 = arith.constant dense<0.000000e+00> : vector<4xf32>
      %287 = vector.multi_reduction <add>, %286, %cst_201 [0] : vector<16x4xf32> to vector<4xf32>
      %288 = vector.shape_cast %287 : vector<4xf32> to vector<1x4xf32>
      %289 = math.log %288 : vector<1x4xf32>
      %290 = arith.addf %283, %289 : vector<1x4xf32>
      %c5_202 = arith.constant 5 : index
      %c0_203 = arith.constant 0 : index
      %291 = vector.load %arg9[%c5_202, %c0_203] : memref<8x4xf32, #tpu.memory_space<vmem>>, vector<1x4xf32>
      %292 = vector.broadcast %cst_18 : f32 to vector<1x4xf32>
      %293 = arith.mulf %292, %290 : vector<1x4xf32>
      %294 = arith.subf %291, %293 : vector<1x4xf32>
      %c5_204 = arith.constant 5 : index
      %c0_205 = arith.constant 0 : index
      %295 = vector.load %arg6[%c5_204, %c0_205] : memref<8x4xf32, #tpu.memory_space<vmem>>, vector<1x4xf32>
      tpu.vector_store %arg6[%c5_204, %c0_205], %294 {strides = array<i32>} : memref<8x4xf32, #tpu.memory_space<vmem>>, vector<1x4xf32>,
      %c0_206 = arith.constant 0 : index
      %c0_207 = arith.constant 0 : index
      %296 = vector.load %arg7[%c0_206, %c0_207] : memref<16x4xf32, #tpu.memory_space<vmem>>, vector<16x4xf32>
      %c6_208 = arith.constant 6 : index
      %c0_209 = arith.constant 0 : index
      %c0_210 = arith.constant 0 : index
      %297 = vector.load %arg3[%c6_208, %c0_209, %c0_210] : memref<8x16x4xf32, #tpu.memory_space<vmem>>, vector<1x16x4xf32>
      %298 = vector.shape_cast %297 : vector<1x16x4xf32> to vector<16x4xf32>
      %299 = arith.subf %296, %298 : vector<16x4xf32>
      %300 = vector.broadcast %cst_17 : f32 to vector<16x4xf32>
      %301 = arith.mulf %299, %300 : vector<16x4xf32>
      %cst_211 = arith.constant dense<0xFF800000> : vector<4xf32>
      %302 = vector.multi_reduction <maximumf>, %301, %cst_211 [0] : vector<16x4xf32> to vector<4xf32>
      %303 = vector.shape_cast %302 : vector<4xf32> to vector<1x4xf32>
      %304 = vector.broadcast %303 : vector<1x4xf32> to vector<16x4xf32>
      %305 = arith.subf %301, %304 : vector<16x4xf32>
      %306 = math.exp %305 : vector<16x4xf32>
      %cst_212 = arith.constant dense<0.000000e+00> : vector<4xf32>
      %307 = vector.multi_reduction <add>, %306, %cst_212 [0] : vector<16x4xf32> to vector<4xf32>
      %308 = vector.shape_cast %307 : vector<4xf32> to vector<1x4xf32>
      %309 = math.log %308 : vector<1x4xf32>
      %310 = arith.addf %303, %309 : vector<1x4xf32>
      %c6_213 = arith.constant 6 : index
      %c0_214 = arith.constant 0 : index
      %311 = vector.load %arg9[%c6_213, %c0_214] : memref<8x4xf32, #tpu.memory_space<vmem>>, vector<1x4xf32>
      %312 = vector.broadcast %cst_18 : f32 to vector<1x4xf32>
      %313 = arith.mulf %312, %310 : vector<1x4xf32>
      %314 = arith.subf %311, %313 : vector<1x4xf32>
      %c6_215 = arith.constant 6 : index
      %c0_216 = arith.constant 0 : index
      %315 = vector.load %arg6[%c6_215, %c0_216] : memref<8x4xf32, #tpu.memory_space<vmem>>, vector<1x4xf32>
      tpu.vector_store %arg6[%c6_215, %c0_216], %314 {strides = array<i32>} : memref<8x4xf32, #tpu.memory_space<vmem>>, vector<1x4xf32>,
      %c0_217 = arith.constant 0 : index
      %c0_218 = arith.constant 0 : index
      %316 = vector.load %arg7[%c0_217, %c0_218] : memref<16x4xf32, #tpu.memory_space<vmem>>, vector<16x4xf32>
      %c7_219 = arith.constant 7 : index
      %c0_220 = arith.constant 0 : index
      %c0_221 = arith.constant 0 : index
      %317 = vector.load %arg3[%c7_219, %c0_220, %c0_221] : memref<8x16x4xf32, #tpu.memory_space<vmem>>, vector<1x16x4xf32>
      %318 = vector.shape_cast %317 : vector<1x16x4xf32> to vector<16x4xf32>
      %319 = arith.subf %316, %318 : vector<16x4xf32>
      %320 = vector.broadcast %cst_17 : f32 to vector<16x4xf32>
      %321 = arith.mulf %319, %320 : vector<16x4xf32>
      %cst_222 = arith.constant dense<0xFF800000> : vector<4xf32>
      %322 = vector.multi_reduction <maximumf>, %321, %cst_222 [0] : vector<16x4xf32> to vector<4xf32>
      %323 = vector.shape_cast %322 : vector<4xf32> to vector<1x4xf32>
      %324 = vector.broadcast %323 : vector<1x4xf32> to vector<16x4xf32>
      %325 = arith.subf %321, %324 : vector<16x4xf32>
      %326 = math.exp %325 : vector<16x4xf32>
      %cst_223 = arith.constant dense<0.000000e+00> : vector<4xf32>
      %327 = vector.multi_reduction <add>, %326, %cst_223 [0] : vector<16x4xf32> to vector<4xf32>
      %328 = vector.shape_cast %327 : vector<4xf32> to vector<1x4xf32>
      %329 = math.log %328 : vector<1x4xf32>
      %330 = arith.addf %323, %329 : vector<1x4xf32>
      %c7_224 = arith.constant 7 : index
      %c0_225 = arith.constant 0 : index
      %331 = vector.load %arg9[%c7_224, %c0_225] : memref<8x4xf32, #tpu.memory_space<vmem>>, vector<1x4xf32>
      %332 = vector.broadcast %cst_18 : f32 to vector<1x4xf32>
      %333 = arith.mulf %332, %330 : vector<1x4xf32>
      %334 = arith.subf %331, %333 : vector<1x4xf32>
      %c7_226 = arith.constant 7 : index
      %c0_227 = arith.constant 0 : index
      %335 = vector.load %arg6[%c7_226, %c0_227] : memref<8x4xf32, #tpu.memory_space<vmem>>, vector<1x4xf32>
      tpu.vector_store %arg6[%c7_226, %c0_227], %334 {strides = array<i32>} : memref<8x4xf32, #tpu.memory_space<vmem>>, vector<1x4xf32>,
      %cst_228 = arith.constant 0xFF800000 : f32
      %336 = vector.broadcast %cst_228 : f32 to vector<16x4xf32>
      %c0_229 = arith.constant 0 : index
      %c0_230 = arith.constant 0 : index
      %337 = vector.load %arg6[%c0_229, %c0_230] : memref<8x4xf32, #tpu.memory_space<vmem>>, vector<1x4xf32>
      %c0_231 = arith.constant 0 : index
      %c0_232 = arith.constant 0 : index
      %c0_233 = arith.constant 0 : index
      %338 = vector.load %arg3[%c0_231, %c0_232, %c0_233] : memref<8x16x4xf32, #tpu.memory_space<vmem>>, vector<1x16x4xf32>
      %339 = vector.shape_cast %338 : vector<1x16x4xf32> to vector<16x4xf32>
      %340 = vector.broadcast %337 : vector<1x4xf32> to vector<16x4xf32>
      %341 = arith.subf %340, %339 : vector<16x4xf32>
      %342 = vector.broadcast %cst_17 : f32 to vector<16x4xf32>
      %343 = arith.mulf %341, %342 : vector<16x4xf32>
      %344 = arith.maximumf %336, %343 : vector<16x4xf32>
      %c1_234 = arith.constant 1 : index
      %c0_235 = arith.constant 0 : index
      %345 = vector.load %arg6[%c1_234, %c0_235] : memref<8x4xf32, #tpu.memory_space<vmem>>, vector<1x4xf32>
      %c1_236 = arith.constant 1 : index
      %c0_237 = arith.constant 0 : index
      %c0_238 = arith.constant 0 : index
      %346 = vector.load %arg3[%c1_236, %c0_237, %c0_238] : memref<8x16x4xf32, #tpu.memory_space<vmem>>, vector<1x16x4xf32>
      %347 = vector.shape_cast %346 : vector<1x16x4xf32> to vector<16x4xf32>
      %348 = vector.broadcast %345 : vector<1x4xf32> to vector<16x4xf32>
      %349 = arith.subf %348, %347 : vector<16x4xf32>
      %350 = vector.broadcast %cst_17 : f32 to vector<16x4xf32>
      %351 = arith.mulf %349, %350 : vector<16x4xf32>
      %352 = arith.maximumf %344, %351 : vector<16x4xf32>
      %c2_239 = arith.constant 2 : index
      %c0_240 = arith.constant 0 : index
      %353 = vector.load %arg6[%c2_239, %c0_240] : memref<8x4xf32, #tpu.memory_space<vmem>>, vector<1x4xf32>
      %c2_241 = arith.constant 2 : index
      %c0_242 = arith.constant 0 : index
      %c0_243 = arith.constant 0 : index
      %354 = vector.load %arg3[%c2_241, %c0_242, %c0_243] : memref<8x16x4xf32, #tpu.memory_space<vmem>>, vector<1x16x4xf32>
      %355 = vector.shape_cast %354 : vector<1x16x4xf32> to vector<16x4xf32>
      %356 = vector.broadcast %353 : vector<1x4xf32> to vector<16x4xf32>
      %357 = arith.subf %356, %355 : vector<16x4xf32>
      %358 = vector.broadcast %cst_17 : f32 to vector<16x4xf32>
      %359 = arith.mulf %357, %358 : vector<16x4xf32>
      %360 = arith.maximumf %352, %359 : vector<16x4xf32>
      %c3_244 = arith.constant 3 : index
      %c0_245 = arith.constant 0 : index
      %361 = vector.load %arg6[%c3_244, %c0_245] : memref<8x4xf32, #tpu.memory_space<vmem>>, vector<1x4xf32>
      %c3_246 = arith.constant 3 : index
      %c0_247 = arith.constant 0 : index
      %c0_248 = arith.constant 0 : index
      %362 = vector.load %arg3[%c3_246, %c0_247, %c0_248] : memref<8x16x4xf32, #tpu.memory_space<vmem>>, vector<1x16x4xf32>
      %363 = vector.shape_cast %362 : vector<1x16x4xf32> to vector<16x4xf32>
      %364 = vector.broadcast %361 : vector<1x4xf32> to vector<16x4xf32>
      %365 = arith.subf %364, %363 : vector<16x4xf32>
      %366 = vector.broadcast %cst_17 : f32 to vector<16x4xf32>
      %367 = arith.mulf %365, %366 : vector<16x4xf32>
      %368 = arith.maximumf %360, %367 : vector<16x4xf32>
      %c4_249 = arith.constant 4 : index
      %c0_250 = arith.constant 0 : index
      %369 = vector.load %arg6[%c4_249, %c0_250] : memref<8x4xf32, #tpu.memory_space<vmem>>, vector<1x4xf32>
      %c4_251 = arith.constant 4 : index
      %c0_252 = arith.constant 0 : index
      %c0_253 = arith.constant 0 : index
      %370 = vector.load %arg3[%c4_251, %c0_252, %c0_253] : memref<8x16x4xf32, #tpu.memory_space<vmem>>, vector<1x16x4xf32>
      %371 = vector.shape_cast %370 : vector<1x16x4xf32> to vector<16x4xf32>
      %372 = vector.broadcast %369 : vector<1x4xf32> to vector<16x4xf32>
      %373 = arith.subf %372, %371 : vector<16x4xf32>
      %374 = vector.broadcast %cst_17 : f32 to vector<16x4xf32>
      %375 = arith.mulf %373, %374 : vector<16x4xf32>
      %376 = arith.maximumf %368, %375 : vector<16x4xf32>
      %c5_254 = arith.constant 5 : index
      %c0_255 = arith.constant 0 : index
      %377 = vector.load %arg6[%c5_254, %c0_255] : memref<8x4xf32, #tpu.memory_space<vmem>>, vector<1x4xf32>
      %c5_256 = arith.constant 5 : index
      %c0_257 = arith.constant 0 : index
      %c0_258 = arith.constant 0 : index
      %378 = vector.load %arg3[%c5_256, %c0_257, %c0_258] : memref<8x16x4xf32, #tpu.memory_space<vmem>>, vector<1x16x4xf32>
      %379 = vector.shape_cast %378 : vector<1x16x4xf32> to vector<16x4xf32>
      %380 = vector.broadcast %377 : vector<1x4xf32> to vector<16x4xf32>
      %381 = arith.subf %380, %379 : vector<16x4xf32>
      %382 = vector.broadcast %cst_17 : f32 to vector<16x4xf32>
      %383 = arith.mulf %381, %382 : vector<16x4xf32>
      %384 = arith.maximumf %376, %383 : vector<16x4xf32>
      %c6_259 = arith.constant 6 : index
      %c0_260 = arith.constant 0 : index
      %385 = vector.load %arg6[%c6_259, %c0_260] : memref<8x4xf32, #tpu.memory_space<vmem>>, vector<1x4xf32>
      %c6_261 = arith.constant 6 : index
      %c0_262 = arith.constant 0 : index
      %c0_263 = arith.constant 0 : index
      %386 = vector.load %arg3[%c6_261, %c0_262, %c0_263] : memref<8x16x4xf32, #tpu.memory_space<vmem>>, vector<1x16x4xf32>
      %387 = vector.shape_cast %386 : vector<1x16x4xf32> to vector<16x4xf32>
      %388 = vector.broadcast %385 : vector<1x4xf32> to vector<16x4xf32>
      %389 = arith.subf %388, %387 : vector<16x4xf32>
      %390 = vector.broadcast %cst_17 : f32 to vector<16x4xf32>
      %391 = arith.mulf %389, %390 : vector<16x4xf32>
      %392 = arith.maximumf %384, %391 : vector<16x4xf32>
      %c7_264 = arith.constant 7 : index
      %c0_265 = arith.constant 0 : index
      %393 = vector.load %arg6[%c7_264, %c0_265] : memref<8x4xf32, #tpu.memory_space<vmem>>, vector<1x4xf32>
      %c7_266 = arith.constant 7 : index
      %c0_267 = arith.constant 0 : index
      %c0_268 = arith.constant 0 : index
      %394 = vector.load %arg3[%c7_266, %c0_267, %c0_268] : memref<8x16x4xf32, #tpu.memory_space<vmem>>, vector<1x16x4xf32>
      %395 = vector.shape_cast %394 : vector<1x16x4xf32> to vector<16x4xf32>
      %396 = vector.broadcast %393 : vector<1x4xf32> to vector<16x4xf32>
      %397 = arith.subf %396, %395 : vector<16x4xf32>
      %398 = vector.broadcast %cst_17 : f32 to vector<16x4xf32>
      %399 = arith.mulf %397, %398 : vector<16x4xf32>
      %400 = arith.maximumf %392, %399 : vector<16x4xf32>
      %cst_269 = arith.constant 0.000000e+00 : f32
      %401 = vector.broadcast %cst_269 : f32 to vector<16x4xf32>
      %c0_270 = arith.constant 0 : index
      %c0_271 = arith.constant 0 : index
      %402 = vector.load %arg6[%c0_270, %c0_271] : memref<8x4xf32, #tpu.memory_space<vmem>>, vector<1x4xf32>
      %c0_272 = arith.constant 0 : index
      %c0_273 = arith.constant 0 : index
      %c0_274 = arith.constant 0 : index
      %403 = vector.load %arg3[%c0_272, %c0_273, %c0_274] : memref<8x16x4xf32, #tpu.memory_space<vmem>>, vector<1x16x4xf32>
      %404 = vector.shape_cast %403 : vector<1x16x4xf32> to vector<16x4xf32>
      %405 = vector.broadcast %402 : vector<1x4xf32> to vector<16x4xf32>
      %406 = arith.subf %405, %404 : vector<16x4xf32>
      %407 = vector.broadcast %cst_17 : f32 to vector<16x4xf32>
      %408 = arith.mulf %406, %407 : vector<16x4xf32>
      %409 = arith.subf %408, %400 : vector<16x4xf32>
      %410 = math.exp %409 : vector<16x4xf32>
      %411 = arith.addf %401, %410 : vector<16x4xf32>
      %c1_275 = arith.constant 1 : index
      %c0_276 = arith.constant 0 : index
      %412 = vector.load %arg6[%c1_275, %c0_276] : memref<8x4xf32, #tpu.memory_space<vmem>>, vector<1x4xf32>
      %c1_277 = arith.constant 1 : index
      %c0_278 = arith.constant 0 : index
      %c0_279 = arith.constant 0 : index
      %413 = vector.load %arg3[%c1_277, %c0_278, %c0_279] : memref<8x16x4xf32, #tpu.memory_space<vmem>>, vector<1x16x4xf32>
      %414 = vector.shape_cast %413 : vector<1x16x4xf32> to vector<16x4xf32>
      %415 = vector.broadcast %412 : vector<1x4xf32> to vector<16x4xf32>
      %416 = arith.subf %415, %414 : vector<16x4xf32>
      %417 = vector.broadcast %cst_17 : f32 to vector<16x4xf32>
      %418 = arith.mulf %416, %417 : vector<16x4xf32>
      %419 = arith.subf %418, %400 : vector<16x4xf32>
      %420 = math.exp %419 : vector<16x4xf32>
      %421 = arith.addf %411, %420 : vector<16x4xf32>
      %c2_280 = arith.constant 2 : index
      %c0_281 = arith.constant 0 : index
      %422 = vector.load %arg6[%c2_280, %c0_281] : memref<8x4xf32, #tpu.memory_space<vmem>>, vector<1x4xf32>
      %c2_282 = arith.constant 2 : index
      %c0_283 = arith.constant 0 : index
      %c0_284 = arith.constant 0 : index
      %423 = vector.load %arg3[%c2_282, %c0_283, %c0_284] : memref<8x16x4xf32, #tpu.memory_space<vmem>>, vector<1x16x4xf32>
      %424 = vector.shape_cast %423 : vector<1x16x4xf32> to vector<16x4xf32>
      %425 = vector.broadcast %422 : vector<1x4xf32> to vector<16x4xf32>
      %426 = arith.subf %425, %424 : vector<16x4xf32>
      %427 = vector.broadcast %cst_17 : f32 to vector<16x4xf32>
      %428 = arith.mulf %426, %427 : vector<16x4xf32>
      %429 = arith.subf %428, %400 : vector<16x4xf32>
      %430 = math.exp %429 : vector<16x4xf32>
      %431 = arith.addf %421, %430 : vector<16x4xf32>
      %c3_285 = arith.constant 3 : index
      %c0_286 = arith.constant 0 : index
      %432 = vector.load %arg6[%c3_285, %c0_286] : memref<8x4xf32, #tpu.memory_space<vmem>>, vector<1x4xf32>
      %c3_287 = arith.constant 3 : index
      %c0_288 = arith.constant 0 : index
      %c0_289 = arith.constant 0 : index
      %433 = vector.load %arg3[%c3_287, %c0_288, %c0_289] : memref<8x16x4xf32, #tpu.memory_space<vmem>>, vector<1x16x4xf32>
      %434 = vector.shape_cast %433 : vector<1x16x4xf32> to vector<16x4xf32>
      %435 = vector.broadcast %432 : vector<1x4xf32> to vector<16x4xf32>
      %436 = arith.subf %435, %434 : vector<16x4xf32>
      %437 = vector.broadcast %cst_17 : f32 to vector<16x4xf32>
      %438 = arith.mulf %436, %437 : vector<16x4xf32>
      %439 = arith.subf %438, %400 : vector<16x4xf32>
      %440 = math.exp %439 : vector<16x4xf32>
      %441 = arith.addf %431, %440 : vector<16x4xf32>
      %c4_290 = arith.constant 4 : index
      %c0_291 = arith.constant 0 : index
      %442 = vector.load %arg6[%c4_290, %c0_291] : memref<8x4xf32, #tpu.memory_space<vmem>>, vector<1x4xf32>
      %c4_292 = arith.constant 4 : index
      %c0_293 = arith.constant 0 : index
      %c0_294 = arith.constant 0 : index
      %443 = vector.load %arg3[%c4_292, %c0_293, %c0_294] : memref<8x16x4xf32, #tpu.memory_space<vmem>>, vector<1x16x4xf32>
      %444 = vector.shape_cast %443 : vector<1x16x4xf32> to vector<16x4xf32>
      %445 = vector.broadcast %442 : vector<1x4xf32> to vector<16x4xf32>
      %446 = arith.subf %445, %444 : vector<16x4xf32>
      %447 = vector.broadcast %cst_17 : f32 to vector<16x4xf32>
      %448 = arith.mulf %446, %447 : vector<16x4xf32>
      %449 = arith.subf %448, %400 : vector<16x4xf32>
      %450 = math.exp %449 : vector<16x4xf32>
      %451 = arith.addf %441, %450 : vector<16x4xf32>
      %c5_295 = arith.constant 5 : index
      %c0_296 = arith.constant 0 : index
      %452 = vector.load %arg6[%c5_295, %c0_296] : memref<8x4xf32, #tpu.memory_space<vmem>>, vector<1x4xf32>
      %c5_297 = arith.constant 5 : index
      %c0_298 = arith.constant 0 : index
      %c0_299 = arith.constant 0 : index
      %453 = vector.load %arg3[%c5_297, %c0_298, %c0_299] : memref<8x16x4xf32, #tpu.memory_space<vmem>>, vector<1x16x4xf32>
      %454 = vector.shape_cast %453 : vector<1x16x4xf32> to vector<16x4xf32>
      %455 = vector.broadcast %452 : vector<1x4xf32> to vector<16x4xf32>
      %456 = arith.subf %455, %454 : vector<16x4xf32>
      %457 = vector.broadcast %cst_17 : f32 to vector<16x4xf32>
      %458 = arith.mulf %456, %457 : vector<16x4xf32>
      %459 = arith.subf %458, %400 : vector<16x4xf32>
      %460 = math.exp %459 : vector<16x4xf32>
      %461 = arith.addf %451, %460 : vector<16x4xf32>
      %c6_300 = arith.constant 6 : index
      %c0_301 = arith.constant 0 : index
      %462 = vector.load %arg6[%c6_300, %c0_301] : memref<8x4xf32, #tpu.memory_space<vmem>>, vector<1x4xf32>
      %c6_302 = arith.constant 6 : index
      %c0_303 = arith.constant 0 : index
      %c0_304 = arith.constant 0 : index
      %463 = vector.load %arg3[%c6_302, %c0_303, %c0_304] : memref<8x16x4xf32, #tpu.memory_space<vmem>>, vector<1x16x4xf32>
      %464 = vector.shape_cast %463 : vector<1x16x4xf32> to vector<16x4xf32>
      %465 = vector.broadcast %462 : vector<1x4xf32> to vector<16x4xf32>
      %466 = arith.subf %465, %464 : vector<16x4xf32>
      %467 = vector.broadcast %cst_17 : f32 to vector<16x4xf32>
      %468 = arith.mulf %466, %467 : vector<16x4xf32>
      %469 = arith.subf %468, %400 : vector<16x4xf32>
      %470 = math.exp %469 : vector<16x4xf32>
      %471 = arith.addf %461, %470 : vector<16x4xf32>
      %c7_305 = arith.constant 7 : index
      %c0_306 = arith.constant 0 : index
      %472 = vector.load %arg6[%c7_305, %c0_306] : memref<8x4xf32, #tpu.memory_space<vmem>>, vector<1x4xf32>
      %c7_307 = arith.constant 7 : index
      %c0_308 = arith.constant 0 : index
      %c0_309 = arith.constant 0 : index
      %473 = vector.load %arg3[%c7_307, %c0_308, %c0_309] : memref<8x16x4xf32, #tpu.memory_space<vmem>>, vector<1x16x4xf32>
      %474 = vector.shape_cast %473 : vector<1x16x4xf32> to vector<16x4xf32>
      %475 = vector.broadcast %472 : vector<1x4xf32> to vector<16x4xf32>
      %476 = arith.subf %475, %474 : vector<16x4xf32>
      %477 = vector.broadcast %cst_17 : f32 to vector<16x4xf32>
      %478 = arith.mulf %476, %477 : vector<16x4xf32>
      %479 = arith.subf %478, %400 : vector<16x4xf32>
      %480 = math.exp %479 : vector<16x4xf32>
      %481 = arith.addf %471, %480 : vector<16x4xf32>
      %c0_310 = arith.constant 0 : index
      %c0_311 = arith.constant 0 : index
      %482 = vector.load %arg10[%c0_310, %c0_311] : memref<16x4xf32, #tpu.memory_space<vmem>>, vector<16x4xf32>
      %483 = math.log %481 : vector<16x4xf32>
      %484 = arith.addf %400, %483 : vector<16x4xf32>
      %485 = vector.broadcast %cst_18 : f32 to vector<16x4xf32>
      %486 = arith.mulf %485, %484 : vector<16x4xf32>
      %487 = arith.subf %482, %486 : vector<16x4xf32>
      %c0_312 = arith.constant 0 : index
      %c0_313 = arith.constant 0 : index
      %488 = vector.load %arg7[%c0_312, %c0_313] : memref<16x4xf32, #tpu.memory_space<vmem>>, vector<16x4xf32>
      tpu.vector_store %arg7[%c0_312, %c0_313], %487 {strides = array<i32>} : memref<16x4xf32, #tpu.memory_space<vmem>>, vector<16x4xf32>,
      %c0_314 = arith.constant 0 : index
      %c0_315 = arith.constant 0 : index
      %489 = vector.load %arg7[%c0_314, %c0_315] : memref<16x4xf32, #tpu.memory_space<vmem>>, vector<16x4xf32>
      %c0_316 = arith.constant 0 : index
      %c0_317 = arith.constant 0 : index
      %c0_318 = arith.constant 0 : index
      %490 = vector.load %arg3[%c0_316, %c0_317, %c0_318] : memref<8x16x4xf32, #tpu.memory_space<vmem>>, vector<1x16x4xf32>
      %491 = vector.shape_cast %490 : vector<1x16x4xf32> to vector<16x4xf32>
      %492 = arith.subf %489, %491 : vector<16x4xf32>
      %493 = vector.broadcast %cst_17 : f32 to vector<16x4xf32>
      %494 = arith.mulf %492, %493 : vector<16x4xf32>
      %cst_319 = arith.constant dense<0xFF800000> : vector<4xf32>
      %495 = vector.multi_reduction <maximumf>, %494, %cst_319 [0] : vector<16x4xf32> to vector<4xf32>
      %496 = vector.shape_cast %495 : vector<4xf32> to vector<1x4xf32>
      %497 = vector.broadcast %496 : vector<1x4xf32> to vector<16x4xf32>
      %498 = arith.subf %494, %497 : vector<16x4xf32>
      %499 = math.exp %498 : vector<16x4xf32>
      %cst_320 = arith.constant dense<0.000000e+00> : vector<4xf32>
      %500 = vector.multi_reduction <add>, %499, %cst_320 [0] : vector<16x4xf32> to vector<4xf32>
      %501 = vector.shape_cast %500 : vector<4xf32> to vector<1x4xf32>
      %502 = math.log %501 : vector<1x4xf32>
      %503 = arith.addf %496, %502 : vector<1x4xf32>
      %c0_321 = arith.constant 0 : index
      %c0_322 = arith.constant 0 : index
      %504 = vector.load %arg9[%c0_321, %c0_322] : memref<8x4xf32, #tpu.memory_space<vmem>>, vector<1x4xf32>
      %505 = vector.broadcast %cst_18 : f32 to vector<1x4xf32>
      %506 = arith.mulf %505, %503 : vector<1x4xf32>
      %507 = arith.subf %504, %506 : vector<1x4xf32>
      %c0_323 = arith.constant 0 : index
      %c0_324 = arith.constant 0 : index
      %508 = vector.load %arg6[%c0_323, %c0_324] : memref<8x4xf32, #tpu.memory_space<vmem>>, vector<1x4xf32>
      tpu.vector_store %arg6[%c0_323, %c0_324], %507 {strides = array<i32>} : memref<8x4xf32, #tpu.memory_space<vmem>>, vector<1x4xf32>,
      %c0_325 = arith.constant 0 : index
      %c0_326 = arith.constant 0 : index
      %509 = vector.load %arg7[%c0_325, %c0_326] : memref<16x4xf32, #tpu.memory_space<vmem>>, vector<16x4xf32>
      %c1_327 = arith.constant 1 : index
      %c0_328 = arith.constant 0 : index
      %c0_329 = arith.constant 0 : index
      %510 = vector.load %arg3[%c1_327, %c0_328, %c0_329] : memref<8x16x4xf32, #tpu.memory_space<vmem>>, vector<1x16x4xf32>
      %511 = vector.shape_cast %510 : vector<1x16x4xf32> to vector<16x4xf32>
      %512 = arith.subf %509, %511 : vector<16x4xf32>
      %513 = vector.broadcast %cst_17 : f32 to vector<16x4xf32>
      %514 = arith.mulf %512, %513 : vector<16x4xf32>
      %cst_330 = arith.constant dense<0xFF800000> : vector<4xf32>
      %515 = vector.multi_reduction <maximumf>, %514, %cst_330 [0] : vector<16x4xf32> to vector<4xf32>
      %516 = vector.shape_cast %515 : vector<4xf32> to vector<1x4xf32>
      %517 = vector.broadcast %516 : vector<1x4xf32> to vector<16x4xf32>
      %518 = arith.subf %514, %517 : vector<16x4xf32>
      %519 = math.exp %518 : vector<16x4xf32>
      %cst_331 = arith.constant dense<0.000000e+00> : vector<4xf32>
      %520 = vector.multi_reduction <add>, %519, %cst_331 [0] : vector<16x4xf32> to vector<4xf32>
      %521 = vector.shape_cast %520 : vector<4xf32> to vector<1x4xf32>
      %522 = math.log %521 : vector<1x4xf32>
      %523 = arith.addf %516, %522 : vector<1x4xf32>
      %c1_332 = arith.constant 1 : index
      %c0_333 = arith.constant 0 : index
      %524 = vector.load %arg9[%c1_332, %c0_333] : memref<8x4xf32, #tpu.memory_space<vmem>>, vector<1x4xf32>
      %525 = vector.broadcast %cst_18 : f32 to vector<1x4xf32>
      %526 = arith.mulf %525, %523 : vector<1x4xf32>
      %527 = arith.subf %524, %526 : vector<1x4xf32>
      %c1_334 = arith.constant 1 : index
      %c0_335 = arith.constant 0 : index
      %528 = vector.load %arg6[%c1_334, %c0_335] : memref<8x4xf32, #tpu.memory_space<vmem>>, vector<1x4xf32>
      tpu.vector_store %arg6[%c1_334, %c0_335], %527 {strides = array<i32>} : memref<8x4xf32, #tpu.memory_space<vmem>>, vector<1x4xf32>,
      %c0_336 = arith.constant 0 : index
      %c0_337 = arith.constant 0 : index
      %529 = vector.load %arg7[%c0_336, %c0_337] : memref<16x4xf32, #tpu.memory_space<vmem>>, vector<16x4xf32>
      %c2_338 = arith.constant 2 : index
      %c0_339 = arith.constant 0 : index
      %c0_340 = arith.constant 0 : index
      %530 = vector.load %arg3[%c2_338, %c0_339, %c0_340] : memref<8x16x4xf32, #tpu.memory_space<vmem>>, vector<1x16x4xf32>
      %531 = vector.shape_cast %530 : vector<1x16x4xf32> to vector<16x4xf32>
      %532 = arith.subf %529, %531 : vector<16x4xf32>
      %533 = vector.broadcast %cst_17 : f32 to vector<16x4xf32>
      %534 = arith.mulf %532, %533 : vector<16x4xf32>
      %cst_341 = arith.constant dense<0xFF800000> : vector<4xf32>
      %535 = vector.multi_reduction <maximumf>, %534, %cst_341 [0] : vector<16x4xf32> to vector<4xf32>
      %536 = vector.shape_cast %535 : vector<4xf32> to vector<1x4xf32>
      %537 = vector.broadcast %536 : vector<1x4xf32> to vector<16x4xf32>
      %538 = arith.subf %534, %537 : vector<16x4xf32>
      %539 = math.exp %538 : vector<16x4xf32>
      %cst_342 = arith.constant dense<0.000000e+00> : vector<4xf32>
      %540 = vector.multi_reduction <add>, %539, %cst_342 [0] : vector<16x4xf32> to vector<4xf32>
      %541 = vector.shape_cast %540 : vector<4xf32> to vector<1x4xf32>
      %542 = math.log %541 : vector<1x4xf32>
      %543 = arith.addf %536, %542 : vector<1x4xf32>
      %c2_343 = arith.constant 2 : index
      %c0_344 = arith.constant 0 : index
      %544 = vector.load %arg9[%c2_343, %c0_344] : memref<8x4xf32, #tpu.memory_space<vmem>>, vector<1x4xf32>
      %545 = vector.broadcast %cst_18 : f32 to vector<1x4xf32>
      %546 = arith.mulf %545, %543 : vector<1x4xf32>
      %547 = arith.subf %544, %546 : vector<1x4xf32>
      %c2_345 = arith.constant 2 : index
      %c0_346 = arith.constant 0 : index
      %548 = vector.load %arg6[%c2_345, %c0_346] : memref<8x4xf32, #tpu.memory_space<vmem>>, vector<1x4xf32>
      tpu.vector_store %arg6[%c2_345, %c0_346], %547 {strides = array<i32>} : memref<8x4xf32, #tpu.memory_space<vmem>>, vector<1x4xf32>,
      %c0_347 = arith.constant 0 : index
      %c0_348 = arith.constant 0 : index
      %549 = vector.load %arg7[%c0_347, %c0_348] : memref<16x4xf32, #tpu.memory_space<vmem>>, vector<16x4xf32>
      %c3_349 = arith.constant 3 : index
      %c0_350 = arith.constant 0 : index
      %c0_351 = arith.constant 0 : index
      %550 = vector.load %arg3[%c3_349, %c0_350, %c0_351] : memref<8x16x4xf32, #tpu.memory_space<vmem>>, vector<1x16x4xf32>
      %551 = vector.shape_cast %550 : vector<1x16x4xf32> to vector<16x4xf32>
      %552 = arith.subf %549, %551 : vector<16x4xf32>
      %553 = vector.broadcast %cst_17 : f32 to vector<16x4xf32>
      %554 = arith.mulf %552, %553 : vector<16x4xf32>
      %cst_352 = arith.constant dense<0xFF800000> : vector<4xf32>
      %555 = vector.multi_reduction <maximumf>, %554, %cst_352 [0] : vector<16x4xf32> to vector<4xf32>
      %556 = vector.shape_cast %555 : vector<4xf32> to vector<1x4xf32>
      %557 = vector.broadcast %556 : vector<1x4xf32> to vector<16x4xf32>
      %558 = arith.subf %554, %557 : vector<16x4xf32>
      %559 = math.exp %558 : vector<16x4xf32>
      %cst_353 = arith.constant dense<0.000000e+00> : vector<4xf32>
      %560 = vector.multi_reduction <add>, %559, %cst_353 [0] : vector<16x4xf32> to vector<4xf32>
      %561 = vector.shape_cast %560 : vector<4xf32> to vector<1x4xf32>
      %562 = math.log %561 : vector<1x4xf32>
      %563 = arith.addf %556, %562 : vector<1x4xf32>
      %c3_354 = arith.constant 3 : index
      %c0_355 = arith.constant 0 : index
      %564 = vector.load %arg9[%c3_354, %c0_355] : memref<8x4xf32, #tpu.memory_space<vmem>>, vector<1x4xf32>
      %565 = vector.broadcast %cst_18 : f32 to vector<1x4xf32>
      %566 = arith.mulf %565, %563 : vector<1x4xf32>
      %567 = arith.subf %564, %566 : vector<1x4xf32>
      %c3_356 = arith.constant 3 : index
      %c0_357 = arith.constant 0 : index
      %568 = vector.load %arg6[%c3_356, %c0_357] : memref<8x4xf32, #tpu.memory_space<vmem>>, vector<1x4xf32>
      tpu.vector_store %arg6[%c3_356, %c0_357], %567 {strides = array<i32>} : memref<8x4xf32, #tpu.memory_space<vmem>>, vector<1x4xf32>,
      %c0_358 = arith.constant 0 : index
      %c0_359 = arith.constant 0 : index
      %569 = vector.load %arg7[%c0_358, %c0_359] : memref<16x4xf32, #tpu.memory_space<vmem>>, vector<16x4xf32>
      %c4_360 = arith.constant 4 : index
      %c0_361 = arith.constant 0 : index
      %c0_362 = arith.constant 0 : index
      %570 = vector.load %arg3[%c4_360, %c0_361, %c0_362] : memref<8x16x4xf32, #tpu.memory_space<vmem>>, vector<1x16x4xf32>
      %571 = vector.shape_cast %570 : vector<1x16x4xf32> to vector<16x4xf32>
      %572 = arith.subf %569, %571 : vector<16x4xf32>
      %573 = vector.broadcast %cst_17 : f32 to vector<16x4xf32>
      %574 = arith.mulf %572, %573 : vector<16x4xf32>
      %cst_363 = arith.constant dense<0xFF800000> : vector<4xf32>
      %575 = vector.multi_reduction <maximumf>, %574, %cst_363 [0] : vector<16x4xf32> to vector<4xf32>
      %576 = vector.shape_cast %575 : vector<4xf32> to vector<1x4xf32>
      %577 = vector.broadcast %576 : vector<1x4xf32> to vector<16x4xf32>
      %578 = arith.subf %574, %577 : vector<16x4xf32>
      %579 = math.exp %578 : vector<16x4xf32>
      %cst_364 = arith.constant dense<0.000000e+00> : vector<4xf32>
      %580 = vector.multi_reduction <add>, %579, %cst_364 [0] : vector<16x4xf32> to vector<4xf32>
      %581 = vector.shape_cast %580 : vector<4xf32> to vector<1x4xf32>
      %582 = math.log %581 : vector<1x4xf32>
      %583 = arith.addf %576, %582 : vector<1x4xf32>
      %c4_365 = arith.constant 4 : index
      %c0_366 = arith.constant 0 : index
      %584 = vector.load %arg9[%c4_365, %c0_366] : memref<8x4xf32, #tpu.memory_space<vmem>>, vector<1x4xf32>
      %585 = vector.broadcast %cst_18 : f32 to vector<1x4xf32>
      %586 = arith.mulf %585, %583 : vector<1x4xf32>
      %587 = arith.subf %584, %586 : vector<1x4xf32>
      %c4_367 = arith.constant 4 : index
      %c0_368 = arith.constant 0 : index
      %588 = vector.load %arg6[%c4_367, %c0_368] : memref<8x4xf32, #tpu.memory_space<vmem>>, vector<1x4xf32>
      tpu.vector_store %arg6[%c4_367, %c0_368], %587 {strides = array<i32>} : memref<8x4xf32, #tpu.memory_space<vmem>>, vector<1x4xf32>,
      %c0_369 = arith.constant 0 : index
      %c0_370 = arith.constant 0 : index
      %589 = vector.load %arg7[%c0_369, %c0_370] : memref<16x4xf32, #tpu.memory_space<vmem>>, vector<16x4xf32>
      %c5_371 = arith.constant 5 : index
      %c0_372 = arith.constant 0 : index
      %c0_373 = arith.constant 0 : index
      %590 = vector.load %arg3[%c5_371, %c0_372, %c0_373] : memref<8x16x4xf32, #tpu.memory_space<vmem>>, vector<1x16x4xf32>
      %591 = vector.shape_cast %590 : vector<1x16x4xf32> to vector<16x4xf32>
      %592 = arith.subf %589, %591 : vector<16x4xf32>
      %593 = vector.broadcast %cst_17 : f32 to vector<16x4xf32>
      %594 = arith.mulf %592, %593 : vector<16x4xf32>
      %cst_374 = arith.constant dense<0xFF800000> : vector<4xf32>
      %595 = vector.multi_reduction <maximumf>, %594, %cst_374 [0] : vector<16x4xf32> to vector<4xf32>
      %596 = vector.shape_cast %595 : vector<4xf32> to vector<1x4xf32>
      %597 = vector.broadcast %596 : vector<1x4xf32> to vector<16x4xf32>
      %598 = arith.subf %594, %597 : vector<16x4xf32>
      %599 = math.exp %598 : vector<16x4xf32>
      %cst_375 = arith.constant dense<0.000000e+00> : vector<4xf32>
      %600 = vector.multi_reduction <add>, %599, %cst_375 [0] : vector<16x4xf32> to vector<4xf32>
      %601 = vector.shape_cast %600 : vector<4xf32> to vector<1x4xf32>
      %602 = math.log %601 : vector<1x4xf32>
      %603 = arith.addf %596, %602 : vector<1x4xf32>
      %c5_376 = arith.constant 5 : index
      %c0_377 = arith.constant 0 : index
      %604 = vector.load %arg9[%c5_376, %c0_377] : memref<8x4xf32, #tpu.memory_space<vmem>>, vector<1x4xf32>
      %605 = vector.broadcast %cst_18 : f32 to vector<1x4xf32>
      %606 = arith.mulf %605, %603 : vector<1x4xf32>
      %607 = arith.subf %604, %606 : vector<1x4xf32>
      %c5_378 = arith.constant 5 : index
      %c0_379 = arith.constant 0 : index
      %608 = vector.load %arg6[%c5_378, %c0_379] : memref<8x4xf32, #tpu.memory_space<vmem>>, vector<1x4xf32>
      tpu.vector_store %arg6[%c5_378, %c0_379], %607 {strides = array<i32>} : memref<8x4xf32, #tpu.memory_space<vmem>>, vector<1x4xf32>,
      %c0_380 = arith.constant 0 : index
      %c0_381 = arith.constant 0 : index
      %609 = vector.load %arg7[%c0_380, %c0_381] : memref<16x4xf32, #tpu.memory_space<vmem>>, vector<16x4xf32>
      %c6_382 = arith.constant 6 : index
      %c0_383 = arith.constant 0 : index
      %c0_384 = arith.constant 0 : index
      %610 = vector.load %arg3[%c6_382, %c0_383, %c0_384] : memref<8x16x4xf32, #tpu.memory_space<vmem>>, vector<1x16x4xf32>
      %611 = vector.shape_cast %610 : vector<1x16x4xf32> to vector<16x4xf32>
      %612 = arith.subf %609, %611 : vector<16x4xf32>
      %613 = vector.broadcast %cst_17 : f32 to vector<16x4xf32>
      %614 = arith.mulf %612, %613 : vector<16x4xf32>
      %cst_385 = arith.constant dense<0xFF800000> : vector<4xf32>
      %615 = vector.multi_reduction <maximumf>, %614, %cst_385 [0] : vector<16x4xf32> to vector<4xf32>
      %616 = vector.shape_cast %615 : vector<4xf32> to vector<1x4xf32>
      %617 = vector.broadcast %616 : vector<1x4xf32> to vector<16x4xf32>
      %618 = arith.subf %614, %617 : vector<16x4xf32>
      %619 = math.exp %618 : vector<16x4xf32>
      %cst_386 = arith.constant dense<0.000000e+00> : vector<4xf32>
      %620 = vector.multi_reduction <add>, %619, %cst_386 [0] : vector<16x4xf32> to vector<4xf32>
      %621 = vector.shape_cast %620 : vector<4xf32> to vector<1x4xf32>
      %622 = math.log %621 : vector<1x4xf32>
      %623 = arith.addf %616, %622 : vector<1x4xf32>
      %c6_387 = arith.constant 6 : index
      %c0_388 = arith.constant 0 : index
      %624 = vector.load %arg9[%c6_387, %c0_388] : memref<8x4xf32, #tpu.memory_space<vmem>>, vector<1x4xf32>
      %625 = vector.broadcast %cst_18 : f32 to vector<1x4xf32>
      %626 = arith.mulf %625, %623 : vector<1x4xf32>
      %627 = arith.subf %624, %626 : vector<1x4xf32>
      %c6_389 = arith.constant 6 : index
      %c0_390 = arith.constant 0 : index
      %628 = vector.load %arg6[%c6_389, %c0_390] : memref<8x4xf32, #tpu.memory_space<vmem>>, vector<1x4xf32>
      tpu.vector_store %arg6[%c6_389, %c0_390], %627 {strides = array<i32>} : memref<8x4xf32, #tpu.memory_space<vmem>>, vector<1x4xf32>,
      %c0_391 = arith.constant 0 : index
      %c0_392 = arith.constant 0 : index
      %629 = vector.load %arg7[%c0_391, %c0_392] : memref<16x4xf32, #tpu.memory_space<vmem>>, vector<16x4xf32>
      %c7_393 = arith.constant 7 : index
      %c0_394 = arith.constant 0 : index
      %c0_395 = arith.constant 0 : index
      %630 = vector.load %arg3[%c7_393, %c0_394, %c0_395] : memref<8x16x4xf32, #tpu.memory_space<vmem>>, vector<1x16x4xf32>
      %631 = vector.shape_cast %630 : vector<1x16x4xf32> to vector<16x4xf32>
      %632 = arith.subf %629, %631 : vector<16x4xf32>
      %633 = vector.broadcast %cst_17 : f32 to vector<16x4xf32>
      %634 = arith.mulf %632, %633 : vector<16x4xf32>
      %cst_396 = arith.constant dense<0xFF800000> : vector<4xf32>
      %635 = vector.multi_reduction <maximumf>, %634, %cst_396 [0] : vector<16x4xf32> to vector<4xf32>
      %636 = vector.shape_cast %635 : vector<4xf32> to vector<1x4xf32>
      %637 = vector.broadcast %636 : vector<1x4xf32> to vector<16x4xf32>
      %638 = arith.subf %634, %637 : vector<16x4xf32>
      %639 = math.exp %638 : vector<16x4xf32>
      %cst_397 = arith.constant dense<0.000000e+00> : vector<4xf32>
      %640 = vector.multi_reduction <add>, %639, %cst_397 [0] : vector<16x4xf32> to vector<4xf32>
      %641 = vector.shape_cast %640 : vector<4xf32> to vector<1x4xf32>
      %642 = math.log %641 : vector<1x4xf32>
      %643 = arith.addf %636, %642 : vector<1x4xf32>
      %c7_398 = arith.constant 7 : index
      %c0_399 = arith.constant 0 : index
      %644 = vector.load %arg9[%c7_398, %c0_399] : memref<8x4xf32, #tpu.memory_space<vmem>>, vector<1x4xf32>
      %645 = vector.broadcast %cst_18 : f32 to vector<1x4xf32>
      %646 = arith.mulf %645, %643 : vector<1x4xf32>
      %647 = arith.subf %644, %646 : vector<1x4xf32>
      %c7_400 = arith.constant 7 : index
      %c0_401 = arith.constant 0 : index
      %648 = vector.load %arg6[%c7_400, %c0_401] : memref<8x4xf32, #tpu.memory_space<vmem>>, vector<1x4xf32>
      tpu.vector_store %arg6[%c7_400, %c0_401], %647 {strides = array<i32>} : memref<8x4xf32, #tpu.memory_space<vmem>>, vector<1x4xf32>,
      %cst_402 = arith.constant 0xFF800000 : f32
      %649 = vector.broadcast %cst_402 : f32 to vector<16x4xf32>
      %c0_403 = arith.constant 0 : index
      %c0_404 = arith.constant 0 : index
      %650 = vector.load %arg6[%c0_403, %c0_404] : memref<8x4xf32, #tpu.memory_space<vmem>>, vector<1x4xf32>
      %c0_405 = arith.constant 0 : index
      %c0_406 = arith.constant 0 : index
      %c0_407 = arith.constant 0 : index
      %651 = vector.load %arg3[%c0_405, %c0_406, %c0_407] : memref<8x16x4xf32, #tpu.memory_space<vmem>>, vector<1x16x4xf32>
      %652 = vector.shape_cast %651 : vector<1x16x4xf32> to vector<16x4xf32>
      %653 = vector.broadcast %650 : vector<1x4xf32> to vector<16x4xf32>
      %654 = arith.subf %653, %652 : vector<16x4xf32>
      %655 = vector.broadcast %cst_17 : f32 to vector<16x4xf32>
      %656 = arith.mulf %654, %655 : vector<16x4xf32>
      %657 = arith.maximumf %649, %656 : vector<16x4xf32>
      %c1_408 = arith.constant 1 : index
      %c0_409 = arith.constant 0 : index
      %658 = vector.load %arg6[%c1_408, %c0_409] : memref<8x4xf32, #tpu.memory_space<vmem>>, vector<1x4xf32>
      %c1_410 = arith.constant 1 : index
      %c0_411 = arith.constant 0 : index
      %c0_412 = arith.constant 0 : index
      %659 = vector.load %arg3[%c1_410, %c0_411, %c0_412] : memref<8x16x4xf32, #tpu.memory_space<vmem>>, vector<1x16x4xf32>
      %660 = vector.shape_cast %659 : vector<1x16x4xf32> to vector<16x4xf32>
      %661 = vector.broadcast %658 : vector<1x4xf32> to vector<16x4xf32>
      %662 = arith.subf %661, %660 : vector<16x4xf32>
      %663 = vector.broadcast %cst_17 : f32 to vector<16x4xf32>
      %664 = arith.mulf %662, %663 : vector<16x4xf32>
      %665 = arith.maximumf %657, %664 : vector<16x4xf32>
      %c2_413 = arith.constant 2 : index
      %c0_414 = arith.constant 0 : index
      %666 = vector.load %arg6[%c2_413, %c0_414] : memref<8x4xf32, #tpu.memory_space<vmem>>, vector<1x4xf32>
      %c2_415 = arith.constant 2 : index
      %c0_416 = arith.constant 0 : index
      %c0_417 = arith.constant 0 : index
      %667 = vector.load %arg3[%c2_415, %c0_416, %c0_417] : memref<8x16x4xf32, #tpu.memory_space<vmem>>, vector<1x16x4xf32>
      %668 = vector.shape_cast %667 : vector<1x16x4xf32> to vector<16x4xf32>
      %669 = vector.broadcast %666 : vector<1x4xf32> to vector<16x4xf32>
      %670 = arith.subf %669, %668 : vector<16x4xf32>
      %671 = vector.broadcast %cst_17 : f32 to vector<16x4xf32>
      %672 = arith.mulf %670, %671 : vector<16x4xf32>
      %673 = arith.maximumf %665, %672 : vector<16x4xf32>
      %c3_418 = arith.constant 3 : index
      %c0_419 = arith.constant 0 : index
      %674 = vector.load %arg6[%c3_418, %c0_419] : memref<8x4xf32, #tpu.memory_space<vmem>>, vector<1x4xf32>
      %c3_420 = arith.constant 3 : index
      %c0_421 = arith.constant 0 : index
      %c0_422 = arith.constant 0 : index
      %675 = vector.load %arg3[%c3_420, %c0_421, %c0_422] : memref<8x16x4xf32, #tpu.memory_space<vmem>>, vector<1x16x4xf32>
      %676 = vector.shape_cast %675 : vector<1x16x4xf32> to vector<16x4xf32>
      %677 = vector.broadcast %674 : vector<1x4xf32> to vector<16x4xf32>
      %678 = arith.subf %677, %676 : vector<16x4xf32>
      %679 = vector.broadcast %cst_17 : f32 to vector<16x4xf32>
      %680 = arith.mulf %678, %679 : vector<16x4xf32>
      %681 = arith.maximumf %673, %680 : vector<16x4xf32>
      %c4_423 = arith.constant 4 : index
      %c0_424 = arith.constant 0 : index
      %682 = vector.load %arg6[%c4_423, %c0_424] : memref<8x4xf32, #tpu.memory_space<vmem>>, vector<1x4xf32>
      %c4_425 = arith.constant 4 : index
      %c0_426 = arith.constant 0 : index
      %c0_427 = arith.constant 0 : index
      %683 = vector.load %arg3[%c4_425, %c0_426, %c0_427] : memref<8x16x4xf32, #tpu.memory_space<vmem>>, vector<1x16x4xf32>
      %684 = vector.shape_cast %683 : vector<1x16x4xf32> to vector<16x4xf32>
      %685 = vector.broadcast %682 : vector<1x4xf32> to vector<16x4xf32>
      %686 = arith.subf %685, %684 : vector<16x4xf32>
      %687 = vector.broadcast %cst_17 : f32 to vector<16x4xf32>
      %688 = arith.mulf %686, %687 : vector<16x4xf32>
      %689 = arith.maximumf %681, %688 : vector<16x4xf32>
      %c5_428 = arith.constant 5 : index
      %c0_429 = arith.constant 0 : index
      %690 = vector.load %arg6[%c5_428, %c0_429] : memref<8x4xf32, #tpu.memory_space<vmem>>, vector<1x4xf32>
      %c5_430 = arith.constant 5 : index
      %c0_431 = arith.constant 0 : index
      %c0_432 = arith.constant 0 : index
      %691 = vector.load %arg3[%c5_430, %c0_431, %c0_432] : memref<8x16x4xf32, #tpu.memory_space<vmem>>, vector<1x16x4xf32>
      %692 = vector.shape_cast %691 : vector<1x16x4xf32> to vector<16x4xf32>
      %693 = vector.broadcast %690 : vector<1x4xf32> to vector<16x4xf32>
      %694 = arith.subf %693, %692 : vector<16x4xf32>
      %695 = vector.broadcast %cst_17 : f32 to vector<16x4xf32>
      %696 = arith.mulf %694, %695 : vector<16x4xf32>
      %697 = arith.maximumf %689, %696 : vector<16x4xf32>
      %c6_433 = arith.constant 6 : index
      %c0_434 = arith.constant 0 : index
      %698 = vector.load %arg6[%c6_433, %c0_434] : memref<8x4xf32, #tpu.memory_space<vmem>>, vector<1x4xf32>
      %c6_435 = arith.constant 6 : index
      %c0_436 = arith.constant 0 : index
      %c0_437 = arith.constant 0 : index
      %699 = vector.load %arg3[%c6_435, %c0_436, %c0_437] : memref<8x16x4xf32, #tpu.memory_space<vmem>>, vector<1x16x4xf32>
      %700 = vector.shape_cast %699 : vector<1x16x4xf32> to vector<16x4xf32>
      %701 = vector.broadcast %698 : vector<1x4xf32> to vector<16x4xf32>
      %702 = arith.subf %701, %700 : vector<16x4xf32>
      %703 = vector.broadcast %cst_17 : f32 to vector<16x4xf32>
      %704 = arith.mulf %702, %703 : vector<16x4xf32>
      %705 = arith.maximumf %697, %704 : vector<16x4xf32>
      %c7_438 = arith.constant 7 : index
      %c0_439 = arith.constant 0 : index
      %706 = vector.load %arg6[%c7_438, %c0_439] : memref<8x4xf32, #tpu.memory_space<vmem>>, vector<1x4xf32>
      %c7_440 = arith.constant 7 : index
      %c0_441 = arith.constant 0 : index
      %c0_442 = arith.constant 0 : index
      %707 = vector.load %arg3[%c7_440, %c0_441, %c0_442] : memref<8x16x4xf32, #tpu.memory_space<vmem>>, vector<1x16x4xf32>
      %708 = vector.shape_cast %707 : vector<1x16x4xf32> to vector<16x4xf32>
      %709 = vector.broadcast %706 : vector<1x4xf32> to vector<16x4xf32>
      %710 = arith.subf %709, %708 : vector<16x4xf32>
      %711 = vector.broadcast %cst_17 : f32 to vector<16x4xf32>
      %712 = arith.mulf %710, %711 : vector<16x4xf32>
      %713 = arith.maximumf %705, %712 : vector<16x4xf32>
      %cst_443 = arith.constant 0.000000e+00 : f32
      %714 = vector.broadcast %cst_443 : f32 to vector<16x4xf32>
      %c0_444 = arith.constant 0 : index
      %c0_445 = arith.constant 0 : index
      %715 = vector.load %arg6[%c0_444, %c0_445] : memref<8x4xf32, #tpu.memory_space<vmem>>, vector<1x4xf32>
      %c0_446 = arith.constant 0 : index
      %c0_447 = arith.constant 0 : index
      %c0_448 = arith.constant 0 : index
      %716 = vector.load %arg3[%c0_446, %c0_447, %c0_448] : memref<8x16x4xf32, #tpu.memory_space<vmem>>, vector<1x16x4xf32>
      %717 = vector.shape_cast %716 : vector<1x16x4xf32> to vector<16x4xf32>
      %718 = vector.broadcast %715 : vector<1x4xf32> to vector<16x4xf32>
      %719 = arith.subf %718, %717 : vector<16x4xf32>
      %720 = vector.broadcast %cst_17 : f32 to vector<16x4xf32>
      %721 = arith.mulf %719, %720 : vector<16x4xf32>
      %722 = arith.subf %721, %713 : vector<16x4xf32>
      %723 = math.exp %722 : vector<16x4xf32>
      %724 = arith.addf %714, %723 : vector<16x4xf32>
      %c1_449 = arith.constant 1 : index
      %c0_450 = arith.constant 0 : index
      %725 = vector.load %arg6[%c1_449, %c0_450] : memref<8x4xf32, #tpu.memory_space<vmem>>, vector<1x4xf32>
      %c1_451 = arith.constant 1 : index
      %c0_452 = arith.constant 0 : index
      %c0_453 = arith.constant 0 : index
      %726 = vector.load %arg3[%c1_451, %c0_452, %c0_453] : memref<8x16x4xf32, #tpu.memory_space<vmem>>, vector<1x16x4xf32>
      %727 = vector.shape_cast %726 : vector<1x16x4xf32> to vector<16x4xf32>
      %728 = vector.broadcast %725 : vector<1x4xf32> to vector<16x4xf32>
      %729 = arith.subf %728, %727 : vector<16x4xf32>
      %730 = vector.broadcast %cst_17 : f32 to vector<16x4xf32>
      %731 = arith.mulf %729, %730 : vector<16x4xf32>
      %732 = arith.subf %731, %713 : vector<16x4xf32>
      %733 = math.exp %732 : vector<16x4xf32>
      %734 = arith.addf %724, %733 : vector<16x4xf32>
      %c2_454 = arith.constant 2 : index
      %c0_455 = arith.constant 0 : index
      %735 = vector.load %arg6[%c2_454, %c0_455] : memref<8x4xf32, #tpu.memory_space<vmem>>, vector<1x4xf32>
      %c2_456 = arith.constant 2 : index
      %c0_457 = arith.constant 0 : index
      %c0_458 = arith.constant 0 : index
      %736 = vector.load %arg3[%c2_456, %c0_457, %c0_458] : memref<8x16x4xf32, #tpu.memory_space<vmem>>, vector<1x16x4xf32>
      %737 = vector.shape_cast %736 : vector<1x16x4xf32> to vector<16x4xf32>
      %738 = vector.broadcast %735 : vector<1x4xf32> to vector<16x4xf32>
      %739 = arith.subf %738, %737 : vector<16x4xf32>
      %740 = vector.broadcast %cst_17 : f32 to vector<16x4xf32>
      %741 = arith.mulf %739, %740 : vector<16x4xf32>
      %742 = arith.subf %741, %713 : vector<16x4xf32>
      %743 = math.exp %742 : vector<16x4xf32>
      %744 = arith.addf %734, %743 : vector<16x4xf32>
      %c3_459 = arith.constant 3 : index
      %c0_460 = arith.constant 0 : index
      %745 = vector.load %arg6[%c3_459, %c0_460] : memref<8x4xf32, #tpu.memory_space<vmem>>, vector<1x4xf32>
      %c3_461 = arith.constant 3 : index
      %c0_462 = arith.constant 0 : index
      %c0_463 = arith.constant 0 : index
      %746 = vector.load %arg3[%c3_461, %c0_462, %c0_463] : memref<8x16x4xf32, #tpu.memory_space<vmem>>, vector<1x16x4xf32>
      %747 = vector.shape_cast %746 : vector<1x16x4xf32> to vector<16x4xf32>
      %748 = vector.broadcast %745 : vector<1x4xf32> to vector<16x4xf32>
      %749 = arith.subf %748, %747 : vector<16x4xf32>
      %750 = vector.broadcast %cst_17 : f32 to vector<16x4xf32>
      %751 = arith.mulf %749, %750 : vector<16x4xf32>
      %752 = arith.subf %751, %713 : vector<16x4xf32>
      %753 = math.exp %752 : vector<16x4xf32>
      %754 = arith.addf %744, %753 : vector<16x4xf32>
      %c4_464 = arith.constant 4 : index
      %c0_465 = arith.constant 0 : index
      %755 = vector.load %arg6[%c4_464, %c0_465] : memref<8x4xf32, #tpu.memory_space<vmem>>, vector<1x4xf32>
      %c4_466 = arith.constant 4 : index
      %c0_467 = arith.constant 0 : index
      %c0_468 = arith.constant 0 : index
      %756 = vector.load %arg3[%c4_466, %c0_467, %c0_468] : memref<8x16x4xf32, #tpu.memory_space<vmem>>, vector<1x16x4xf32>
      %757 = vector.shape_cast %756 : vector<1x16x4xf32> to vector<16x4xf32>
      %758 = vector.broadcast %755 : vector<1x4xf32> to vector<16x4xf32>
      %759 = arith.subf %758, %757 : vector<16x4xf32>
      %760 = vector.broadcast %cst_17 : f32 to vector<16x4xf32>
      %761 = arith.mulf %759, %760 : vector<16x4xf32>
      %762 = arith.subf %761, %713 : vector<16x4xf32>
      %763 = math.exp %762 : vector<16x4xf32>
      %764 = arith.addf %754, %763 : vector<16x4xf32>
      %c5_469 = arith.constant 5 : index
      %c0_470 = arith.constant 0 : index
      %765 = vector.load %arg6[%c5_469, %c0_470] : memref<8x4xf32, #tpu.memory_space<vmem>>, vector<1x4xf32>
      %c5_471 = arith.constant 5 : index
      %c0_472 = arith.constant 0 : index
      %c0_473 = arith.constant 0 : index
      %766 = vector.load %arg3[%c5_471, %c0_472, %c0_473] : memref<8x16x4xf32, #tpu.memory_space<vmem>>, vector<1x16x4xf32>
      %767 = vector.shape_cast %766 : vector<1x16x4xf32> to vector<16x4xf32>
      %768 = vector.broadcast %765 : vector<1x4xf32> to vector<16x4xf32>
      %769 = arith.subf %768, %767 : vector<16x4xf32>
      %770 = vector.broadcast %cst_17 : f32 to vector<16x4xf32>
      %771 = arith.mulf %769, %770 : vector<16x4xf32>
      %772 = arith.subf %771, %713 : vector<16x4xf32>
      %773 = math.exp %772 : vector<16x4xf32>
      %774 = arith.addf %764, %773 : vector<16x4xf32>
      %c6_474 = arith.constant 6 : index
      %c0_475 = arith.constant 0 : index
      %775 = vector.load %arg6[%c6_474, %c0_475] : memref<8x4xf32, #tpu.memory_space<vmem>>, vector<1x4xf32>
      %c6_476 = arith.constant 6 : index
      %c0_477 = arith.constant 0 : index
      %c0_478 = arith.constant 0 : index
      %776 = vector.load %arg3[%c6_476, %c0_477, %c0_478] : memref<8x16x4xf32, #tpu.memory_space<vmem>>, vector<1x16x4xf32>
      %777 = vector.shape_cast %776 : vector<1x16x4xf32> to vector<16x4xf32>
      %778 = vector.broadcast %775 : vector<1x4xf32> to vector<16x4xf32>
      %779 = arith.subf %778, %777 : vector<16x4xf32>
      %780 = vector.broadcast %cst_17 : f32 to vector<16x4xf32>
      %781 = arith.mulf %779, %780 : vector<16x4xf32>
      %782 = arith.subf %781, %713 : vector<16x4xf32>
      %783 = math.exp %782 : vector<16x4xf32>
      %784 = arith.addf %774, %783 : vector<16x4xf32>
      %c7_479 = arith.constant 7 : index
      %c0_480 = arith.constant 0 : index
      %785 = vector.load %arg6[%c7_479, %c0_480] : memref<8x4xf32, #tpu.memory_space<vmem>>, vector<1x4xf32>
      %c7_481 = arith.constant 7 : index
      %c0_482 = arith.constant 0 : index
      %c0_483 = arith.constant 0 : index
      %786 = vector.load %arg3[%c7_481, %c0_482, %c0_483] : memref<8x16x4xf32, #tpu.memory_space<vmem>>, vector<1x16x4xf32>
      %787 = vector.shape_cast %786 : vector<1x16x4xf32> to vector<16x4xf32>
      %788 = vector.broadcast %785 : vector<1x4xf32> to vector<16x4xf32>
      %789 = arith.subf %788, %787 : vector<16x4xf32>
      %790 = vector.broadcast %cst_17 : f32 to vector<16x4xf32>
      %791 = arith.mulf %789, %790 : vector<16x4xf32>
      %792 = arith.subf %791, %713 : vector<16x4xf32>
      %793 = math.exp %792 : vector<16x4xf32>
      %794 = arith.addf %784, %793 : vector<16x4xf32>
      %c0_484 = arith.constant 0 : index
      %c0_485 = arith.constant 0 : index
      %795 = vector.load %arg10[%c0_484, %c0_485] : memref<16x4xf32, #tpu.memory_space<vmem>>, vector<16x4xf32>
      %796 = math.log %794 : vector<16x4xf32>
      %797 = arith.addf %713, %796 : vector<16x4xf32>
      %798 = vector.broadcast %cst_18 : f32 to vector<16x4xf32>
      %799 = arith.mulf %798, %797 : vector<16x4xf32>
      %800 = arith.subf %795, %799 : vector<16x4xf32>
      %c0_486 = arith.constant 0 : index
      %c0_487 = arith.constant 0 : index
      %801 = vector.load %arg7[%c0_486, %c0_487] : memref<16x4xf32, #tpu.memory_space<vmem>>, vector<16x4xf32>
      tpu.vector_store %arg7[%c0_486, %c0_487], %800 {strides = array<i32>} : memref<16x4xf32, #tpu.memory_space<vmem>>, vector<16x4xf32>,
      %c0_488 = arith.constant 0 : index
      %c0_489 = arith.constant 0 : index
      %802 = vector.load %arg7[%c0_488, %c0_489] : memref<16x4xf32, #tpu.memory_space<vmem>>, vector<16x4xf32>
      %c0_490 = arith.constant 0 : index
      %c0_491 = arith.constant 0 : index
      %c0_492 = arith.constant 0 : index
      %803 = vector.load %arg3[%c0_490, %c0_491, %c0_492] : memref<8x16x4xf32, #tpu.memory_space<vmem>>, vector<1x16x4xf32>
      %804 = vector.shape_cast %803 : vector<1x16x4xf32> to vector<16x4xf32>
      %805 = arith.subf %802, %804 : vector<16x4xf32>
      %806 = vector.broadcast %cst_17 : f32 to vector<16x4xf32>
      %807 = arith.mulf %805, %806 : vector<16x4xf32>
      %cst_493 = arith.constant dense<0xFF800000> : vector<4xf32>
      %808 = vector.multi_reduction <maximumf>, %807, %cst_493 [0] : vector<16x4xf32> to vector<4xf32>
      %809 = vector.shape_cast %808 : vector<4xf32> to vector<1x4xf32>
      %810 = vector.broadcast %809 : vector<1x4xf32> to vector<16x4xf32>
      %811 = arith.subf %807, %810 : vector<16x4xf32>
      %812 = math.exp %811 : vector<16x4xf32>
      %cst_494 = arith.constant dense<0.000000e+00> : vector<4xf32>
      %813 = vector.multi_reduction <add>, %812, %cst_494 [0] : vector<16x4xf32> to vector<4xf32>
      %814 = vector.shape_cast %813 : vector<4xf32> to vector<1x4xf32>
      %815 = math.log %814 : vector<1x4xf32>
      %816 = arith.addf %809, %815 : vector<1x4xf32>
      %c0_495 = arith.constant 0 : index
      %c0_496 = arith.constant 0 : index
      %817 = vector.load %arg9[%c0_495, %c0_496] : memref<8x4xf32, #tpu.memory_space<vmem>>, vector<1x4xf32>
      %818 = vector.broadcast %cst_18 : f32 to vector<1x4xf32>
      %819 = arith.mulf %818, %816 : vector<1x4xf32>
      %820 = arith.subf %817, %819 : vector<1x4xf32>
      %c0_497 = arith.constant 0 : index
      %c0_498 = arith.constant 0 : index
      %821 = vector.load %arg6[%c0_497, %c0_498] : memref<8x4xf32, #tpu.memory_space<vmem>>, vector<1x4xf32>
      tpu.vector_store %arg6[%c0_497, %c0_498], %820 {strides = array<i32>} : memref<8x4xf32, #tpu.memory_space<vmem>>, vector<1x4xf32>,
      %c0_499 = arith.constant 0 : index
      %c0_500 = arith.constant 0 : index
      %822 = vector.load %arg7[%c0_499, %c0_500] : memref<16x4xf32, #tpu.memory_space<vmem>>, vector<16x4xf32>
      %c1_501 = arith.constant 1 : index
      %c0_502 = arith.constant 0 : index
      %c0_503 = arith.constant 0 : index
      %823 = vector.load %arg3[%c1_501, %c0_502, %c0_503] : memref<8x16x4xf32, #tpu.memory_space<vmem>>, vector<1x16x4xf32>
      %824 = vector.shape_cast %823 : vector<1x16x4xf32> to vector<16x4xf32>
      %825 = arith.subf %822, %824 : vector<16x4xf32>
      %826 = vector.broadcast %cst_17 : f32 to vector<16x4xf32>
      %827 = arith.mulf %825, %826 : vector<16x4xf32>
      %cst_504 = arith.constant dense<0xFF800000> : vector<4xf32>
      %828 = vector.multi_reduction <maximumf>, %827, %cst_504 [0] : vector<16x4xf32> to vector<4xf32>
      %829 = vector.shape_cast %828 : vector<4xf32> to vector<1x4xf32>
      %830 = vector.broadcast %829 : vector<1x4xf32> to vector<16x4xf32>
      %831 = arith.subf %827, %830 : vector<16x4xf32>
      %832 = math.exp %831 : vector<16x4xf32>
      %cst_505 = arith.constant dense<0.000000e+00> : vector<4xf32>
      %833 = vector.multi_reduction <add>, %832, %cst_505 [0] : vector<16x4xf32> to vector<4xf32>
      %834 = vector.shape_cast %833 : vector<4xf32> to vector<1x4xf32>
      %835 = math.log %834 : vector<1x4xf32>
      %836 = arith.addf %829, %835 : vector<1x4xf32>
      %c1_506 = arith.constant 1 : index
      %c0_507 = arith.constant 0 : index
      %837 = vector.load %arg9[%c1_506, %c0_507] : memref<8x4xf32, #tpu.memory_space<vmem>>, vector<1x4xf32>
      %838 = vector.broadcast %cst_18 : f32 to vector<1x4xf32>
      %839 = arith.mulf %838, %836 : vector<1x4xf32>
      %840 = arith.subf %837, %839 : vector<1x4xf32>
      %c1_508 = arith.constant 1 : index
      %c0_509 = arith.constant 0 : index
      %841 = vector.load %arg6[%c1_508, %c0_509] : memref<8x4xf32, #tpu.memory_space<vmem>>, vector<1x4xf32>
      tpu.vector_store %arg6[%c1_508, %c0_509], %840 {strides = array<i32>} : memref<8x4xf32, #tpu.memory_space<vmem>>, vector<1x4xf32>,
      %c0_510 = arith.constant 0 : index
      %c0_511 = arith.constant 0 : index
      %842 = vector.load %arg7[%c0_510, %c0_511] : memref<16x4xf32, #tpu.memory_space<vmem>>, vector<16x4xf32>
      %c2_512 = arith.constant 2 : index
      %c0_513 = arith.constant 0 : index
      %c0_514 = arith.constant 0 : index
      %843 = vector.load %arg3[%c2_512, %c0_513, %c0_514] : memref<8x16x4xf32, #tpu.memory_space<vmem>>, vector<1x16x4xf32>
      %844 = vector.shape_cast %843 : vector<1x16x4xf32> to vector<16x4xf32>
      %845 = arith.subf %842, %844 : vector<16x4xf32>
      %846 = vector.broadcast %cst_17 : f32 to vector<16x4xf32>
      %847 = arith.mulf %845, %846 : vector<16x4xf32>
      %cst_515 = arith.constant dense<0xFF800000> : vector<4xf32>
      %848 = vector.multi_reduction <maximumf>, %847, %cst_515 [0] : vector<16x4xf32> to vector<4xf32>
      %849 = vector.shape_cast %848 : vector<4xf32> to vector<1x4xf32>
      %850 = vector.broadcast %849 : vector<1x4xf32> to vector<16x4xf32>
      %851 = arith.subf %847, %850 : vector<16x4xf32>
      %852 = math.exp %851 : vector<16x4xf32>
      %cst_516 = arith.constant dense<0.000000e+00> : vector<4xf32>
      %853 = vector.multi_reduction <add>, %852, %cst_516 [0] : vector<16x4xf32> to vector<4xf32>
      %854 = vector.shape_cast %853 : vector<4xf32> to vector<1x4xf32>
      %855 = math.log %854 : vector<1x4xf32>
      %856 = arith.addf %849, %855 : vector<1x4xf32>
      %c2_517 = arith.constant 2 : index
      %c0_518 = arith.constant 0 : index
      %857 = vector.load %arg9[%c2_517, %c0_518] : memref<8x4xf32, #tpu.memory_space<vmem>>, vector<1x4xf32>
      %858 = vector.broadcast %cst_18 : f32 to vector<1x4xf32>
      %859 = arith.mulf %858, %856 : vector<1x4xf32>
      %860 = arith.subf %857, %859 : vector<1x4xf32>
      %c2_519 = arith.constant 2 : index
      %c0_520 = arith.constant 0 : index
      %861 = vector.load %arg6[%c2_519, %c0_520] : memref<8x4xf32, #tpu.memory_space<vmem>>, vector<1x4xf32>
      tpu.vector_store %arg6[%c2_519, %c0_520], %860 {strides = array<i32>} : memref<8x4xf32, #tpu.memory_space<vmem>>, vector<1x4xf32>,
      %c0_521 = arith.constant 0 : index
      %c0_522 = arith.constant 0 : index
      %862 = vector.load %arg7[%c0_521, %c0_522] : memref<16x4xf32, #tpu.memory_space<vmem>>, vector<16x4xf32>
      %c3_523 = arith.constant 3 : index
      %c0_524 = arith.constant 0 : index
      %c0_525 = arith.constant 0 : index
      %863 = vector.load %arg3[%c3_523, %c0_524, %c0_525] : memref<8x16x4xf32, #tpu.memory_space<vmem>>, vector<1x16x4xf32>
      %864 = vector.shape_cast %863 : vector<1x16x4xf32> to vector<16x4xf32>
      %865 = arith.subf %862, %864 : vector<16x4xf32>
      %866 = vector.broadcast %cst_17 : f32 to vector<16x4xf32>
      %867 = arith.mulf %865, %866 : vector<16x4xf32>
      %cst_526 = arith.constant dense<0xFF800000> : vector<4xf32>
      %868 = vector.multi_reduction <maximumf>, %867, %cst_526 [0] : vector<16x4xf32> to vector<4xf32>
      %869 = vector.shape_cast %868 : vector<4xf32> to vector<1x4xf32>
      %870 = vector.broadcast %869 : vector<1x4xf32> to vector<16x4xf32>
      %871 = arith.subf %867, %870 : vector<16x4xf32>
      %872 = math.exp %871 : vector<16x4xf32>
      %cst_527 = arith.constant dense<0.000000e+00> : vector<4xf32>
      %873 = vector.multi_reduction <add>, %872, %cst_527 [0] : vector<16x4xf32> to vector<4xf32>
      %874 = vector.shape_cast %873 : vector<4xf32> to vector<1x4xf32>
      %875 = math.log %874 : vector<1x4xf32>
      %876 = arith.addf %869, %875 : vector<1x4xf32>
      %c3_528 = arith.constant 3 : index
      %c0_529 = arith.constant 0 : index
      %877 = vector.load %arg9[%c3_528, %c0_529] : memref<8x4xf32, #tpu.memory_space<vmem>>, vector<1x4xf32>
      %878 = vector.broadcast %cst_18 : f32 to vector<1x4xf32>
      %879 = arith.mulf %878, %876 : vector<1x4xf32>
      %880 = arith.subf %877, %879 : vector<1x4xf32>
      %c3_530 = arith.constant 3 : index
      %c0_531 = arith.constant 0 : index
      %881 = vector.load %arg6[%c3_530, %c0_531] : memref<8x4xf32, #tpu.memory_space<vmem>>, vector<1x4xf32>
      tpu.vector_store %arg6[%c3_530, %c0_531], %880 {strides = array<i32>} : memref<8x4xf32, #tpu.memory_space<vmem>>, vector<1x4xf32>,
      %c0_532 = arith.constant 0 : index
      %c0_533 = arith.constant 0 : index
      %882 = vector.load %arg7[%c0_532, %c0_533] : memref<16x4xf32, #tpu.memory_space<vmem>>, vector<16x4xf32>
      %c4_534 = arith.constant 4 : index
      %c0_535 = arith.constant 0 : index
      %c0_536 = arith.constant 0 : index
      %883 = vector.load %arg3[%c4_534, %c0_535, %c0_536] : memref<8x16x4xf32, #tpu.memory_space<vmem>>, vector<1x16x4xf32>
      %884 = vector.shape_cast %883 : vector<1x16x4xf32> to vector<16x4xf32>
      %885 = arith.subf %882, %884 : vector<16x4xf32>
      %886 = vector.broadcast %cst_17 : f32 to vector<16x4xf32>
      %887 = arith.mulf %885, %886 : vector<16x4xf32>
      %cst_537 = arith.constant dense<0xFF800000> : vector<4xf32>
      %888 = vector.multi_reduction <maximumf>, %887, %cst_537 [0] : vector<16x4xf32> to vector<4xf32>
      %889 = vector.shape_cast %888 : vector<4xf32> to vector<1x4xf32>
      %890 = vector.broadcast %889 : vector<1x4xf32> to vector<16x4xf32>
      %891 = arith.subf %887, %890 : vector<16x4xf32>
      %892 = math.exp %891 : vector<16x4xf32>
      %cst_538 = arith.constant dense<0.000000e+00> : vector<4xf32>
      %893 = vector.multi_reduction <add>, %892, %cst_538 [0] : vector<16x4xf32> to vector<4xf32>
      %894 = vector.shape_cast %893 : vector<4xf32> to vector<1x4xf32>
      %895 = math.log %894 : vector<1x4xf32>
      %896 = arith.addf %889, %895 : vector<1x4xf32>
      %c4_539 = arith.constant 4 : index
      %c0_540 = arith.constant 0 : index
      %897 = vector.load %arg9[%c4_539, %c0_540] : memref<8x4xf32, #tpu.memory_space<vmem>>, vector<1x4xf32>
      %898 = vector.broadcast %cst_18 : f32 to vector<1x4xf32>
      %899 = arith.mulf %898, %896 : vector<1x4xf32>
      %900 = arith.subf %897, %899 : vector<1x4xf32>
      %c4_541 = arith.constant 4 : index
      %c0_542 = arith.constant 0 : index
      %901 = vector.load %arg6[%c4_541, %c0_542] : memref<8x4xf32, #tpu.memory_space<vmem>>, vector<1x4xf32>
      tpu.vector_store %arg6[%c4_541, %c0_542], %900 {strides = array<i32>} : memref<8x4xf32, #tpu.memory_space<vmem>>, vector<1x4xf32>,
      %c0_543 = arith.constant 0 : index
      %c0_544 = arith.constant 0 : index
      %902 = vector.load %arg7[%c0_543, %c0_544] : memref<16x4xf32, #tpu.memory_space<vmem>>, vector<16x4xf32>
      %c5_545 = arith.constant 5 : index
      %c0_546 = arith.constant 0 : index
      %c0_547 = arith.constant 0 : index
      %903 = vector.load %arg3[%c5_545, %c0_546, %c0_547] : memref<8x16x4xf32, #tpu.memory_space<vmem>>, vector<1x16x4xf32>
      %904 = vector.shape_cast %903 : vector<1x16x4xf32> to vector<16x4xf32>
      %905 = arith.subf %902, %904 : vector<16x4xf32>
      %906 = vector.broadcast %cst_17 : f32 to vector<16x4xf32>
      %907 = arith.mulf %905, %906 : vector<16x4xf32>
      %cst_548 = arith.constant dense<0xFF800000> : vector<4xf32>
      %908 = vector.multi_reduction <maximumf>, %907, %cst_548 [0] : vector<16x4xf32> to vector<4xf32>
      %909 = vector.shape_cast %908 : vector<4xf32> to vector<1x4xf32>
      %910 = vector.broadcast %909 : vector<1x4xf32> to vector<16x4xf32>
      %911 = arith.subf %907, %910 : vector<16x4xf32>
      %912 = math.exp %911 : vector<16x4xf32>
      %cst_549 = arith.constant dense<0.000000e+00> : vector<4xf32>
      %913 = vector.multi_reduction <add>, %912, %cst_549 [0] : vector<16x4xf32> to vector<4xf32>
      %914 = vector.shape_cast %913 : vector<4xf32> to vector<1x4xf32>
      %915 = math.log %914 : vector<1x4xf32>
      %916 = arith.addf %909, %915 : vector<1x4xf32>
      %c5_550 = arith.constant 5 : index
      %c0_551 = arith.constant 0 : index
      %917 = vector.load %arg9[%c5_550, %c0_551] : memref<8x4xf32, #tpu.memory_space<vmem>>, vector<1x4xf32>
      %918 = vector.broadcast %cst_18 : f32 to vector<1x4xf32>
      %919 = arith.mulf %918, %916 : vector<1x4xf32>
      %920 = arith.subf %917, %919 : vector<1x4xf32>
      %c5_552 = arith.constant 5 : index
      %c0_553 = arith.constant 0 : index
      %921 = vector.load %arg6[%c5_552, %c0_553] : memref<8x4xf32, #tpu.memory_space<vmem>>, vector<1x4xf32>
      tpu.vector_store %arg6[%c5_552, %c0_553], %920 {strides = array<i32>} : memref<8x4xf32, #tpu.memory_space<vmem>>, vector<1x4xf32>,
      %c0_554 = arith.constant 0 : index
      %c0_555 = arith.constant 0 : index
      %922 = vector.load %arg7[%c0_554, %c0_555] : memref<16x4xf32, #tpu.memory_space<vmem>>, vector<16x4xf32>
      %c6_556 = arith.constant 6 : index
      %c0_557 = arith.constant 0 : index
      %c0_558 = arith.constant 0 : index
      %923 = vector.load %arg3[%c6_556, %c0_557, %c0_558] : memref<8x16x4xf32, #tpu.memory_space<vmem>>, vector<1x16x4xf32>
      %924 = vector.shape_cast %923 : vector<1x16x4xf32> to vector<16x4xf32>
      %925 = arith.subf %922, %924 : vector<16x4xf32>
      %926 = vector.broadcast %cst_17 : f32 to vector<16x4xf32>
      %927 = arith.mulf %925, %926 : vector<16x4xf32>
      %cst_559 = arith.constant dense<0xFF800000> : vector<4xf32>
      %928 = vector.multi_reduction <maximumf>, %927, %cst_559 [0] : vector<16x4xf32> to vector<4xf32>
      %929 = vector.shape_cast %928 : vector<4xf32> to vector<1x4xf32>
      %930 = vector.broadcast %929 : vector<1x4xf32> to vector<16x4xf32>
      %931 = arith.subf %927, %930 : vector<16x4xf32>
      %932 = math.exp %931 : vector<16x4xf32>
      %cst_560 = arith.constant dense<0.000000e+00> : vector<4xf32>
      %933 = vector.multi_reduction <add>, %932, %cst_560 [0] : vector<16x4xf32> to vector<4xf32>
      %934 = vector.shape_cast %933 : vector<4xf32> to vector<1x4xf32>
      %935 = math.log %934 : vector<1x4xf32>
      %936 = arith.addf %929, %935 : vector<1x4xf32>
      %c6_561 = arith.constant 6 : index
      %c0_562 = arith.constant 0 : index
      %937 = vector.load %arg9[%c6_561, %c0_562] : memref<8x4xf32, #tpu.memory_space<vmem>>, vector<1x4xf32>
      %938 = vector.broadcast %cst_18 : f32 to vector<1x4xf32>
      %939 = arith.mulf %938, %936 : vector<1x4xf32>
      %940 = arith.subf %937, %939 : vector<1x4xf32>
      %c6_563 = arith.constant 6 : index
      %c0_564 = arith.constant 0 : index
      %941 = vector.load %arg6[%c6_563, %c0_564] : memref<8x4xf32, #tpu.memory_space<vmem>>, vector<1x4xf32>
      tpu.vector_store %arg6[%c6_563, %c0_564], %940 {strides = array<i32>} : memref<8x4xf32, #tpu.memory_space<vmem>>, vector<1x4xf32>,
      %c0_565 = arith.constant 0 : index
      %c0_566 = arith.constant 0 : index
      %942 = vector.load %arg7[%c0_565, %c0_566] : memref<16x4xf32, #tpu.memory_space<vmem>>, vector<16x4xf32>
      %c7_567 = arith.constant 7 : index
      %c0_568 = arith.constant 0 : index
      %c0_569 = arith.constant 0 : index
      %943 = vector.load %arg3[%c7_567, %c0_568, %c0_569] : memref<8x16x4xf32, #tpu.memory_space<vmem>>, vector<1x16x4xf32>
      %944 = vector.shape_cast %943 : vector<1x16x4xf32> to vector<16x4xf32>
      %945 = arith.subf %942, %944 : vector<16x4xf32>
      %946 = vector.broadcast %cst_17 : f32 to vector<16x4xf32>
      %947 = arith.mulf %945, %946 : vector<16x4xf32>
      %cst_570 = arith.constant dense<0xFF800000> : vector<4xf32>
      %948 = vector.multi_reduction <maximumf>, %947, %cst_570 [0] : vector<16x4xf32> to vector<4xf32>
      %949 = vector.shape_cast %948 : vector<4xf32> to vector<1x4xf32>
      %950 = vector.broadcast %949 : vector<1x4xf32> to vector<16x4xf32>
      %951 = arith.subf %947, %950 : vector<16x4xf32>
      %952 = math.exp %951 : vector<16x4xf32>
      %cst_571 = arith.constant dense<0.000000e+00> : vector<4xf32>
      %953 = vector.multi_reduction <add>, %952, %cst_571 [0] : vector<16x4xf32> to vector<4xf32>
      %954 = vector.shape_cast %953 : vector<4xf32> to vector<1x4xf32>
      %955 = math.log %954 : vector<1x4xf32>
      %956 = arith.addf %949, %955 : vector<1x4xf32>
      %c7_572 = arith.constant 7 : index
      %c0_573 = arith.constant 0 : index
      %957 = vector.load %arg9[%c7_572, %c0_573] : memref<8x4xf32, #tpu.memory_space<vmem>>, vector<1x4xf32>
      %958 = vector.broadcast %cst_18 : f32 to vector<1x4xf32>
      %959 = arith.mulf %958, %956 : vector<1x4xf32>
      %960 = arith.subf %957, %959 : vector<1x4xf32>
      %c7_574 = arith.constant 7 : index
      %c0_575 = arith.constant 0 : index
      %961 = vector.load %arg6[%c7_574, %c0_575] : memref<8x4xf32, #tpu.memory_space<vmem>>, vector<1x4xf32>
      tpu.vector_store %arg6[%c7_574, %c0_575], %960 {strides = array<i32>} : memref<8x4xf32, #tpu.memory_space<vmem>>, vector<1x4xf32>,
      %cst_576 = arith.constant 0xFF800000 : f32
      %962 = vector.broadcast %cst_576 : f32 to vector<16x4xf32>
      %c0_577 = arith.constant 0 : index
      %c0_578 = arith.constant 0 : index
      %963 = vector.load %arg6[%c0_577, %c0_578] : memref<8x4xf32, #tpu.memory_space<vmem>>, vector<1x4xf32>
      %c0_579 = arith.constant 0 : index
      %c0_580 = arith.constant 0 : index
      %c0_581 = arith.constant 0 : index
      %964 = vector.load %arg3[%c0_579, %c0_580, %c0_581] : memref<8x16x4xf32, #tpu.memory_space<vmem>>, vector<1x16x4xf32>
      %965 = vector.shape_cast %964 : vector<1x16x4xf32> to vector<16x4xf32>
      %966 = vector.broadcast %963 : vector<1x4xf32> to vector<16x4xf32>
      %967 = arith.subf %966, %965 : vector<16x4xf32>
      %968 = vector.broadcast %cst_17 : f32 to vector<16x4xf32>
      %969 = arith.mulf %967, %968 : vector<16x4xf32>
      %970 = arith.maximumf %962, %969 : vector<16x4xf32>
      %c1_582 = arith.constant 1 : index
      %c0_583 = arith.constant 0 : index
      %971 = vector.load %arg6[%c1_582, %c0_583] : memref<8x4xf32, #tpu.memory_space<vmem>>, vector<1x4xf32>
      %c1_584 = arith.constant 1 : index
      %c0_585 = arith.constant 0 : index
      %c0_586 = arith.constant 0 : index
      %972 = vector.load %arg3[%c1_584, %c0_585, %c0_586] : memref<8x16x4xf32, #tpu.memory_space<vmem>>, vector<1x16x4xf32>
      %973 = vector.shape_cast %972 : vector<1x16x4xf32> to vector<16x4xf32>
      %974 = vector.broadcast %971 : vector<1x4xf32> to vector<16x4xf32>
      %975 = arith.subf %974, %973 : vector<16x4xf32>
      %976 = vector.broadcast %cst_17 : f32 to vector<16x4xf32>
      %977 = arith.mulf %975, %976 : vector<16x4xf32>
      %978 = arith.maximumf %970, %977 : vector<16x4xf32>
      %c2_587 = arith.constant 2 : index
      %c0_588 = arith.constant 0 : index
      %979 = vector.load %arg6[%c2_587, %c0_588] : memref<8x4xf32, #tpu.memory_space<vmem>>, vector<1x4xf32>
      %c2_589 = arith.constant 2 : index
      %c0_590 = arith.constant 0 : index
      %c0_591 = arith.constant 0 : index
      %980 = vector.load %arg3[%c2_589, %c0_590, %c0_591] : memref<8x16x4xf32, #tpu.memory_space<vmem>>, vector<1x16x4xf32>
      %981 = vector.shape_cast %980 : vector<1x16x4xf32> to vector<16x4xf32>
      %982 = vector.broadcast %979 : vector<1x4xf32> to vector<16x4xf32>
      %983 = arith.subf %982, %981 : vector<16x4xf32>
      %984 = vector.broadcast %cst_17 : f32 to vector<16x4xf32>
      %985 = arith.mulf %983, %984 : vector<16x4xf32>
      %986 = arith.maximumf %978, %985 : vector<16x4xf32>
      %c3_592 = arith.constant 3 : index
      %c0_593 = arith.constant 0 : index
      %987 = vector.load %arg6[%c3_592, %c0_593] : memref<8x4xf32, #tpu.memory_space<vmem>>, vector<1x4xf32>
      %c3_594 = arith.constant 3 : index
      %c0_595 = arith.constant 0 : index
      %c0_596 = arith.constant 0 : index
      %988 = vector.load %arg3[%c3_594, %c0_595, %c0_596] : memref<8x16x4xf32, #tpu.memory_space<vmem>>, vector<1x16x4xf32>
      %989 = vector.shape_cast %988 : vector<1x16x4xf32> to vector<16x4xf32>
      %990 = vector.broadcast %987 : vector<1x4xf32> to vector<16x4xf32>
      %991 = arith.subf %990, %989 : vector<16x4xf32>
      %992 = vector.broadcast %cst_17 : f32 to vector<16x4xf32>
      %993 = arith.mulf %991, %992 : vector<16x4xf32>
      %994 = arith.maximumf %986, %993 : vector<16x4xf32>
      %c4_597 = arith.constant 4 : index
      %c0_598 = arith.constant 0 : index
      %995 = vector.load %arg6[%c4_597, %c0_598] : memref<8x4xf32, #tpu.memory_space<vmem>>, vector<1x4xf32>
      %c4_599 = arith.constant 4 : index
      %c0_600 = arith.constant 0 : index
      %c0_601 = arith.constant 0 : index
      %996 = vector.load %arg3[%c4_599, %c0_600, %c0_601] : memref<8x16x4xf32, #tpu.memory_space<vmem>>, vector<1x16x4xf32>
      %997 = vector.shape_cast %996 : vector<1x16x4xf32> to vector<16x4xf32>
      %998 = vector.broadcast %995 : vector<1x4xf32> to vector<16x4xf32>
      %999 = arith.subf %998, %997 : vector<16x4xf32>
      %1000 = vector.broadcast %cst_17 : f32 to vector<16x4xf32>
      %1001 = arith.mulf %999, %1000 : vector<16x4xf32>
      %1002 = arith.maximumf %994, %1001 : vector<16x4xf32>
      %c5_602 = arith.constant 5 : index
      %c0_603 = arith.constant 0 : index
      %1003 = vector.load %arg6[%c5_602, %c0_603] : memref<8x4xf32, #tpu.memory_space<vmem>>, vector<1x4xf32>
      %c5_604 = arith.constant 5 : index
      %c0_605 = arith.constant 0 : index
      %c0_606 = arith.constant 0 : index
      %1004 = vector.load %arg3[%c5_604, %c0_605, %c0_606] : memref<8x16x4xf32, #tpu.memory_space<vmem>>, vector<1x16x4xf32>
      %1005 = vector.shape_cast %1004 : vector<1x16x4xf32> to vector<16x4xf32>
      %1006 = vector.broadcast %1003 : vector<1x4xf32> to vector<16x4xf32>
      %1007 = arith.subf %1006, %1005 : vector<16x4xf32>
      %1008 = vector.broadcast %cst_17 : f32 to vector<16x4xf32>
      %1009 = arith.mulf %1007, %1008 : vector<16x4xf32>
      %1010 = arith.maximumf %1002, %1009 : vector<16x4xf32>
      %c6_607 = arith.constant 6 : index
      %c0_608 = arith.constant 0 : index
      %1011 = vector.load %arg6[%c6_607, %c0_608] : memref<8x4xf32, #tpu.memory_space<vmem>>, vector<1x4xf32>
      %c6_609 = arith.constant 6 : index
      %c0_610 = arith.constant 0 : index
      %c0_611 = arith.constant 0 : index
      %1012 = vector.load %arg3[%c6_609, %c0_610, %c0_611] : memref<8x16x4xf32, #tpu.memory_space<vmem>>, vector<1x16x4xf32>
      %1013 = vector.shape_cast %1012 : vector<1x16x4xf32> to vector<16x4xf32>
      %1014 = vector.broadcast %1011 : vector<1x4xf32> to vector<16x4xf32>
      %1015 = arith.subf %1014, %1013 : vector<16x4xf32>
      %1016 = vector.broadcast %cst_17 : f32 to vector<16x4xf32>
      %1017 = arith.mulf %1015, %1016 : vector<16x4xf32>
      %1018 = arith.maximumf %1010, %1017 : vector<16x4xf32>
      %c7_612 = arith.constant 7 : index
      %c0_613 = arith.constant 0 : index
      %1019 = vector.load %arg6[%c7_612, %c0_613] : memref<8x4xf32, #tpu.memory_space<vmem>>, vector<1x4xf32>
      %c7_614 = arith.constant 7 : index
      %c0_615 = arith.constant 0 : index
      %c0_616 = arith.constant 0 : index
      %1020 = vector.load %arg3[%c7_614, %c0_615, %c0_616] : memref<8x16x4xf32, #tpu.memory_space<vmem>>, vector<1x16x4xf32>
      %1021 = vector.shape_cast %1020 : vector<1x16x4xf32> to vector<16x4xf32>
      %1022 = vector.broadcast %1019 : vector<1x4xf32> to vector<16x4xf32>
      %1023 = arith.subf %1022, %1021 : vector<16x4xf32>
      %1024 = vector.broadcast %cst_17 : f32 to vector<16x4xf32>
      %1025 = arith.mulf %1023, %1024 : vector<16x4xf32>
      %1026 = arith.maximumf %1018, %1025 : vector<16x4xf32>
      %cst_617 = arith.constant 0.000000e+00 : f32
      %1027 = vector.broadcast %cst_617 : f32 to vector<16x4xf32>
      %c0_618 = arith.constant 0 : index
      %c0_619 = arith.constant 0 : index
      %1028 = vector.load %arg6[%c0_618, %c0_619] : memref<8x4xf32, #tpu.memory_space<vmem>>, vector<1x4xf32>
      %c0_620 = arith.constant 0 : index
      %c0_621 = arith.constant 0 : index
      %c0_622 = arith.constant 0 : index
      %1029 = vector.load %arg3[%c0_620, %c0_621, %c0_622] : memref<8x16x4xf32, #tpu.memory_space<vmem>>, vector<1x16x4xf32>
      %1030 = vector.shape_cast %1029 : vector<1x16x4xf32> to vector<16x4xf32>
      %1031 = vector.broadcast %1028 : vector<1x4xf32> to vector<16x4xf32>
      %1032 = arith.subf %1031, %1030 : vector<16x4xf32>
      %1033 = vector.broadcast %cst_17 : f32 to vector<16x4xf32>
      %1034 = arith.mulf %1032, %1033 : vector<16x4xf32>
      %1035 = arith.subf %1034, %1026 : vector<16x4xf32>
      %1036 = math.exp %1035 : vector<16x4xf32>
      %1037 = arith.addf %1027, %1036 : vector<16x4xf32>
      %c1_623 = arith.constant 1 : index
      %c0_624 = arith.constant 0 : index
      %1038 = vector.load %arg6[%c1_623, %c0_624] : memref<8x4xf32, #tpu.memory_space<vmem>>, vector<1x4xf32>
      %c1_625 = arith.constant 1 : index
      %c0_626 = arith.constant 0 : index
      %c0_627 = arith.constant 0 : index
      %1039 = vector.load %arg3[%c1_625, %c0_626, %c0_627] : memref<8x16x4xf32, #tpu.memory_space<vmem>>, vector<1x16x4xf32>
      %1040 = vector.shape_cast %1039 : vector<1x16x4xf32> to vector<16x4xf32>
      %1041 = vector.broadcast %1038 : vector<1x4xf32> to vector<16x4xf32>
      %1042 = arith.subf %1041, %1040 : vector<16x4xf32>
      %1043 = vector.broadcast %cst_17 : f32 to vector<16x4xf32>
      %1044 = arith.mulf %1042, %1043 : vector<16x4xf32>
      %1045 = arith.subf %1044, %1026 : vector<16x4xf32>
      %1046 = math.exp %1045 : vector<16x4xf32>
      %1047 = arith.addf %1037, %1046 : vector<16x4xf32>
      %c2_628 = arith.constant 2 : index
      %c0_629 = arith.constant 0 : index
      %1048 = vector.load %arg6[%c2_628, %c0_629] : memref<8x4xf32, #tpu.memory_space<vmem>>, vector<1x4xf32>
      %c2_630 = arith.constant 2 : index
      %c0_631 = arith.constant 0 : index
      %c0_632 = arith.constant 0 : index
      %1049 = vector.load %arg3[%c2_630, %c0_631, %c0_632] : memref<8x16x4xf32, #tpu.memory_space<vmem>>, vector<1x16x4xf32>
      %1050 = vector.shape_cast %1049 : vector<1x16x4xf32> to vector<16x4xf32>
      %1051 = vector.broadcast %1048 : vector<1x4xf32> to vector<16x4xf32>
      %1052 = arith.subf %1051, %1050 : vector<16x4xf32>
      %1053 = vector.broadcast %cst_17 : f32 to vector<16x4xf32>
      %1054 = arith.mulf %1052, %1053 : vector<16x4xf32>
      %1055 = arith.subf %1054, %1026 : vector<16x4xf32>
      %1056 = math.exp %1055 : vector<16x4xf32>
      %1057 = arith.addf %1047, %1056 : vector<16x4xf32>
      %c3_633 = arith.constant 3 : index
      %c0_634 = arith.constant 0 : index
      %1058 = vector.load %arg6[%c3_633, %c0_634] : memref<8x4xf32, #tpu.memory_space<vmem>>, vector<1x4xf32>
      %c3_635 = arith.constant 3 : index
      %c0_636 = arith.constant 0 : index
      %c0_637 = arith.constant 0 : index
      %1059 = vector.load %arg3[%c3_635, %c0_636, %c0_637] : memref<8x16x4xf32, #tpu.memory_space<vmem>>, vector<1x16x4xf32>
      %1060 = vector.shape_cast %1059 : vector<1x16x4xf32> to vector<16x4xf32>
      %1061 = vector.broadcast %1058 : vector<1x4xf32> to vector<16x4xf32>
      %1062 = arith.subf %1061, %1060 : vector<16x4xf32>
      %1063 = vector.broadcast %cst_17 : f32 to vector<16x4xf32>
      %1064 = arith.mulf %1062, %1063 : vector<16x4xf32>
      %1065 = arith.subf %1064, %1026 : vector<16x4xf32>
      %1066 = math.exp %1065 : vector<16x4xf32>
      %1067 = arith.addf %1057, %1066 : vector<16x4xf32>
      %c4_638 = arith.constant 4 : index
      %c0_639 = arith.constant 0 : index
      %1068 = vector.load %arg6[%c4_638, %c0_639] : memref<8x4xf32, #tpu.memory_space<vmem>>, vector<1x4xf32>
      %c4_640 = arith.constant 4 : index
      %c0_641 = arith.constant 0 : index
      %c0_642 = arith.constant 0 : index
      %1069 = vector.load %arg3[%c4_640, %c0_641, %c0_642] : memref<8x16x4xf32, #tpu.memory_space<vmem>>, vector<1x16x4xf32>
      %1070 = vector.shape_cast %1069 : vector<1x16x4xf32> to vector<16x4xf32>
      %1071 = vector.broadcast %1068 : vector<1x4xf32> to vector<16x4xf32>
      %1072 = arith.subf %1071, %1070 : vector<16x4xf32>
      %1073 = vector.broadcast %cst_17 : f32 to vector<16x4xf32>
      %1074 = arith.mulf %1072, %1073 : vector<16x4xf32>
      %1075 = arith.subf %1074, %1026 : vector<16x4xf32>
      %1076 = math.exp %1075 : vector<16x4xf32>
      %1077 = arith.addf %1067, %1076 : vector<16x4xf32>
      %c5_643 = arith.constant 5 : index
      %c0_644 = arith.constant 0 : index
      %1078 = vector.load %arg6[%c5_643, %c0_644] : memref<8x4xf32, #tpu.memory_space<vmem>>, vector<1x4xf32>
      %c5_645 = arith.constant 5 : index
      %c0_646 = arith.constant 0 : index
      %c0_647 = arith.constant 0 : index
      %1079 = vector.load %arg3[%c5_645, %c0_646, %c0_647] : memref<8x16x4xf32, #tpu.memory_space<vmem>>, vector<1x16x4xf32>
      %1080 = vector.shape_cast %1079 : vector<1x16x4xf32> to vector<16x4xf32>
      %1081 = vector.broadcast %1078 : vector<1x4xf32> to vector<16x4xf32>
      %1082 = arith.subf %1081, %1080 : vector<16x4xf32>
      %1083 = vector.broadcast %cst_17 : f32 to vector<16x4xf32>
      %1084 = arith.mulf %1082, %1083 : vector<16x4xf32>
      %1085 = arith.subf %1084, %1026 : vector<16x4xf32>
      %1086 = math.exp %1085 : vector<16x4xf32>
      %1087 = arith.addf %1077, %1086 : vector<16x4xf32>
      %c6_648 = arith.constant 6 : index
      %c0_649 = arith.constant 0 : index
      %1088 = vector.load %arg6[%c6_648, %c0_649] : memref<8x4xf32, #tpu.memory_space<vmem>>, vector<1x4xf32>
      %c6_650 = arith.constant 6 : index
      %c0_651 = arith.constant 0 : index
      %c0_652 = arith.constant 0 : index
      %1089 = vector.load %arg3[%c6_650, %c0_651, %c0_652] : memref<8x16x4xf32, #tpu.memory_space<vmem>>, vector<1x16x4xf32>
      %1090 = vector.shape_cast %1089 : vector<1x16x4xf32> to vector<16x4xf32>
      %1091 = vector.broadcast %1088 : vector<1x4xf32> to vector<16x4xf32>
      %1092 = arith.subf %1091, %1090 : vector<16x4xf32>
      %1093 = vector.broadcast %cst_17 : f32 to vector<16x4xf32>
      %1094 = arith.mulf %1092, %1093 : vector<16x4xf32>
      %1095 = arith.subf %1094, %1026 : vector<16x4xf32>
      %1096 = math.exp %1095 : vector<16x4xf32>
      %1097 = arith.addf %1087, %1096 : vector<16x4xf32>
      %c7_653 = arith.constant 7 : index
      %c0_654 = arith.constant 0 : index
      %1098 = vector.load %arg6[%c7_653, %c0_654] : memref<8x4xf32, #tpu.memory_space<vmem>>, vector<1x4xf32>
      %c7_655 = arith.constant 7 : index
      %c0_656 = arith.constant 0 : index
      %c0_657 = arith.constant 0 : index
      %1099 = vector.load %arg3[%c7_655, %c0_656, %c0_657] : memref<8x16x4xf32, #tpu.memory_space<vmem>>, vector<1x16x4xf32>
      %1100 = vector.shape_cast %1099 : vector<1x16x4xf32> to vector<16x4xf32>
      %1101 = vector.broadcast %1098 : vector<1x4xf32> to vector<16x4xf32>
      %1102 = arith.subf %1101, %1100 : vector<16x4xf32>
      %1103 = vector.broadcast %cst_17 : f32 to vector<16x4xf32>
      %1104 = arith.mulf %1102, %1103 : vector<16x4xf32>
      %1105 = arith.subf %1104, %1026 : vector<16x4xf32>
      %1106 = math.exp %1105 : vector<16x4xf32>
      %1107 = arith.addf %1097, %1106 : vector<16x4xf32>
      %c0_658 = arith.constant 0 : index
      %c0_659 = arith.constant 0 : index
      %1108 = vector.load %arg10[%c0_658, %c0_659] : memref<16x4xf32, #tpu.memory_space<vmem>>, vector<16x4xf32>
      %1109 = math.log %1107 : vector<16x4xf32>
      %1110 = arith.addf %1026, %1109 : vector<16x4xf32>
      %1111 = vector.broadcast %cst_18 : f32 to vector<16x4xf32>
      %1112 = arith.mulf %1111, %1110 : vector<16x4xf32>
      %1113 = arith.subf %1108, %1112 : vector<16x4xf32>
      %c0_660 = arith.constant 0 : index
      %c0_661 = arith.constant 0 : index
      %1114 = vector.load %arg7[%c0_660, %c0_661] : memref<16x4xf32, #tpu.memory_space<vmem>>, vector<16x4xf32>
      tpu.vector_store %arg7[%c0_660, %c0_661], %1113 {strides = array<i32>} : memref<16x4xf32, #tpu.memory_space<vmem>>, vector<16x4xf32>,
      %c0_662 = arith.constant 0 : index
      %c0_663 = arith.constant 0 : index
      %1115 = vector.load %arg7[%c0_662, %c0_663] : memref<16x4xf32, #tpu.memory_space<vmem>>, vector<16x4xf32>
      %c0_664 = arith.constant 0 : index
      %c0_665 = arith.constant 0 : index
      %c0_666 = arith.constant 0 : index
      %1116 = vector.load %arg3[%c0_664, %c0_665, %c0_666] : memref<8x16x4xf32, #tpu.memory_space<vmem>>, vector<1x16x4xf32>
      %1117 = vector.shape_cast %1116 : vector<1x16x4xf32> to vector<16x4xf32>
      %1118 = arith.subf %1115, %1117 : vector<16x4xf32>
      %1119 = vector.broadcast %cst_17 : f32 to vector<16x4xf32>
      %1120 = arith.mulf %1118, %1119 : vector<16x4xf32>
      %cst_667 = arith.constant dense<0xFF800000> : vector<4xf32>
      %1121 = vector.multi_reduction <maximumf>, %1120, %cst_667 [0] : vector<16x4xf32> to vector<4xf32>
      %1122 = vector.shape_cast %1121 : vector<4xf32> to vector<1x4xf32>
      %1123 = vector.broadcast %1122 : vector<1x4xf32> to vector<16x4xf32>
      %1124 = arith.subf %1120, %1123 : vector<16x4xf32>
      %1125 = math.exp %1124 : vector<16x4xf32>
      %cst_668 = arith.constant dense<0.000000e+00> : vector<4xf32>
      %1126 = vector.multi_reduction <add>, %1125, %cst_668 [0] : vector<16x4xf32> to vector<4xf32>
      %1127 = vector.shape_cast %1126 : vector<4xf32> to vector<1x4xf32>
      %1128 = math.log %1127 : vector<1x4xf32>
      %1129 = arith.addf %1122, %1128 : vector<1x4xf32>
      %c0_669 = arith.constant 0 : index
      %c0_670 = arith.constant 0 : index
      %1130 = vector.load %arg9[%c0_669, %c0_670] : memref<8x4xf32, #tpu.memory_space<vmem>>, vector<1x4xf32>
      %1131 = vector.broadcast %cst_18 : f32 to vector<1x4xf32>
      %1132 = arith.mulf %1131, %1129 : vector<1x4xf32>
      %1133 = arith.subf %1130, %1132 : vector<1x4xf32>
      %c0_671 = arith.constant 0 : index
      %c0_672 = arith.constant 0 : index
      %1134 = vector.load %arg6[%c0_671, %c0_672] : memref<8x4xf32, #tpu.memory_space<vmem>>, vector<1x4xf32>
      tpu.vector_store %arg6[%c0_671, %c0_672], %1133 {strides = array<i32>} : memref<8x4xf32, #tpu.memory_space<vmem>>, vector<1x4xf32>,
      %c0_673 = arith.constant 0 : index
      %c0_674 = arith.constant 0 : index
      %1135 = vector.load %arg7[%c0_673, %c0_674] : memref<16x4xf32, #tpu.memory_space<vmem>>, vector<16x4xf32>
      %c1_675 = arith.constant 1 : index
      %c0_676 = arith.constant 0 : index
      %c0_677 = arith.constant 0 : index
      %1136 = vector.load %arg3[%c1_675, %c0_676, %c0_677] : memref<8x16x4xf32, #tpu.memory_space<vmem>>, vector<1x16x4xf32>
      %1137 = vector.shape_cast %1136 : vector<1x16x4xf32> to vector<16x4xf32>
      %1138 = arith.subf %1135, %1137 : vector<16x4xf32>
      %1139 = vector.broadcast %cst_17 : f32 to vector<16x4xf32>
      %1140 = arith.mulf %1138, %1139 : vector<16x4xf32>
      %cst_678 = arith.constant dense<0xFF800000> : vector<4xf32>
      %1141 = vector.multi_reduction <maximumf>, %1140, %cst_678 [0] : vector<16x4xf32> to vector<4xf32>
      %1142 = vector.shape_cast %1141 : vector<4xf32> to vector<1x4xf32>
      %1143 = vector.broadcast %1142 : vector<1x4xf32> to vector<16x4xf32>
      %1144 = arith.subf %1140, %1143 : vector<16x4xf32>
      %1145 = math.exp %1144 : vector<16x4xf32>
      %cst_679 = arith.constant dense<0.000000e+00> : vector<4xf32>
      %1146 = vector.multi_reduction <add>, %1145, %cst_679 [0] : vector<16x4xf32> to vector<4xf32>
      %1147 = vector.shape_cast %1146 : vector<4xf32> to vector<1x4xf32>
      %1148 = math.log %1147 : vector<1x4xf32>
      %1149 = arith.addf %1142, %1148 : vector<1x4xf32>
      %c1_680 = arith.constant 1 : index
      %c0_681 = arith.constant 0 : index
      %1150 = vector.load %arg9[%c1_680, %c0_681] : memref<8x4xf32, #tpu.memory_space<vmem>>, vector<1x4xf32>
      %1151 = vector.broadcast %cst_18 : f32 to vector<1x4xf32>
      %1152 = arith.mulf %1151, %1149 : vector<1x4xf32>
      %1153 = arith.subf %1150, %1152 : vector<1x4xf32>
      %c1_682 = arith.constant 1 : index
      %c0_683 = arith.constant 0 : index
      %1154 = vector.load %arg6[%c1_682, %c0_683] : memref<8x4xf32, #tpu.memory_space<vmem>>, vector<1x4xf32>
      tpu.vector_store %arg6[%c1_682, %c0_683], %1153 {strides = array<i32>} : memref<8x4xf32, #tpu.memory_space<vmem>>, vector<1x4xf32>,
      %c0_684 = arith.constant 0 : index
      %c0_685 = arith.constant 0 : index
      %1155 = vector.load %arg7[%c0_684, %c0_685] : memref<16x4xf32, #tpu.memory_space<vmem>>, vector<16x4xf32>
      %c2_686 = arith.constant 2 : index
      %c0_687 = arith.constant 0 : index
      %c0_688 = arith.constant 0 : index
      %1156 = vector.load %arg3[%c2_686, %c0_687, %c0_688] : memref<8x16x4xf32, #tpu.memory_space<vmem>>, vector<1x16x4xf32>
      %1157 = vector.shape_cast %1156 : vector<1x16x4xf32> to vector<16x4xf32>
      %1158 = arith.subf %1155, %1157 : vector<16x4xf32>
      %1159 = vector.broadcast %cst_17 : f32 to vector<16x4xf32>
      %1160 = arith.mulf %1158, %1159 : vector<16x4xf32>
      %cst_689 = arith.constant dense<0xFF800000> : vector<4xf32>
      %1161 = vector.multi_reduction <maximumf>, %1160, %cst_689 [0] : vector<16x4xf32> to vector<4xf32>
      %1162 = vector.shape_cast %1161 : vector<4xf32> to vector<1x4xf32>
      %1163 = vector.broadcast %1162 : vector<1x4xf32> to vector<16x4xf32>
      %1164 = arith.subf %1160, %1163 : vector<16x4xf32>
      %1165 = math.exp %1164 : vector<16x4xf32>
      %cst_690 = arith.constant dense<0.000000e+00> : vector<4xf32>
      %1166 = vector.multi_reduction <add>, %1165, %cst_690 [0] : vector<16x4xf32> to vector<4xf32>
      %1167 = vector.shape_cast %1166 : vector<4xf32> to vector<1x4xf32>
      %1168 = math.log %1167 : vector<1x4xf32>
      %1169 = arith.addf %1162, %1168 : vector<1x4xf32>
      %c2_691 = arith.constant 2 : index
      %c0_692 = arith.constant 0 : index
      %1170 = vector.load %arg9[%c2_691, %c0_692] : memref<8x4xf32, #tpu.memory_space<vmem>>, vector<1x4xf32>
      %1171 = vector.broadcast %cst_18 : f32 to vector<1x4xf32>
      %1172 = arith.mulf %1171, %1169 : vector<1x4xf32>
      %1173 = arith.subf %1170, %1172 : vector<1x4xf32>
      %c2_693 = arith.constant 2 : index
      %c0_694 = arith.constant 0 : index
      %1174 = vector.load %arg6[%c2_693, %c0_694] : memref<8x4xf32, #tpu.memory_space<vmem>>, vector<1x4xf32>
      tpu.vector_store %arg6[%c2_693, %c0_694], %1173 {strides = array<i32>} : memref<8x4xf32, #tpu.memory_space<vmem>>, vector<1x4xf32>,
      %c0_695 = arith.constant 0 : index
      %c0_696 = arith.constant 0 : index
      %1175 = vector.load %arg7[%c0_695, %c0_696] : memref<16x4xf32, #tpu.memory_space<vmem>>, vector<16x4xf32>
      %c3_697 = arith.constant 3 : index
      %c0_698 = arith.constant 0 : index
      %c0_699 = arith.constant 0 : index
      %1176 = vector.load %arg3[%c3_697, %c0_698, %c0_699] : memref<8x16x4xf32, #tpu.memory_space<vmem>>, vector<1x16x4xf32>
      %1177 = vector.shape_cast %1176 : vector<1x16x4xf32> to vector<16x4xf32>
      %1178 = arith.subf %1175, %1177 : vector<16x4xf32>
      %1179 = vector.broadcast %cst_17 : f32 to vector<16x4xf32>
      %1180 = arith.mulf %1178, %1179 : vector<16x4xf32>
      %cst_700 = arith.constant dense<0xFF800000> : vector<4xf32>
      %1181 = vector.multi_reduction <maximumf>, %1180, %cst_700 [0] : vector<16x4xf32> to vector<4xf32>
      %1182 = vector.shape_cast %1181 : vector<4xf32> to vector<1x4xf32>
      %1183 = vector.broadcast %1182 : vector<1x4xf32> to vector<16x4xf32>
      %1184 = arith.subf %1180, %1183 : vector<16x4xf32>
      %1185 = math.exp %1184 : vector<16x4xf32>
      %cst_701 = arith.constant dense<0.000000e+00> : vector<4xf32>
      %1186 = vector.multi_reduction <add>, %1185, %cst_701 [0] : vector<16x4xf32> to vector<4xf32>
      %1187 = vector.shape_cast %1186 : vector<4xf32> to vector<1x4xf32>
      %1188 = math.log %1187 : vector<1x4xf32>
      %1189 = arith.addf %1182, %1188 : vector<1x4xf32>
      %c3_702 = arith.constant 3 : index
      %c0_703 = arith.constant 0 : index
      %1190 = vector.load %arg9[%c3_702, %c0_703] : memref<8x4xf32, #tpu.memory_space<vmem>>, vector<1x4xf32>
      %1191 = vector.broadcast %cst_18 : f32 to vector<1x4xf32>
      %1192 = arith.mulf %1191, %1189 : vector<1x4xf32>
      %1193 = arith.subf %1190, %1192 : vector<1x4xf32>
      %c3_704 = arith.constant 3 : index
      %c0_705 = arith.constant 0 : index
      %1194 = vector.load %arg6[%c3_704, %c0_705] : memref<8x4xf32, #tpu.memory_space<vmem>>, vector<1x4xf32>
      tpu.vector_store %arg6[%c3_704, %c0_705], %1193 {strides = array<i32>} : memref<8x4xf32, #tpu.memory_space<vmem>>, vector<1x4xf32>,
      %c0_706 = arith.constant 0 : index
      %c0_707 = arith.constant 0 : index
      %1195 = vector.load %arg7[%c0_706, %c0_707] : memref<16x4xf32, #tpu.memory_space<vmem>>, vector<16x4xf32>
      %c4_708 = arith.constant 4 : index
      %c0_709 = arith.constant 0 : index
      %c0_710 = arith.constant 0 : index
      %1196 = vector.load %arg3[%c4_708, %c0_709, %c0_710] : memref<8x16x4xf32, #tpu.memory_space<vmem>>, vector<1x16x4xf32>
      %1197 = vector.shape_cast %1196 : vector<1x16x4xf32> to vector<16x4xf32>
      %1198 = arith.subf %1195, %1197 : vector<16x4xf32>
      %1199 = vector.broadcast %cst_17 : f32 to vector<16x4xf32>
      %1200 = arith.mulf %1198, %1199 : vector<16x4xf32>
      %cst_711 = arith.constant dense<0xFF800000> : vector<4xf32>
      %1201 = vector.multi_reduction <maximumf>, %1200, %cst_711 [0] : vector<16x4xf32> to vector<4xf32>
      %1202 = vector.shape_cast %1201 : vector<4xf32> to vector<1x4xf32>
      %1203 = vector.broadcast %1202 : vector<1x4xf32> to vector<16x4xf32>
      %1204 = arith.subf %1200, %1203 : vector<16x4xf32>
      %1205 = math.exp %1204 : vector<16x4xf32>
      %cst_712 = arith.constant dense<0.000000e+00> : vector<4xf32>
      %1206 = vector.multi_reduction <add>, %1205, %cst_712 [0] : vector<16x4xf32> to vector<4xf32>
      %1207 = vector.shape_cast %1206 : vector<4xf32> to vector<1x4xf32>
      %1208 = math.log %1207 : vector<1x4xf32>
      %1209 = arith.addf %1202, %1208 : vector<1x4xf32>
      %c4_713 = arith.constant 4 : index
      %c0_714 = arith.constant 0 : index
      %1210 = vector.load %arg9[%c4_713, %c0_714] : memref<8x4xf32, #tpu.memory_space<vmem>>, vector<1x4xf32>
      %1211 = vector.broadcast %cst_18 : f32 to vector<1x4xf32>
      %1212 = arith.mulf %1211, %1209 : vector<1x4xf32>
      %1213 = arith.subf %1210, %1212 : vector<1x4xf32>
      %c4_715 = arith.constant 4 : index
      %c0_716 = arith.constant 0 : index
      %1214 = vector.load %arg6[%c4_715, %c0_716] : memref<8x4xf32, #tpu.memory_space<vmem>>, vector<1x4xf32>
      tpu.vector_store %arg6[%c4_715, %c0_716], %1213 {strides = array<i32>} : memref<8x4xf32, #tpu.memory_space<vmem>>, vector<1x4xf32>,
      %c0_717 = arith.constant 0 : index
      %c0_718 = arith.constant 0 : index
      %1215 = vector.load %arg7[%c0_717, %c0_718] : memref<16x4xf32, #tpu.memory_space<vmem>>, vector<16x4xf32>
      %c5_719 = arith.constant 5 : index
      %c0_720 = arith.constant 0 : index
      %c0_721 = arith.constant 0 : index
      %1216 = vector.load %arg3[%c5_719, %c0_720, %c0_721] : memref<8x16x4xf32, #tpu.memory_space<vmem>>, vector<1x16x4xf32>
      %1217 = vector.shape_cast %1216 : vector<1x16x4xf32> to vector<16x4xf32>
      %1218 = arith.subf %1215, %1217 : vector<16x4xf32>
      %1219 = vector.broadcast %cst_17 : f32 to vector<16x4xf32>
      %1220 = arith.mulf %1218, %1219 : vector<16x4xf32>
      %cst_722 = arith.constant dense<0xFF800000> : vector<4xf32>
      %1221 = vector.multi_reduction <maximumf>, %1220, %cst_722 [0] : vector<16x4xf32> to vector<4xf32>
      %1222 = vector.shape_cast %1221 : vector<4xf32> to vector<1x4xf32>
      %1223 = vector.broadcast %1222 : vector<1x4xf32> to vector<16x4xf32>
      %1224 = arith.subf %1220, %1223 : vector<16x4xf32>
      %1225 = math.exp %1224 : vector<16x4xf32>
      %cst_723 = arith.constant dense<0.000000e+00> : vector<4xf32>
      %1226 = vector.multi_reduction <add>, %1225, %cst_723 [0] : vector<16x4xf32> to vector<4xf32>
      %1227 = vector.shape_cast %1226 : vector<4xf32> to vector<1x4xf32>
      %1228 = math.log %1227 : vector<1x4xf32>
      %1229 = arith.addf %1222, %1228 : vector<1x4xf32>
      %c5_724 = arith.constant 5 : index
      %c0_725 = arith.constant 0 : index
      %1230 = vector.load %arg9[%c5_724, %c0_725] : memref<8x4xf32, #tpu.memory_space<vmem>>, vector<1x4xf32>
      %1231 = vector.broadcast %cst_18 : f32 to vector<1x4xf32>
      %1232 = arith.mulf %1231, %1229 : vector<1x4xf32>
      %1233 = arith.subf %1230, %1232 : vector<1x4xf32>
      %c5_726 = arith.constant 5 : index
      %c0_727 = arith.constant 0 : index
      %1234 = vector.load %arg6[%c5_726, %c0_727] : memref<8x4xf32, #tpu.memory_space<vmem>>, vector<1x4xf32>
      tpu.vector_store %arg6[%c5_726, %c0_727], %1233 {strides = array<i32>} : memref<8x4xf32, #tpu.memory_space<vmem>>, vector<1x4xf32>,
      %c0_728 = arith.constant 0 : index
      %c0_729 = arith.constant 0 : index
      %1235 = vector.load %arg7[%c0_728, %c0_729] : memref<16x4xf32, #tpu.memory_space<vmem>>, vector<16x4xf32>
      %c6_730 = arith.constant 6 : index
      %c0_731 = arith.constant 0 : index
      %c0_732 = arith.constant 0 : index
      %1236 = vector.load %arg3[%c6_730, %c0_731, %c0_732] : memref<8x16x4xf32, #tpu.memory_space<vmem>>, vector<1x16x4xf32>
      %1237 = vector.shape_cast %1236 : vector<1x16x4xf32> to vector<16x4xf32>
      %1238 = arith.subf %1235, %1237 : vector<16x4xf32>
      %1239 = vector.broadcast %cst_17 : f32 to vector<16x4xf32>
      %1240 = arith.mulf %1238, %1239 : vector<16x4xf32>
      %cst_733 = arith.constant dense<0xFF800000> : vector<4xf32>
      %1241 = vector.multi_reduction <maximumf>, %1240, %cst_733 [0] : vector<16x4xf32> to vector<4xf32>
      %1242 = vector.shape_cast %1241 : vector<4xf32> to vector<1x4xf32>
      %1243 = vector.broadcast %1242 : vector<1x4xf32> to vector<16x4xf32>
      %1244 = arith.subf %1240, %1243 : vector<16x4xf32>
      %1245 = math.exp %1244 : vector<16x4xf32>
      %cst_734 = arith.constant dense<0.000000e+00> : vector<4xf32>
      %1246 = vector.multi_reduction <add>, %1245, %cst_734 [0] : vector<16x4xf32> to vector<4xf32>
      %1247 = vector.shape_cast %1246 : vector<4xf32> to vector<1x4xf32>
      %1248 = math.log %1247 : vector<1x4xf32>
      %1249 = arith.addf %1242, %1248 : vector<1x4xf32>
      %c6_735 = arith.constant 6 : index
      %c0_736 = arith.constant 0 : index
      %1250 = vector.load %arg9[%c6_735, %c0_736] : memref<8x4xf32, #tpu.memory_space<vmem>>, vector<1x4xf32>
      %1251 = vector.broadcast %cst_18 : f32 to vector<1x4xf32>
      %1252 = arith.mulf %1251, %1249 : vector<1x4xf32>
      %1253 = arith.subf %1250, %1252 : vector<1x4xf32>
      %c6_737 = arith.constant 6 : index
      %c0_738 = arith.constant 0 : index
      %1254 = vector.load %arg6[%c6_737, %c0_738] : memref<8x4xf32, #tpu.memory_space<vmem>>, vector<1x4xf32>
      tpu.vector_store %arg6[%c6_737, %c0_738], %1253 {strides = array<i32>} : memref<8x4xf32, #tpu.memory_space<vmem>>, vector<1x4xf32>,
      %c0_739 = arith.constant 0 : index
      %c0_740 = arith.constant 0 : index
      %1255 = vector.load %arg7[%c0_739, %c0_740] : memref<16x4xf32, #tpu.memory_space<vmem>>, vector<16x4xf32>
      %c7_741 = arith.constant 7 : index
      %c0_742 = arith.constant 0 : index
      %c0_743 = arith.constant 0 : index
      %1256 = vector.load %arg3[%c7_741, %c0_742, %c0_743] : memref<8x16x4xf32, #tpu.memory_space<vmem>>, vector<1x16x4xf32>
      %1257 = vector.shape_cast %1256 : vector<1x16x4xf32> to vector<16x4xf32>
      %1258 = arith.subf %1255, %1257 : vector<16x4xf32>
      %1259 = vector.broadcast %cst_17 : f32 to vector<16x4xf32>
      %1260 = arith.mulf %1258, %1259 : vector<16x4xf32>
      %cst_744 = arith.constant dense<0xFF800000> : vector<4xf32>
      %1261 = vector.multi_reduction <maximumf>, %1260, %cst_744 [0] : vector<16x4xf32> to vector<4xf32>
      %1262 = vector.shape_cast %1261 : vector<4xf32> to vector<1x4xf32>
      %1263 = vector.broadcast %1262 : vector<1x4xf32> to vector<16x4xf32>
      %1264 = arith.subf %1260, %1263 : vector<16x4xf32>
      %1265 = math.exp %1264 : vector<16x4xf32>
      %cst_745 = arith.constant dense<0.000000e+00> : vector<4xf32>
      %1266 = vector.multi_reduction <add>, %1265, %cst_745 [0] : vector<16x4xf32> to vector<4xf32>
      %1267 = vector.shape_cast %1266 : vector<4xf32> to vector<1x4xf32>
      %1268 = math.log %1267 : vector<1x4xf32>
      %1269 = arith.addf %1262, %1268 : vector<1x4xf32>
      %c7_746 = arith.constant 7 : index
      %c0_747 = arith.constant 0 : index
      %1270 = vector.load %arg9[%c7_746, %c0_747] : memref<8x4xf32, #tpu.memory_space<vmem>>, vector<1x4xf32>
      %1271 = vector.broadcast %cst_18 : f32 to vector<1x4xf32>
      %1272 = arith.mulf %1271, %1269 : vector<1x4xf32>
      %1273 = arith.subf %1270, %1272 : vector<1x4xf32>
      %c7_748 = arith.constant 7 : index
      %c0_749 = arith.constant 0 : index
      %1274 = vector.load %arg6[%c7_748, %c0_749] : memref<8x4xf32, #tpu.memory_space<vmem>>, vector<1x4xf32>
      tpu.vector_store %arg6[%c7_748, %c0_749], %1273 {strides = array<i32>} : memref<8x4xf32, #tpu.memory_space<vmem>>, vector<1x4xf32>,
      %cst_750 = arith.constant 0xFF800000 : f32
      %1275 = vector.broadcast %cst_750 : f32 to vector<16x4xf32>
      %c0_751 = arith.constant 0 : index
      %c0_752 = arith.constant 0 : index
      %1276 = vector.load %arg6[%c0_751, %c0_752] : memref<8x4xf32, #tpu.memory_space<vmem>>, vector<1x4xf32>
      %c0_753 = arith.constant 0 : index
      %c0_754 = arith.constant 0 : index
      %c0_755 = arith.constant 0 : index
      %1277 = vector.load %arg3[%c0_753, %c0_754, %c0_755] : memref<8x16x4xf32, #tpu.memory_space<vmem>>, vector<1x16x4xf32>
      %1278 = vector.shape_cast %1277 : vector<1x16x4xf32> to vector<16x4xf32>
      %1279 = vector.broadcast %1276 : vector<1x4xf32> to vector<16x4xf32>
      %1280 = arith.subf %1279, %1278 : vector<16x4xf32>
      %1281 = vector.broadcast %cst_17 : f32 to vector<16x4xf32>
      %1282 = arith.mulf %1280, %1281 : vector<16x4xf32>
      %1283 = arith.maximumf %1275, %1282 : vector<16x4xf32>
      %c1_756 = arith.constant 1 : index
      %c0_757 = arith.constant 0 : index
      %1284 = vector.load %arg6[%c1_756, %c0_757] : memref<8x4xf32, #tpu.memory_space<vmem>>, vector<1x4xf32>
      %c1_758 = arith.constant 1 : index
      %c0_759 = arith.constant 0 : index
      %c0_760 = arith.constant 0 : index
      %1285 = vector.load %arg3[%c1_758, %c0_759, %c0_760] : memref<8x16x4xf32, #tpu.memory_space<vmem>>, vector<1x16x4xf32>
      %1286 = vector.shape_cast %1285 : vector<1x16x4xf32> to vector<16x4xf32>
      %1287 = vector.broadcast %1284 : vector<1x4xf32> to vector<16x4xf32>
      %1288 = arith.subf %1287, %1286 : vector<16x4xf32>
      %1289 = vector.broadcast %cst_17 : f32 to vector<16x4xf32>
      %1290 = arith.mulf %1288, %1289 : vector<16x4xf32>
      %1291 = arith.maximumf %1283, %1290 : vector<16x4xf32>
      %c2_761 = arith.constant 2 : index
      %c0_762 = arith.constant 0 : index
      %1292 = vector.load %arg6[%c2_761, %c0_762] : memref<8x4xf32, #tpu.memory_space<vmem>>, vector<1x4xf32>
      %c2_763 = arith.constant 2 : index
      %c0_764 = arith.constant 0 : index
      %c0_765 = arith.constant 0 : index
      %1293 = vector.load %arg3[%c2_763, %c0_764, %c0_765] : memref<8x16x4xf32, #tpu.memory_space<vmem>>, vector<1x16x4xf32>
      %1294 = vector.shape_cast %1293 : vector<1x16x4xf32> to vector<16x4xf32>
      %1295 = vector.broadcast %1292 : vector<1x4xf32> to vector<16x4xf32>
      %1296 = arith.subf %1295, %1294 : vector<16x4xf32>
      %1297 = vector.broadcast %cst_17 : f32 to vector<16x4xf32>
      %1298 = arith.mulf %1296, %1297 : vector<16x4xf32>
      %1299 = arith.maximumf %1291, %1298 : vector<16x4xf32>
      %c3_766 = arith.constant 3 : index
      %c0_767 = arith.constant 0 : index
      %1300 = vector.load %arg6[%c3_766, %c0_767] : memref<8x4xf32, #tpu.memory_space<vmem>>, vector<1x4xf32>
      %c3_768 = arith.constant 3 : index
      %c0_769 = arith.constant 0 : index
      %c0_770 = arith.constant 0 : index
      %1301 = vector.load %arg3[%c3_768, %c0_769, %c0_770] : memref<8x16x4xf32, #tpu.memory_space<vmem>>, vector<1x16x4xf32>
      %1302 = vector.shape_cast %1301 : vector<1x16x4xf32> to vector<16x4xf32>
      %1303 = vector.broadcast %1300 : vector<1x4xf32> to vector<16x4xf32>
      %1304 = arith.subf %1303, %1302 : vector<16x4xf32>
      %1305 = vector.broadcast %cst_17 : f32 to vector<16x4xf32>
      %1306 = arith.mulf %1304, %1305 : vector<16x4xf32>
      %1307 = arith.maximumf %1299, %1306 : vector<16x4xf32>
      %c4_771 = arith.constant 4 : index
      %c0_772 = arith.constant 0 : index
      %1308 = vector.load %arg6[%c4_771, %c0_772] : memref<8x4xf32, #tpu.memory_space<vmem>>, vector<1x4xf32>
      %c4_773 = arith.constant 4 : index
      %c0_774 = arith.constant 0 : index
      %c0_775 = arith.constant 0 : index
      %1309 = vector.load %arg3[%c4_773, %c0_774, %c0_775] : memref<8x16x4xf32, #tpu.memory_space<vmem>>, vector<1x16x4xf32>
      %1310 = vector.shape_cast %1309 : vector<1x16x4xf32> to vector<16x4xf32>
      %1311 = vector.broadcast %1308 : vector<1x4xf32> to vector<16x4xf32>
      %1312 = arith.subf %1311, %1310 : vector<16x4xf32>
      %1313 = vector.broadcast %cst_17 : f32 to vector<16x4xf32>
      %1314 = arith.mulf %1312, %1313 : vector<16x4xf32>
      %1315 = arith.maximumf %1307, %1314 : vector<16x4xf32>
      %c5_776 = arith.constant 5 : index
      %c0_777 = arith.constant 0 : index
      %1316 = vector.load %arg6[%c5_776, %c0_777] : memref<8x4xf32, #tpu.memory_space<vmem>>, vector<1x4xf32>
      %c5_778 = arith.constant 5 : index
      %c0_779 = arith.constant 0 : index
      %c0_780 = arith.constant 0 : index
      %1317 = vector.load %arg3[%c5_778, %c0_779, %c0_780] : memref<8x16x4xf32, #tpu.memory_space<vmem>>, vector<1x16x4xf32>
      %1318 = vector.shape_cast %1317 : vector<1x16x4xf32> to vector<16x4xf32>
      %1319 = vector.broadcast %1316 : vector<1x4xf32> to vector<16x4xf32>
      %1320 = arith.subf %1319, %1318 : vector<16x4xf32>
      %1321 = vector.broadcast %cst_17 : f32 to vector<16x4xf32>
      %1322 = arith.mulf %1320, %1321 : vector<16x4xf32>
      %1323 = arith.maximumf %1315, %1322 : vector<16x4xf32>
      %c6_781 = arith.constant 6 : index
      %c0_782 = arith.constant 0 : index
      %1324 = vector.load %arg6[%c6_781, %c0_782] : memref<8x4xf32, #tpu.memory_space<vmem>>, vector<1x4xf32>
      %c6_783 = arith.constant 6 : index
      %c0_784 = arith.constant 0 : index
      %c0_785 = arith.constant 0 : index
      %1325 = vector.load %arg3[%c6_783, %c0_784, %c0_785] : memref<8x16x4xf32, #tpu.memory_space<vmem>>, vector<1x16x4xf32>
      %1326 = vector.shape_cast %1325 : vector<1x16x4xf32> to vector<16x4xf32>
      %1327 = vector.broadcast %1324 : vector<1x4xf32> to vector<16x4xf32>
      %1328 = arith.subf %1327, %1326 : vector<16x4xf32>
      %1329 = vector.broadcast %cst_17 : f32 to vector<16x4xf32>
      %1330 = arith.mulf %1328, %1329 : vector<16x4xf32>
      %1331 = arith.maximumf %1323, %1330 : vector<16x4xf32>
      %c7_786 = arith.constant 7 : index
      %c0_787 = arith.constant 0 : index
      %1332 = vector.load %arg6[%c7_786, %c0_787] : memref<8x4xf32, #tpu.memory_space<vmem>>, vector<1x4xf32>
      %c7_788 = arith.constant 7 : index
      %c0_789 = arith.constant 0 : index
      %c0_790 = arith.constant 0 : index
      %1333 = vector.load %arg3[%c7_788, %c0_789, %c0_790] : memref<8x16x4xf32, #tpu.memory_space<vmem>>, vector<1x16x4xf32>
      %1334 = vector.shape_cast %1333 : vector<1x16x4xf32> to vector<16x4xf32>
      %1335 = vector.broadcast %1332 : vector<1x4xf32> to vector<16x4xf32>
      %1336 = arith.subf %1335, %1334 : vector<16x4xf32>
      %1337 = vector.broadcast %cst_17 : f32 to vector<16x4xf32>
      %1338 = arith.mulf %1336, %1337 : vector<16x4xf32>
      %1339 = arith.maximumf %1331, %1338 : vector<16x4xf32>
      %cst_791 = arith.constant 0.000000e+00 : f32
      %1340 = vector.broadcast %cst_791 : f32 to vector<16x4xf32>
      %c0_792 = arith.constant 0 : index
      %c0_793 = arith.constant 0 : index
      %1341 = vector.load %arg6[%c0_792, %c0_793] : memref<8x4xf32, #tpu.memory_space<vmem>>, vector<1x4xf32>
      %c0_794 = arith.constant 0 : index
      %c0_795 = arith.constant 0 : index
      %c0_796 = arith.constant 0 : index
      %1342 = vector.load %arg3[%c0_794, %c0_795, %c0_796] : memref<8x16x4xf32, #tpu.memory_space<vmem>>, vector<1x16x4xf32>
      %1343 = vector.shape_cast %1342 : vector<1x16x4xf32> to vector<16x4xf32>
      %1344 = vector.broadcast %1341 : vector<1x4xf32> to vector<16x4xf32>
      %1345 = arith.subf %1344, %1343 : vector<16x4xf32>
      %1346 = vector.broadcast %cst_17 : f32 to vector<16x4xf32>
      %1347 = arith.mulf %1345, %1346 : vector<16x4xf32>
      %1348 = arith.subf %1347, %1339 : vector<16x4xf32>
      %1349 = math.exp %1348 : vector<16x4xf32>
      %1350 = arith.addf %1340, %1349 : vector<16x4xf32>
      %c1_797 = arith.constant 1 : index
      %c0_798 = arith.constant 0 : index
      %1351 = vector.load %arg6[%c1_797, %c0_798] : memref<8x4xf32, #tpu.memory_space<vmem>>, vector<1x4xf32>
      %c1_799 = arith.constant 1 : index
      %c0_800 = arith.constant 0 : index
      %c0_801 = arith.constant 0 : index
      %1352 = vector.load %arg3[%c1_799, %c0_800, %c0_801] : memref<8x16x4xf32, #tpu.memory_space<vmem>>, vector<1x16x4xf32>
      %1353 = vector.shape_cast %1352 : vector<1x16x4xf32> to vector<16x4xf32>
      %1354 = vector.broadcast %1351 : vector<1x4xf32> to vector<16x4xf32>
      %1355 = arith.subf %1354, %1353 : vector<16x4xf32>
      %1356 = vector.broadcast %cst_17 : f32 to vector<16x4xf32>
      %1357 = arith.mulf %1355, %1356 : vector<16x4xf32>
      %1358 = arith.subf %1357, %1339 : vector<16x4xf32>
      %1359 = math.exp %1358 : vector<16x4xf32>
      %1360 = arith.addf %1350, %1359 : vector<16x4xf32>
      %c2_802 = arith.constant 2 : index
      %c0_803 = arith.constant 0 : index
      %1361 = vector.load %arg6[%c2_802, %c0_803] : memref<8x4xf32, #tpu.memory_space<vmem>>, vector<1x4xf32>
      %c2_804 = arith.constant 2 : index
      %c0_805 = arith.constant 0 : index
      %c0_806 = arith.constant 0 : index
      %1362 = vector.load %arg3[%c2_804, %c0_805, %c0_806] : memref<8x16x4xf32, #tpu.memory_space<vmem>>, vector<1x16x4xf32>
      %1363 = vector.shape_cast %1362 : vector<1x16x4xf32> to vector<16x4xf32>
      %1364 = vector.broadcast %1361 : vector<1x4xf32> to vector<16x4xf32>
      %1365 = arith.subf %1364, %1363 : vector<16x4xf32>
      %1366 = vector.broadcast %cst_17 : f32 to vector<16x4xf32>
      %1367 = arith.mulf %1365, %1366 : vector<16x4xf32>
      %1368 = arith.subf %1367, %1339 : vector<16x4xf32>
      %1369 = math.exp %1368 : vector<16x4xf32>
      %1370 = arith.addf %1360, %1369 : vector<16x4xf32>
      %c3_807 = arith.constant 3 : index
      %c0_808 = arith.constant 0 : index
      %1371 = vector.load %arg6[%c3_807, %c0_808] : memref<8x4xf32, #tpu.memory_space<vmem>>, vector<1x4xf32>
      %c3_809 = arith.constant 3 : index
      %c0_810 = arith.constant 0 : index
      %c0_811 = arith.constant 0 : index
      %1372 = vector.load %arg3[%c3_809, %c0_810, %c0_811] : memref<8x16x4xf32, #tpu.memory_space<vmem>>, vector<1x16x4xf32>
      %1373 = vector.shape_cast %1372 : vector<1x16x4xf32> to vector<16x4xf32>
      %1374 = vector.broadcast %1371 : vector<1x4xf32> to vector<16x4xf32>
      %1375 = arith.subf %1374, %1373 : vector<16x4xf32>
      %1376 = vector.broadcast %cst_17 : f32 to vector<16x4xf32>
      %1377 = arith.mulf %1375, %1376 : vector<16x4xf32>
      %1378 = arith.subf %1377, %1339 : vector<16x4xf32>
      %1379 = math.exp %1378 : vector<16x4xf32>
      %1380 = arith.addf %1370, %1379 : vector<16x4xf32>
      %c4_812 = arith.constant 4 : index
      %c0_813 = arith.constant 0 : index
      %1381 = vector.load %arg6[%c4_812, %c0_813] : memref<8x4xf32, #tpu.memory_space<vmem>>, vector<1x4xf32>
      %c4_814 = arith.constant 4 : index
      %c0_815 = arith.constant 0 : index
      %c0_816 = arith.constant 0 : index
      %1382 = vector.load %arg3[%c4_814, %c0_815, %c0_816] : memref<8x16x4xf32, #tpu.memory_space<vmem>>, vector<1x16x4xf32>
      %1383 = vector.shape_cast %1382 : vector<1x16x4xf32> to vector<16x4xf32>
      %1384 = vector.broadcast %1381 : vector<1x4xf32> to vector<16x4xf32>
      %1385 = arith.subf %1384, %1383 : vector<16x4xf32>
      %1386 = vector.broadcast %cst_17 : f32 to vector<16x4xf32>
      %1387 = arith.mulf %1385, %1386 : vector<16x4xf32>
      %1388 = arith.subf %1387, %1339 : vector<16x4xf32>
      %1389 = math.exp %1388 : vector<16x4xf32>
      %1390 = arith.addf %1380, %1389 : vector<16x4xf32>
      %c5_817 = arith.constant 5 : index
      %c0_818 = arith.constant 0 : index
      %1391 = vector.load %arg6[%c5_817, %c0_818] : memref<8x4xf32, #tpu.memory_space<vmem>>, vector<1x4xf32>
      %c5_819 = arith.constant 5 : index
      %c0_820 = arith.constant 0 : index
      %c0_821 = arith.constant 0 : index
      %1392 = vector.load %arg3[%c5_819, %c0_820, %c0_821] : memref<8x16x4xf32, #tpu.memory_space<vmem>>, vector<1x16x4xf32>
      %1393 = vector.shape_cast %1392 : vector<1x16x4xf32> to vector<16x4xf32>
      %1394 = vector.broadcast %1391 : vector<1x4xf32> to vector<16x4xf32>
      %1395 = arith.subf %1394, %1393 : vector<16x4xf32>
      %1396 = vector.broadcast %cst_17 : f32 to vector<16x4xf32>
      %1397 = arith.mulf %1395, %1396 : vector<16x4xf32>
      %1398 = arith.subf %1397, %1339 : vector<16x4xf32>
      %1399 = math.exp %1398 : vector<16x4xf32>
      %1400 = arith.addf %1390, %1399 : vector<16x4xf32>
      %c6_822 = arith.constant 6 : index
      %c0_823 = arith.constant 0 : index
      %1401 = vector.load %arg6[%c6_822, %c0_823] : memref<8x4xf32, #tpu.memory_space<vmem>>, vector<1x4xf32>
      %c6_824 = arith.constant 6 : index
      %c0_825 = arith.constant 0 : index
      %c0_826 = arith.constant 0 : index
      %1402 = vector.load %arg3[%c6_824, %c0_825, %c0_826] : memref<8x16x4xf32, #tpu.memory_space<vmem>>, vector<1x16x4xf32>
      %1403 = vector.shape_cast %1402 : vector<1x16x4xf32> to vector<16x4xf32>
      %1404 = vector.broadcast %1401 : vector<1x4xf32> to vector<16x4xf32>
      %1405 = arith.subf %1404, %1403 : vector<16x4xf32>
      %1406 = vector.broadcast %cst_17 : f32 to vector<16x4xf32>
      %1407 = arith.mulf %1405, %1406 : vector<16x4xf32>
      %1408 = arith.subf %1407, %1339 : vector<16x4xf32>
      %1409 = math.exp %1408 : vector<16x4xf32>
      %1410 = arith.addf %1400, %1409 : vector<16x4xf32>
      %c7_827 = arith.constant 7 : index
      %c0_828 = arith.constant 0 : index
      %1411 = vector.load %arg6[%c7_827, %c0_828] : memref<8x4xf32, #tpu.memory_space<vmem>>, vector<1x4xf32>
      %c7_829 = arith.constant 7 : index
      %c0_830 = arith.constant 0 : index
      %c0_831 = arith.constant 0 : index
      %1412 = vector.load %arg3[%c7_829, %c0_830, %c0_831] : memref<8x16x4xf32, #tpu.memory_space<vmem>>, vector<1x16x4xf32>
      %1413 = vector.shape_cast %1412 : vector<1x16x4xf32> to vector<16x4xf32>
      %1414 = vector.broadcast %1411 : vector<1x4xf32> to vector<16x4xf32>
      %1415 = arith.subf %1414, %1413 : vector<16x4xf32>
      %1416 = vector.broadcast %cst_17 : f32 to vector<16x4xf32>
      %1417 = arith.mulf %1415, %1416 : vector<16x4xf32>
      %1418 = arith.subf %1417, %1339 : vector<16x4xf32>
      %1419 = math.exp %1418 : vector<16x4xf32>
      %1420 = arith.addf %1410, %1419 : vector<16x4xf32>
      %c0_832 = arith.constant 0 : index
      %c0_833 = arith.constant 0 : index
      %1421 = vector.load %arg10[%c0_832, %c0_833] : memref<16x4xf32, #tpu.memory_space<vmem>>, vector<16x4xf32>
      %1422 = math.log %1420 : vector<16x4xf32>
      %1423 = arith.addf %1339, %1422 : vector<16x4xf32>
      %1424 = vector.broadcast %cst_18 : f32 to vector<16x4xf32>
      %1425 = arith.mulf %1424, %1423 : vector<16x4xf32>
      %1426 = arith.subf %1421, %1425 : vector<16x4xf32>
      %c0_834 = arith.constant 0 : index
      %c0_835 = arith.constant 0 : index
      %1427 = vector.load %arg7[%c0_834, %c0_835] : memref<16x4xf32, #tpu.memory_space<vmem>>, vector<16x4xf32>
      tpu.vector_store %arg7[%c0_834, %c0_835], %1426 {strides = array<i32>} : memref<16x4xf32, #tpu.memory_space<vmem>>, vector<16x4xf32>,
      %c0_836 = arith.constant 0 : index
      %c0_837 = arith.constant 0 : index
      %1428 = vector.load %arg6[%c0_836, %c0_837] : memref<8x4xf32, #tpu.memory_space<vmem>>, vector<8x4xf32>
      %c0_838 = arith.constant 0 : index
      %c0_839 = arith.constant 0 : index
      %1429 = vector.load %arg8[%c0_838, %c0_839] : memref<8x4xf32, #tpu.memory_space<vmem>>, vector<8x4xf32>
      %1430 = arith.subf %1428, %1429 : vector<8x4xf32>
      %1431 = math.absf %1430 : vector<8x4xf32>
      %1432 = vector.shape_cast %1431 : vector<8x4xf32> to vector<1x8x4xf32>
      %cst_840 = arith.constant dense<0.000000e+00> : vector<1xf32>
      %1433 = vector.multi_reduction <add>, %1432, %cst_840 [1, 2] : vector<1x8x4xf32> to vector<1xf32>
      %1434 = vector.shape_cast %1433 : vector<1xf32> to vector<1x1x1xf32>
      %1435 = vector.extract %1434[0, 0, 0] : f32 from vector<1x1x1xf32>
      scf.yield %173, %1435 : i32, f32
    }
    %cst_20 = arith.constant 0.000000e+00 : f32
    %19 = vector.broadcast %cst_20 : f32 to vector<1x4xf32>
    %c0_21 = arith.constant 0 : index
    %c0_22 = arith.constant 0 : index
    %20 = vector.load %arg6[%c0_21, %c0_22] : memref<8x4xf32, #tpu.memory_space<vmem>>, vector<1x4xf32>
    %c0_23 = arith.constant 0 : index
    %c0_24 = arith.constant 0 : index
    %21 = vector.load %arg7[%c0_23, %c0_24] : memref<16x4xf32, #tpu.memory_space<vmem>>, vector<16x4xf32>
    %22 = vector.broadcast %20 : vector<1x4xf32> to vector<16x4xf32>
    %23 = arith.addf %22, %21 : vector<16x4xf32>
    %c0_25 = arith.constant 0 : index
    %c0_26 = arith.constant 0 : index
    %c0_27 = arith.constant 0 : index
    %24 = vector.load %arg3[%c0_25, %c0_26, %c0_27] : memref<8x16x4xf32, #tpu.memory_space<vmem>>, vector<1x16x4xf32>
    %25 = vector.shape_cast %24 : vector<1x16x4xf32> to vector<16x4xf32>
    %26 = arith.subf %23, %25 : vector<16x4xf32>
    %cst_28 = arith.constant 1.000000e+01 : f32
    %27 = vector.broadcast %cst_28 : f32 to vector<16x4xf32>
    %28 = arith.mulf %26, %27 : vector<16x4xf32>
    %29 = math.exp %28 : vector<16x4xf32>
    %c0_29 = arith.constant 0 : index
    %c0_30 = arith.constant 0 : index
    %c0_31 = arith.constant 0 : index
    %30 = vector.load %arg5[%c0_29, %c0_30, %c0_31] : memref<8x16x4xf32, #tpu.memory_space<vmem>>, vector<1x16x4xf32>
    %31 = vector.shape_cast %30 : vector<1x16x4xf32> to vector<16x4xf32>
    %32 = vector.shape_cast %29 : vector<16x4xf32> to vector<1x16x4xf32>
    tpu.vector_store %arg5[%c0_29, %c0_30, %c0_31], %32 {strides = array<i32>} : memref<8x16x4xf32, #tpu.memory_space<vmem>>, vector<1x16x4xf32>,
    %c0_32 = arith.constant 0 : index
    %c0_33 = arith.constant 0 : index
    %c0_34 = arith.constant 0 : index
    %33 = vector.load %arg3[%c0_32, %c0_33, %c0_34] : memref<8x16x4xf32, #tpu.memory_space<vmem>>, vector<1x16x4xf32>
    %34 = vector.shape_cast %33 : vector<1x16x4xf32> to vector<16x4xf32>
    %35 = arith.mulf %29, %34 : vector<16x4xf32>
    %cst_35 = arith.constant dense<0.000000e+00> : vector<4xf32>
    %36 = vector.multi_reduction <add>, %35, %cst_35 [0] : vector<16x4xf32> to vector<4xf32>
    %37 = vector.shape_cast %36 : vector<4xf32> to vector<1x4xf32>
    %38 = arith.addf %19, %37 : vector<1x4xf32>
    %c1 = arith.constant 1 : index
    %c0_36 = arith.constant 0 : index
    %39 = vector.load %arg6[%c1, %c0_36] : memref<8x4xf32, #tpu.memory_space<vmem>>, vector<1x4xf32>
    %c0_37 = arith.constant 0 : index
    %c0_38 = arith.constant 0 : index
    %40 = vector.load %arg7[%c0_37, %c0_38] : memref<16x4xf32, #tpu.memory_space<vmem>>, vector<16x4xf32>
    %41 = vector.broadcast %39 : vector<1x4xf32> to vector<16x4xf32>
    %42 = arith.addf %41, %40 : vector<16x4xf32>
    %c1_39 = arith.constant 1 : index
    %c0_40 = arith.constant 0 : index
    %c0_41 = arith.constant 0 : index
    %43 = vector.load %arg3[%c1_39, %c0_40, %c0_41] : memref<8x16x4xf32, #tpu.memory_space<vmem>>, vector<1x16x4xf32>
    %44 = vector.shape_cast %43 : vector<1x16x4xf32> to vector<16x4xf32>
    %45 = arith.subf %42, %44 : vector<16x4xf32>
    %cst_42 = arith.constant 1.000000e+01 : f32
    %46 = vector.broadcast %cst_42 : f32 to vector<16x4xf32>
    %47 = arith.mulf %45, %46 : vector<16x4xf32>
    %48 = math.exp %47 : vector<16x4xf32>
    %c1_43 = arith.constant 1 : index
    %c0_44 = arith.constant 0 : index
    %c0_45 = arith.constant 0 : index
    %49 = vector.load %arg5[%c1_43, %c0_44, %c0_45] : memref<8x16x4xf32, #tpu.memory_space<vmem>>, vector<1x16x4xf32>
    %50 = vector.shape_cast %49 : vector<1x16x4xf32> to vector<16x4xf32>
    %51 = vector.shape_cast %48 : vector<16x4xf32> to vector<1x16x4xf32>
    tpu.vector_store %arg5[%c1_43, %c0_44, %c0_45], %51 {strides = array<i32>} : memref<8x16x4xf32, #tpu.memory_space<vmem>>, vector<1x16x4xf32>,
    %c1_46 = arith.constant 1 : index
    %c0_47 = arith.constant 0 : index
    %c0_48 = arith.constant 0 : index
    %52 = vector.load %arg3[%c1_46, %c0_47, %c0_48] : memref<8x16x4xf32, #tpu.memory_space<vmem>>, vector<1x16x4xf32>
    %53 = vector.shape_cast %52 : vector<1x16x4xf32> to vector<16x4xf32>
    %54 = arith.mulf %48, %53 : vector<16x4xf32>
    %cst_49 = arith.constant dense<0.000000e+00> : vector<4xf32>
    %55 = vector.multi_reduction <add>, %54, %cst_49 [0] : vector<16x4xf32> to vector<4xf32>
    %56 = vector.shape_cast %55 : vector<4xf32> to vector<1x4xf32>
    %57 = arith.addf %38, %56 : vector<1x4xf32>
    %c2 = arith.constant 2 : index
    %c0_50 = arith.constant 0 : index
    %58 = vector.load %arg6[%c2, %c0_50] : memref<8x4xf32, #tpu.memory_space<vmem>>, vector<1x4xf32>
    %c0_51 = arith.constant 0 : index
    %c0_52 = arith.constant 0 : index
    %59 = vector.load %arg7[%c0_51, %c0_52] : memref<16x4xf32, #tpu.memory_space<vmem>>, vector<16x4xf32>
    %60 = vector.broadcast %58 : vector<1x4xf32> to vector<16x4xf32>
    %61 = arith.addf %60, %59 : vector<16x4xf32>
    %c2_53 = arith.constant 2 : index
    %c0_54 = arith.constant 0 : index
    %c0_55 = arith.constant 0 : index
    %62 = vector.load %arg3[%c2_53, %c0_54, %c0_55] : memref<8x16x4xf32, #tpu.memory_space<vmem>>, vector<1x16x4xf32>
    %63 = vector.shape_cast %62 : vector<1x16x4xf32> to vector<16x4xf32>
    %64 = arith.subf %61, %63 : vector<16x4xf32>
    %cst_56 = arith.constant 1.000000e+01 : f32
    %65 = vector.broadcast %cst_56 : f32 to vector<16x4xf32>
    %66 = arith.mulf %64, %65 : vector<16x4xf32>
    %67 = math.exp %66 : vector<16x4xf32>
    %c2_57 = arith.constant 2 : index
    %c0_58 = arith.constant 0 : index
    %c0_59 = arith.constant 0 : index
    %68 = vector.load %arg5[%c2_57, %c0_58, %c0_59] : memref<8x16x4xf32, #tpu.memory_space<vmem>>, vector<1x16x4xf32>
    %69 = vector.shape_cast %68 : vector<1x16x4xf32> to vector<16x4xf32>
    %70 = vector.shape_cast %67 : vector<16x4xf32> to vector<1x16x4xf32>
    tpu.vector_store %arg5[%c2_57, %c0_58, %c0_59], %70 {strides = array<i32>} : memref<8x16x4xf32, #tpu.memory_space<vmem>>, vector<1x16x4xf32>,
    %c2_60 = arith.constant 2 : index
    %c0_61 = arith.constant 0 : index
    %c0_62 = arith.constant 0 : index
    %71 = vector.load %arg3[%c2_60, %c0_61, %c0_62] : memref<8x16x4xf32, #tpu.memory_space<vmem>>, vector<1x16x4xf32>
    %72 = vector.shape_cast %71 : vector<1x16x4xf32> to vector<16x4xf32>
    %73 = arith.mulf %67, %72 : vector<16x4xf32>
    %cst_63 = arith.constant dense<0.000000e+00> : vector<4xf32>
    %74 = vector.multi_reduction <add>, %73, %cst_63 [0] : vector<16x4xf32> to vector<4xf32>
    %75 = vector.shape_cast %74 : vector<4xf32> to vector<1x4xf32>
    %76 = arith.addf %57, %75 : vector<1x4xf32>
    %c3 = arith.constant 3 : index
    %c0_64 = arith.constant 0 : index
    %77 = vector.load %arg6[%c3, %c0_64] : memref<8x4xf32, #tpu.memory_space<vmem>>, vector<1x4xf32>
    %c0_65 = arith.constant 0 : index
    %c0_66 = arith.constant 0 : index
    %78 = vector.load %arg7[%c0_65, %c0_66] : memref<16x4xf32, #tpu.memory_space<vmem>>, vector<16x4xf32>
    %79 = vector.broadcast %77 : vector<1x4xf32> to vector<16x4xf32>
    %80 = arith.addf %79, %78 : vector<16x4xf32>
    %c3_67 = arith.constant 3 : index
    %c0_68 = arith.constant 0 : index
    %c0_69 = arith.constant 0 : index
    %81 = vector.load %arg3[%c3_67, %c0_68, %c0_69] : memref<8x16x4xf32, #tpu.memory_space<vmem>>, vector<1x16x4xf32>
    %82 = vector.shape_cast %81 : vector<1x16x4xf32> to vector<16x4xf32>
    %83 = arith.subf %80, %82 : vector<16x4xf32>
    %cst_70 = arith.constant 1.000000e+01 : f32
    %84 = vector.broadcast %cst_70 : f32 to vector<16x4xf32>
    %85 = arith.mulf %83, %84 : vector<16x4xf32>
    %86 = math.exp %85 : vector<16x4xf32>
    %c3_71 = arith.constant 3 : index
    %c0_72 = arith.constant 0 : index
    %c0_73 = arith.constant 0 : index
    %87 = vector.load %arg5[%c3_71, %c0_72, %c0_73] : memref<8x16x4xf32, #tpu.memory_space<vmem>>, vector<1x16x4xf32>
    %88 = vector.shape_cast %87 : vector<1x16x4xf32> to vector<16x4xf32>
    %89 = vector.shape_cast %86 : vector<16x4xf32> to vector<1x16x4xf32>
    tpu.vector_store %arg5[%c3_71, %c0_72, %c0_73], %89 {strides = array<i32>} : memref<8x16x4xf32, #tpu.memory_space<vmem>>, vector<1x16x4xf32>,
    %c3_74 = arith.constant 3 : index
    %c0_75 = arith.constant 0 : index
    %c0_76 = arith.constant 0 : index
    %90 = vector.load %arg3[%c3_74, %c0_75, %c0_76] : memref<8x16x4xf32, #tpu.memory_space<vmem>>, vector<1x16x4xf32>
    %91 = vector.shape_cast %90 : vector<1x16x4xf32> to vector<16x4xf32>
    %92 = arith.mulf %86, %91 : vector<16x4xf32>
    %cst_77 = arith.constant dense<0.000000e+00> : vector<4xf32>
    %93 = vector.multi_reduction <add>, %92, %cst_77 [0] : vector<16x4xf32> to vector<4xf32>
    %94 = vector.shape_cast %93 : vector<4xf32> to vector<1x4xf32>
    %95 = arith.addf %76, %94 : vector<1x4xf32>
    %c4 = arith.constant 4 : index
    %c0_78 = arith.constant 0 : index
    %96 = vector.load %arg6[%c4, %c0_78] : memref<8x4xf32, #tpu.memory_space<vmem>>, vector<1x4xf32>
    %c0_79 = arith.constant 0 : index
    %c0_80 = arith.constant 0 : index
    %97 = vector.load %arg7[%c0_79, %c0_80] : memref<16x4xf32, #tpu.memory_space<vmem>>, vector<16x4xf32>
    %98 = vector.broadcast %96 : vector<1x4xf32> to vector<16x4xf32>
    %99 = arith.addf %98, %97 : vector<16x4xf32>
    %c4_81 = arith.constant 4 : index
    %c0_82 = arith.constant 0 : index
    %c0_83 = arith.constant 0 : index
    %100 = vector.load %arg3[%c4_81, %c0_82, %c0_83] : memref<8x16x4xf32, #tpu.memory_space<vmem>>, vector<1x16x4xf32>
    %101 = vector.shape_cast %100 : vector<1x16x4xf32> to vector<16x4xf32>
    %102 = arith.subf %99, %101 : vector<16x4xf32>
    %cst_84 = arith.constant 1.000000e+01 : f32
    %103 = vector.broadcast %cst_84 : f32 to vector<16x4xf32>
    %104 = arith.mulf %102, %103 : vector<16x4xf32>
    %105 = math.exp %104 : vector<16x4xf32>
    %c4_85 = arith.constant 4 : index
    %c0_86 = arith.constant 0 : index
    %c0_87 = arith.constant 0 : index
    %106 = vector.load %arg5[%c4_85, %c0_86, %c0_87] : memref<8x16x4xf32, #tpu.memory_space<vmem>>, vector<1x16x4xf32>
    %107 = vector.shape_cast %106 : vector<1x16x4xf32> to vector<16x4xf32>
    %108 = vector.shape_cast %105 : vector<16x4xf32> to vector<1x16x4xf32>
    tpu.vector_store %arg5[%c4_85, %c0_86, %c0_87], %108 {strides = array<i32>} : memref<8x16x4xf32, #tpu.memory_space<vmem>>, vector<1x16x4xf32>,
    %c4_88 = arith.constant 4 : index
    %c0_89 = arith.constant 0 : index
    %c0_90 = arith.constant 0 : index
    %109 = vector.load %arg3[%c4_88, %c0_89, %c0_90] : memref<8x16x4xf32, #tpu.memory_space<vmem>>, vector<1x16x4xf32>
    %110 = vector.shape_cast %109 : vector<1x16x4xf32> to vector<16x4xf32>
    %111 = arith.mulf %105, %110 : vector<16x4xf32>
    %cst_91 = arith.constant dense<0.000000e+00> : vector<4xf32>
    %112 = vector.multi_reduction <add>, %111, %cst_91 [0] : vector<16x4xf32> to vector<4xf32>
    %113 = vector.shape_cast %112 : vector<4xf32> to vector<1x4xf32>
    %114 = arith.addf %95, %113 : vector<1x4xf32>
    %c5 = arith.constant 5 : index
    %c0_92 = arith.constant 0 : index
    %115 = vector.load %arg6[%c5, %c0_92] : memref<8x4xf32, #tpu.memory_space<vmem>>, vector<1x4xf32>
    %c0_93 = arith.constant 0 : index
    %c0_94 = arith.constant 0 : index
    %116 = vector.load %arg7[%c0_93, %c0_94] : memref<16x4xf32, #tpu.memory_space<vmem>>, vector<16x4xf32>
    %117 = vector.broadcast %115 : vector<1x4xf32> to vector<16x4xf32>
    %118 = arith.addf %117, %116 : vector<16x4xf32>
    %c5_95 = arith.constant 5 : index
    %c0_96 = arith.constant 0 : index
    %c0_97 = arith.constant 0 : index
    %119 = vector.load %arg3[%c5_95, %c0_96, %c0_97] : memref<8x16x4xf32, #tpu.memory_space<vmem>>, vector<1x16x4xf32>
    %120 = vector.shape_cast %119 : vector<1x16x4xf32> to vector<16x4xf32>
    %121 = arith.subf %118, %120 : vector<16x4xf32>
    %cst_98 = arith.constant 1.000000e+01 : f32
    %122 = vector.broadcast %cst_98 : f32 to vector<16x4xf32>
    %123 = arith.mulf %121, %122 : vector<16x4xf32>
    %124 = math.exp %123 : vector<16x4xf32>
    %c5_99 = arith.constant 5 : index
    %c0_100 = arith.constant 0 : index
    %c0_101 = arith.constant 0 : index
    %125 = vector.load %arg5[%c5_99, %c0_100, %c0_101] : memref<8x16x4xf32, #tpu.memory_space<vmem>>, vector<1x16x4xf32>
    %126 = vector.shape_cast %125 : vector<1x16x4xf32> to vector<16x4xf32>
    %127 = vector.shape_cast %124 : vector<16x4xf32> to vector<1x16x4xf32>
    tpu.vector_store %arg5[%c5_99, %c0_100, %c0_101], %127 {strides = array<i32>} : memref<8x16x4xf32, #tpu.memory_space<vmem>>, vector<1x16x4xf32>,
    %c5_102 = arith.constant 5 : index
    %c0_103 = arith.constant 0 : index
    %c0_104 = arith.constant 0 : index
    %128 = vector.load %arg3[%c5_102, %c0_103, %c0_104] : memref<8x16x4xf32, #tpu.memory_space<vmem>>, vector<1x16x4xf32>
    %129 = vector.shape_cast %128 : vector<1x16x4xf32> to vector<16x4xf32>
    %130 = arith.mulf %124, %129 : vector<16x4xf32>
    %cst_105 = arith.constant dense<0.000000e+00> : vector<4xf32>
    %131 = vector.multi_reduction <add>, %130, %cst_105 [0] : vector<16x4xf32> to vector<4xf32>
    %132 = vector.shape_cast %131 : vector<4xf32> to vector<1x4xf32>
    %133 = arith.addf %114, %132 : vector<1x4xf32>
    %c6 = arith.constant 6 : index
    %c0_106 = arith.constant 0 : index
    %134 = vector.load %arg6[%c6, %c0_106] : memref<8x4xf32, #tpu.memory_space<vmem>>, vector<1x4xf32>
    %c0_107 = arith.constant 0 : index
    %c0_108 = arith.constant 0 : index
    %135 = vector.load %arg7[%c0_107, %c0_108] : memref<16x4xf32, #tpu.memory_space<vmem>>, vector<16x4xf32>
    %136 = vector.broadcast %134 : vector<1x4xf32> to vector<16x4xf32>
    %137 = arith.addf %136, %135 : vector<16x4xf32>
    %c6_109 = arith.constant 6 : index
    %c0_110 = arith.constant 0 : index
    %c0_111 = arith.constant 0 : index
    %138 = vector.load %arg3[%c6_109, %c0_110, %c0_111] : memref<8x16x4xf32, #tpu.memory_space<vmem>>, vector<1x16x4xf32>
    %139 = vector.shape_cast %138 : vector<1x16x4xf32> to vector<16x4xf32>
    %140 = arith.subf %137, %139 : vector<16x4xf32>
    %cst_112 = arith.constant 1.000000e+01 : f32
    %141 = vector.broadcast %cst_112 : f32 to vector<16x4xf32>
    %142 = arith.mulf %140, %141 : vector<16x4xf32>
    %143 = math.exp %142 : vector<16x4xf32>
    %c6_113 = arith.constant 6 : index
    %c0_114 = arith.constant 0 : index
    %c0_115 = arith.constant 0 : index
    %144 = vector.load %arg5[%c6_113, %c0_114, %c0_115] : memref<8x16x4xf32, #tpu.memory_space<vmem>>, vector<1x16x4xf32>
    %145 = vector.shape_cast %144 : vector<1x16x4xf32> to vector<16x4xf32>
    %146 = vector.shape_cast %143 : vector<16x4xf32> to vector<1x16x4xf32>
    tpu.vector_store %arg5[%c6_113, %c0_114, %c0_115], %146 {strides = array<i32>} : memref<8x16x4xf32, #tpu.memory_space<vmem>>, vector<1x16x4xf32>,
    %c6_116 = arith.constant 6 : index
    %c0_117 = arith.constant 0 : index
    %c0_118 = arith.constant 0 : index
    %147 = vector.load %arg3[%c6_116, %c0_117, %c0_118] : memref<8x16x4xf32, #tpu.memory_space<vmem>>, vector<1x16x4xf32>
    %148 = vector.shape_cast %147 : vector<1x16x4xf32> to vector<16x4xf32>
    %149 = arith.mulf %143, %148 : vector<16x4xf32>
    %cst_119 = arith.constant dense<0.000000e+00> : vector<4xf32>
    %150 = vector.multi_reduction <add>, %149, %cst_119 [0] : vector<16x4xf32> to vector<4xf32>
    %151 = vector.shape_cast %150 : vector<4xf32> to vector<1x4xf32>
    %152 = arith.addf %133, %151 : vector<1x4xf32>
    %c7 = arith.constant 7 : index
    %c0_120 = arith.constant 0 : index
    %153 = vector.load %arg6[%c7, %c0_120] : memref<8x4xf32, #tpu.memory_space<vmem>>, vector<1x4xf32>
    %c0_121 = arith.constant 0 : index
    %c0_122 = arith.constant 0 : index
    %154 = vector.load %arg7[%c0_121, %c0_122] : memref<16x4xf32, #tpu.memory_space<vmem>>, vector<16x4xf32>
    %155 = vector.broadcast %153 : vector<1x4xf32> to vector<16x4xf32>
    %156 = arith.addf %155, %154 : vector<16x4xf32>
    %c7_123 = arith.constant 7 : index
    %c0_124 = arith.constant 0 : index
    %c0_125 = arith.constant 0 : index
    %157 = vector.load %arg3[%c7_123, %c0_124, %c0_125] : memref<8x16x4xf32, #tpu.memory_space<vmem>>, vector<1x16x4xf32>
    %158 = vector.shape_cast %157 : vector<1x16x4xf32> to vector<16x4xf32>
    %159 = arith.subf %156, %158 : vector<16x4xf32>
    %cst_126 = arith.constant 1.000000e+01 : f32
    %160 = vector.broadcast %cst_126 : f32 to vector<16x4xf32>
    %161 = arith.mulf %159, %160 : vector<16x4xf32>
    %162 = math.exp %161 : vector<16x4xf32>
    %c7_127 = arith.constant 7 : index
    %c0_128 = arith.constant 0 : index
    %c0_129 = arith.constant 0 : index
    %163 = vector.load %arg5[%c7_127, %c0_128, %c0_129] : memref<8x16x4xf32, #tpu.memory_space<vmem>>, vector<1x16x4xf32>
    %164 = vector.shape_cast %163 : vector<1x16x4xf32> to vector<16x4xf32>
    %165 = vector.shape_cast %162 : vector<16x4xf32> to vector<1x16x4xf32>
    tpu.vector_store %arg5[%c7_127, %c0_128, %c0_129], %165 {strides = array<i32>} : memref<8x16x4xf32, #tpu.memory_space<vmem>>, vector<1x16x4xf32>,
    %c7_130 = arith.constant 7 : index
    %c0_131 = arith.constant 0 : index
    %c0_132 = arith.constant 0 : index
    %166 = vector.load %arg3[%c7_130, %c0_131, %c0_132] : memref<8x16x4xf32, #tpu.memory_space<vmem>>, vector<1x16x4xf32>
    %167 = vector.shape_cast %166 : vector<1x16x4xf32> to vector<16x4xf32>
    %168 = arith.mulf %162, %167 : vector<16x4xf32>
    %cst_133 = arith.constant dense<0.000000e+00> : vector<4xf32>
    %169 = vector.multi_reduction <add>, %168, %cst_133 [0] : vector<16x4xf32> to vector<4xf32>
    %170 = vector.shape_cast %169 : vector<4xf32> to vector<1x4xf32>
    %171 = arith.addf %152, %170 : vector<1x4xf32>
    %c0_134 = arith.constant 0 : index
    %c0_135 = arith.constant 0 : index
    %172 = vector.load %arg4[%c0_134, %c0_135] : memref<1x4xf32, #tpu.memory_space<vmem>>, vector<1x4xf32>
    tpu.vector_store %arg4[%c0_134, %c0_135], %171 {strides = array<i32>} : memref<1x4xf32, #tpu.memory_space<vmem>>, vector<1x4xf32>,
    return
  }
  func.func @transform_0(%arg0: i32) -> (i32, i32) {
    %c0_i32 = arith.constant 0 : i32
    %c0_i32_0 = arith.constant 0 : i32
    return %c0_i32, %arg0 : i32, i32
  }
  func.func @transform_1(%arg0: i32) -> (i32, i32) {
    %c0_i32 = arith.constant 0 : i32
    %c0_i32_0 = arith.constant 0 : i32
    return %c0_i32, %arg0 : i32, i32
  }
  func.func @transform_2(%arg0: i32) -> (i32, i32, i32) {
    %c0_i32 = arith.constant 0 : i32
    %c0_i32_0 = arith.constant 0 : i32
    %c0_i32_1 = arith.constant 0 : i32
    return %c0_i32, %c0_i32_0, %arg0 : i32, i32, i32
  }
  func.func @transform_3(%arg0: i32) -> (i32, i32) {
    %c0_i32 = arith.constant 0 : i32
    %c0_i32_0 = arith.constant 0 : i32
    return %c0_i32, %arg0 : i32, i32
  }
  func.func @transform_4(%arg0: i32) -> (i32, i32, i32) {
    %c0_i32 = arith.constant 0 : i32
    %c0_i32_0 = arith.constant 0 : i32
    %c0_i32_1 = arith.constant 0 : i32
    return %c0_i32, %c0_i32_0, %arg0 : i32, i32, i32
  }
}

</mosaic_0001>

<llo_original>
// kernel: tpu_custom_call.1
$region0: #{tpu_custom_call.1}
  #allocation0 [shape = 'u32[]', space=smem, size = 0x4, offset = 0x4, fixed_abs, tag = 'smem constant byte address 0x4 - core index']
  #allocation1 [shape = 'u32[144,128]{1,0:T(1,128)}', space=vmem, size = 0x12000, scoped, tag = 'internal scratch']
  #allocation2 [shape = 'f32[8,4]{1,0:T(8,128)}', space=vmem, size = 0x1000, scoped, tag = 'scratch operand']
  #allocation3 [shape = 'f32[16,4]{1,0:T(8,128)}', space=vmem, size = 0x2000, scoped, tag = 'scratch operand']
  #allocation4 [shape = 'f32[8,4]{1,0:T(8,128)}', space=vmem, size = 0x1000, scoped, tag = 'scratch operand']
  #allocation5 [shape = 'f32[8,4]{1,0:T(8,128)}', space=vmem, size = 0x1000, scoped, tag = 'scratch operand']
  #allocation6 [shape = 'f32[16,4]{1,0:T(8,128)}', space=vmem, size = 0x2000, scoped, tag = 'scratch operand']
  %s0 = inlined_call_operand.vmem [shape: f32[8,4], index: 0, kind: input, shape index: {}]
  %s1 = inlined_call_operand.vmem [shape: f32[16,4], index: 1, kind: input, shape index: {}]
  %s2 = inlined_call_operand.vmem [shape: f32[8,16,4], index: 2, kind: input, shape index: {}]
  %s3 = inlined_call_operand.hbm [shape: f32[1,4], index: 3, kind: output, shape index: {0}]
  %s4 = inlined_call_operand.vmem [shape: f32[8,16,4], index: 4, kind: output, shape index: {1}]
  %5 = xla_tuple %s3, %s4
  %s6 = sld [smem:[#allocation0]]
  $region37: #{tpu_custom_call.1} parent=0
    _
  %s8 = ssub.s32 1, %s6
  %s9 = scalar_select 0, %s8, %s6
  $region1: #{tpu_custom_call.1} parent=0
    #allocation7 [shape = 'u8[512]{0}', space=vmem, size = 0x400, scoped, tag = 'output window, operand 0, single buffered']
    #allocation8 [shape = 's32[1]{0}', space=sflag, size = 0x4, scoped, tag = 'scoped memory for tpu_custom_call.1']
    %10 = vsyncpa [#allocation8], 0
    // Predicated region
    $region2: #{tpu_custom_call.1} parent=1 // pred_check
      _
    $region3: #{tpu_custom_call.1} parent=1 // pred_check_branch
      %12 = sbr.rel (0) target = $region5
    $region4: #{tpu_custom_call.1} parent=1 // pred_region
      _
    $region5: #{tpu_custom_call.1} parent=1 // pred_fallthru
      _
    // Predicated region
    $region6: #{tpu_custom_call.1} parent=1 // pred_check
      _
    $region7: #{tpu_custom_call.1} parent=1 // pred_check_branch
      %14 = sbr.rel (0) target = $region9
    $region8: #{tpu_custom_call.1} parent=1 // pred_region
      _
    $region9: #{tpu_custom_call.1} parent=1 // pred_fallthru
      _
    // Predicated region
    $region10: #{tpu_custom_call.1} parent=1 // pred_check
      _
    $region11: #{tpu_custom_call.1} parent=1 // pred_check_branch
      %16 = sbr.rel (0) target = $region13
    $region12: #{tpu_custom_call.1} parent=1 // pred_region
      _
    $region13: #{tpu_custom_call.1} parent=1 // pred_fallthru
      _
    %v17 = vld [vmem:[%s0] sm:$0xff]
    %v18 = vadd.f32 %v17, 1e-08
    %v19 = vlog2.pop %v18
    %v20 = vmul.f32 %v19, 0.6931472
    %v21 = vmul.f32 %v20, 0.1
    %vm22 = vcmask 31744
    %23 = vst.msk [vmem:[#allocation5] sm:$0xff] %vm22, %v21
    %v24 = vld [vmem:[%s1] sm:$0xff]
    %v25 = vld [vmem:[%s1 + $0x8] sm:$0xff]
    %v26 = vadd.f32 %v24, 1e-08
    %v27 = vadd.f32 %v25, 1e-08
    %v28 = vlog2.pop %v26
    %v29 = vmul.f32 %v28, 0.6931472
    %v30 = vlog2.pop %v27
    %v31 = vmul.f32 %v30, 0.6931472
    %v32 = vmul.f32 %v29, 0.1
    %v33 = vmul.f32 %v31, 0.1
    %34 = vst.msk [vmem:[#allocation6] sm:$0xff] %vm22, %v32
    %35 = vst.msk [vmem:[#allocation6 + $0x8] sm:$0xff] %vm22, %v33
    %36 = vst.msk [vmem:[#allocation2] sm:$0xff] %vm22, 0.0
    %37 = vst.msk [vmem:[#allocation3] sm:$0xff] %vm22, 0.0
    %38 = vst.msk [vmem:[#allocation3 + $0x8] sm:$0xff] %vm22, 0.0
    // While loop
    $region14: #{tpu_custom_call.1} parent=1 // loop_pre_header
      _
    $region15: #{tpu_custom_call.1} parent=1 // loop_header
      %s40 = sphi 0, %s48
      %s41 = sphi inf, %s2040
      %p42 = scmp.lt.s32.totalorder %s40, 25
      %p43 = scmp.ge.f32.partialorder %s41, 0.4
      %p44 = pnand %p42, %p43
      %p45 = pneg %p44
    $region16: #{tpu_custom_call.1} parent=1 // loop_header_branch
      %47 = sbr.rel (%p44) target = $region20
    $region17: #{tpu_custom_call.1} parent=1 // loop_body
      %s48 = sadd.s32 %s40, 1
      %v49 = vld [vmem:[#allocation2] sm:$0xff]
      %50 = vst.msk [vmem:[#allocation4] sm:$0xff] %vm22, %v49
      %v51 = vld [vmem:[#allocation3] sm:$0xff]
      %v52 = vld [vmem:[#allocation3 + $0x8] sm:$0xff]
      %v53 = vld [vmem:[%s2] sm:$0xff]
      %v54 = vld [vmem:[%s2 + $0x8] sm:$0xff]
      %v55 = vsub.f32 %v51, %v53
      %v56 = vsub.f32 %v52, %v54
      %v57 = vmul.f32 %v55, 10.0
      %v58 = vmul.f32 %v56, 10.0
      %v59 = vsel %vm22, %v57, -inf
      %v60 = vsel %vm22, %v58, -inf
      %v61 = vmax.f32 %v59, %v60
      %v62 = vrot.slane %v61, 4
      %v63 = vmax.f32 %v61, %v62
      %v64 = vrot.slane %v63, 2
      %v65 = vmax.f32 %v63, %v64
      %v66 = vrot.slane %v65, 1
      %v67 = vmax.f32 %v65, %v66
      %v68 = vsub.f32 %v57, %v67
      %v69 = vsub.f32 %v58, %v67
      %v70 = vmul.f32 %v68, 1.442695
      %v71 = vpow.pop %v70
      %v72 = vmul.f32 %v69, 1.442695
      %v73 = vpow.pop %v72
      %v74 = vsel %vm22, %v71, 0.0
      %v75 = vsel %vm22, %v73, 0.0
      %v76 = vadd.f32 %v74, %v75
      %v77 = vrot.slane %v76, 4
      %v78 = vadd.f32 %v76, %v77
      %v79 = vrot.slane %v78, 2
      %v80 = vadd.f32 %v78, %v79
      %v81 = vrot.slane %v80, 1
      %v82 = vadd.f32 %v80, %v81
      %v83 = vlog2.pop %v82
      %v84 = vmul.f32 %v83, 0.6931472
      %v85 = vadd.f32 %v67, %v84
      %v86 = vld [vmem:[#allocation5] sm:$0x1]
      %v87 = vmul.f32 %v85, 0.1
      %v88 = vsub.f32 %v86, %v87
      %vm89 = vcmask 24576
      %90 = vst.msk [vmem:[#allocation2] sm:$0x1] %vm89, %v88
      %v91 = vld [vmem:[#allocation3] sm:$0xff]
      %v92 = vld [vmem:[#allocation3 + $0x8] sm:$0xff]
      %s93 = scalar_lea.vmem %s2, 16
      %v94 = vld [vmem:[%s93] sm:$0xff]
      %v95 = vld [vmem:[%s93 + $0x8] sm:$0xff]
      %v96 = vsub.f32 %v91, %v94
      %v97 = vsub.f32 %v92, %v95
      %v98 = vmul.f32 %v96, 10.0
      %v99 = vmul.f32 %v97, 10.0
      %v100 = vsel %vm22, %v98, -inf
      %v101 = vsel %vm22, %v99, -inf
      %v102 = vmax.f32 %v100, %v101
      %v103 = vrot.slane %v102, 4
      %v104 = vmax.f32 %v102, %v103
      %v105 = vrot.slane %v104, 2
      %v106 = vmax.f32 %v104, %v105
      %v107 = vrot.slane %v106, 1
      %v108 = vmax.f32 %v106, %v107
      %v109 = vsub.f32 %v98, %v108
      %v110 = vsub.f32 %v99, %v108
      %v111 = vmul.f32 %v109, 1.442695
      %v112 = vpow.pop %v111
      %v113 = vmul.f32 %v110, 1.442695
      %v114 = vpow.pop %v113
      %v115 = vsel %vm22, %v112, 0.0
      %v116 = vsel %vm22, %v114, 0.0
      %v117 = vadd.f32 %v115, %v116
      %v118 = vrot.slane %v117, 4
      %v119 = vadd.f32 %v117, %v118
      %v120 = vrot.slane %v119, 2
      %v121 = vadd.f32 %v119, %v120
      %v122 = vrot.slane %v121, 1
      %v123 = vadd.f32 %v121, %v122
      %v124 = vlog2.pop %v123
      %v125 = vmul.f32 %v124, 0.6931472
      %v126 = vadd.f32 %v108, %v125
      %v127 = vld [vmem:[#allocation5 + $0x1] sm:$0x1]
      %v128 = vmul.f32 %v126, 0.1
      %v129 = vsub.f32 %v127, %v128
      %130 = vst.msk [vmem:[#allocation2 + $0x1] sm:$0x1] %vm89, %v129
      %v131 = vld [vmem:[#allocation3] sm:$0xff]
      %v132 = vld [vmem:[#allocation3 + $0x8] sm:$0xff]
      %s133 = scalar_lea.vmem %s2, 32
      %v134 = vld [vmem:[%s133] sm:$0xff]
      %v135 = vld [vmem:[%s133 + $0x8] sm:$0xff]
      %v136 = vsub.f32 %v131, %v134
      %v137 = vsub.f32 %v132, %v135
      %v138 = vmul.f32 %v136, 10.0
      %v139 = vmul.f32 %v137, 10.0
      %v140 = vsel %vm22, %v138, -inf
      %v141 = vsel %vm22, %v139, -inf
      %v142 = vmax.f32 %v140, %v141
      %v143 = vrot.slane %v142, 4
      %v144 = vmax.f32 %v142, %v143
      %v145 = vrot.slane %v144, 2
      %v146 = vmax.f32 %v144, %v145
      %v147 = vrot.slane %v146, 1
      %v148 = vmax.f32 %v146, %v147
      %v149 = vsub.f32 %v138, %v148
      %v150 = vsub.f32 %v139, %v148
      %v151 = vmul.f32 %v149, 1.442695
      %v152 = vpow.pop %v151
      %v153 = vmul.f32 %v150, 1.442695
      %v154 = vpow.pop %v153
      %v155 = vsel %vm22, %v152, 0.0
      %v156 = vsel %vm22, %v154, 0.0
      %v157 = vadd.f32 %v155, %v156
      %v158 = vrot.slane %v157, 4
      %v159 = vadd.f32 %v157, %v158
      %v160 = vrot.slane %v159, 2
      %v161 = vadd.f32 %v159, %v160
      %v162 = vrot.slane %v161, 1
      %v163 = vadd.f32 %v161, %v162
      %v164 = vlog2.pop %v163
      %v165 = vmul.f32 %v164, 0.6931472
      %v166 = vadd.f32 %v148, %v165
      %v167 = vld [vmem:[#allocation5 + $0x2] sm:$0x1]
      %v168 = vmul.f32 %v166, 0.1
      %v169 = vsub.f32 %v167, %v168
      %170 = vst.msk [vmem:[#allocation2 + $0x2] sm:$0x1] %vm89, %v169
      %v171 = vld [vmem:[#allocation3] sm:$0xff]
      %v172 = vld [vmem:[#allocation3 + $0x8] sm:$0xff]
      %s173 = scalar_lea.vmem %s2, 48
      %v174 = vld [vmem:[%s173] sm:$0xff]
      %v175 = vld [vmem:[%s173 + $0x8] sm:$0xff]
      %v176 = vsub.f32 %v171, %v174
      %v177 = vsub.f32 %v172, %v175
      %v178 = vmul.f32 %v176, 10.0
      %v179 = vmul.f32 %v177, 10.0
      %v180 = vsel %vm22, %v178, -inf
      %v181 = vsel %vm22, %v179, -inf
      %v182 = vmax.f32 %v180, %v181
      %v183 = vrot.slane %v182, 4
      %v184 = vmax.f32 %v182, %v183
      %v185 = vrot.slane %v184, 2
      %v186 = vmax.f32 %v184, %v185
      %v187 = vrot.slane %v186, 1
      %v188 = vmax.f32 %v186, %v187
      %v189 = vsub.f32 %v178, %v188
      %v190 = vsub.f32 %v179, %v188
      %v191 = vmul.f32 %v189, 1.442695
      %v192 = vpow.pop %v191
      %v193 = vmul.f32 %v190, 1.442695
      %v194 = vpow.pop %v193
      %v195 = vsel %vm22, %v192, 0.0
      %v196 = vsel %vm22, %v194, 0.0
      %v197 = vadd.f32 %v195, %v196
      %v198 = vrot.slane %v197, 4
      %v199 = vadd.f32 %v197, %v198
      %v200 = vrot.slane %v199, 2
      %v201 = vadd.f32 %v199, %v200
      %v202 = vrot.slane %v201, 1
      %v203 = vadd.f32 %v201, %v202
      %v204 = vlog2.pop %v203
      %v205 = vmul.f32 %v204, 0.6931472
      %v206 = vadd.f32 %v188, %v205
      %v207 = vld [vmem:[#allocation5 + $0x3] sm:$0x1]
      %v208 = vmul.f32 %v206, 0.1
      %v209 = vsub.f32 %v207, %v208
      %210 = vst.msk [vmem:[#allocation2 + $0x3] sm:$0x1] %vm89, %v209
      %v211 = vld [vmem:[#allocation3] sm:$0xff]
      %v212 = vld [vmem:[#allocation3 + $0x8] sm:$0xff]
      %s213 = scalar_lea.vmem %s2, 64
      %v214 = vld [vmem:[%s213] sm:$0xff]
      %v215 = vld [vmem:[%s213 + $0x8] sm:$0xff]
      %v216 = vsub.f32 %v211, %v214
      %v217 = vsub.f32 %v212, %v215
      %v218 = vmul.f32 %v216, 10.0
      %v219 = vmul.f32 %v217, 10.0
      %v220 = vsel %vm22, %v218, -inf
      %v221 = vsel %vm22, %v219, -inf
      %v222 = vmax.f32 %v220, %v221
      %v223 = vrot.slane %v222, 4
      %v224 = vmax.f32 %v222, %v223
      %v225 = vrot.slane %v224, 2
      %v226 = vmax.f32 %v224, %v225
      %v227 = vrot.slane %v226, 1
      %v228 = vmax.f32 %v226, %v227
      %v229 = vsub.f32 %v218, %v228
      %v230 = vsub.f32 %v219, %v228
      %v231 = vmul.f32 %v229, 1.442695
      %v232 = vpow.pop %v231
      %v233 = vmul.f32 %v230, 1.442695
      %v234 = vpow.pop %v233
      %v235 = vsel %vm22, %v232, 0.0
      %v236 = vsel %vm22, %v234, 0.0
      %v237 = vadd.f32 %v235, %v236
      %v238 = vrot.slane %v237, 4
      %v239 = vadd.f32 %v237, %v238
      %v240 = vrot.slane %v239, 2
      %v241 = vadd.f32 %v239, %v240
      %v242 = vrot.slane %v241, 1
      %v243 = vadd.f32 %v241, %v242
      %v244 = vlog2.pop %v243
      %v245 = vmul.f32 %v244, 0.6931472
      %v246 = vadd.f32 %v228, %v245
      %v247 = vld [vmem:[#allocation5 + $0x4] sm:$0x1]
      %v248 = vmul.f32 %v246, 0.1
      %v249 = vsub.f32 %v247, %v248
      %250 = vst.msk [vmem:[#allocation2 + $0x4] sm:$0x1] %vm89, %v249
      %v251 = vld [vmem:[#allocation3] sm:$0xff]
      %v252 = vld [vmem:[#allocation3 + $0x8] sm:$0xff]
      %s253 = scalar_lea.vmem %s2, 80
      %v254 = vld [vmem:[%s253] sm:$0xff]
      %v255 = vld [vmem:[%s253 + $0x8] sm:$0xff]
      %v256 = vsub.f32 %v251, %v254
      %v257 = vsub.f32 %v252, %v255
      %v258 = vmul.f32 %v256, 10.0
      %v259 = vmul.f32 %v257, 10.0
      %v260 = vsel %vm22, %v258, -inf
      %v261 = vsel %vm22, %v259, -inf
      %v262 = vmax.f32 %v260, %v261
      %v263 = vrot.slane %v262, 4
      %v264 = vmax.f32 %v262, %v263
      %v265 = vrot.slane %v264, 2
      %v266 = vmax.f32 %v264, %v265
      %v267 = vrot.slane %v266, 1
      %v268 = vmax.f32 %v266, %v267
      %v269 = vsub.f32 %v258, %v268
      %v270 = vsub.f32 %v259, %v268
      %v271 = vmul.f32 %v269, 1.442695
      %v272 = vpow.pop %v271
      %v273 = vmul.f32 %v270, 1.442695
      %v274 = vpow.pop %v273
      %v275 = vsel %vm22, %v272, 0.0
      %v276 = vsel %vm22, %v274, 0.0
      %v277 = vadd.f32 %v275, %v276
      %v278 = vrot.slane %v277, 4
      %v279 = vadd.f32 %v277, %v278
      %v280 = vrot.slane %v279, 2
      %v281 = vadd.f32 %v279, %v280
      %v282 = vrot.slane %v281, 1
      %v283 = vadd.f32 %v281, %v282
      %v284 = vlog2.pop %v283
      %v285 = vmul.f32 %v284, 0.6931472
      %v286 = vadd.f32 %v268, %v285
      %v287 = vld [vmem:[#allocation5 + $0x5] sm:$0x1]
      %v288 = vmul.f32 %v286, 0.1
      %v289 = vsub.f32 %v287, %v288
      %290 = vst.msk [vmem:[#allocation2 + $0x5] sm:$0x1] %vm89, %v289
      %v291 = vld [vmem:[#allocation3] sm:$0xff]
      %v292 = vld [vmem:[#allocation3 + $0x8] sm:$0xff]
      %s293 = scalar_lea.vmem %s2, 96
      %v294 = vld [vmem:[%s293] sm:$0xff]
      %v295 = vld [vmem:[%s293 + $0x8] sm:$0xff]
      %v296 = vsub.f32 %v291, %v294
      %v297 = vsub.f32 %v292, %v295
      %v298 = vmul.f32 %v296, 10.0
      %v299 = vmul.f32 %v297, 10.0
      %v300 = vsel %vm22, %v298, -inf
      %v301 = vsel %vm22, %v299, -inf
      %v302 = vmax.f32 %v300, %v301
      %v303 = vrot.slane %v302, 4
      %v304 = vmax.f32 %v302, %v303
      %v305 = vrot.slane %v304, 2
      %v306 = vmax.f32 %v304, %v305
      %v307 = vrot.slane %v306, 1
      %v308 = vmax.f32 %v306, %v307
      %v309 = vsub.f32 %v298, %v308
      %v310 = vsub.f32 %v299, %v308
      %v311 = vmul.f32 %v309, 1.442695
      %v312 = vpow.pop %v311
      %v313 = vmul.f32 %v310, 1.442695
      %v314 = vpow.pop %v313
      %v315 = vsel %vm22, %v312, 0.0
      %v316 = vsel %vm22, %v314, 0.0
      %v317 = vadd.f32 %v315, %v316
      %v318 = vrot.slane %v317, 4
      %v319 = vadd.f32 %v317, %v318
      %v320 = vrot.slane %v319, 2
      %v321 = vadd.f32 %v319, %v320
      %v322 = vrot.slane %v321, 1
      %v323 = vadd.f32 %v321, %v322
      %v324 = vlog2.pop %v323
      %v325 = vmul.f32 %v324, 0.6931472
      %v326 = vadd.f32 %v308, %v325
      %v327 = vld [vmem:[#allocation5 + $0x6] sm:$0x1]
      %v328 = vmul.f32 %v326, 0.1
      %v329 = vsub.f32 %v327, %v328
      %330 = vst.msk [vmem:[#allocation2 + $0x6] sm:$0x1] %vm89, %v329
      %v331 = vld [vmem:[#allocation3] sm:$0xff]
      %v332 = vld [vmem:[#allocation3 + $0x8] sm:$0xff]
      %s333 = scalar_lea.vmem %s2, 112
      %v334 = vld [vmem:[%s333] sm:$0xff]
      %v335 = vld [vmem:[%s333 + $0x8] sm:$0xff]
      %v336 = vsub.f32 %v331, %v334
      %v337 = vsub.f32 %v332, %v335
      %v338 = vmul.f32 %v336, 10.0
      %v339 = vmul.f32 %v337, 10.0
      %v340 = vsel %vm22, %v338, -inf
      %v341 = vsel %vm22, %v339, -inf
      %v342 = vmax.f32 %v340, %v341
      %v343 = vrot.slane %v342, 4
      %v344 = vmax.f32 %v342, %v343
      %v345 = vrot.slane %v344, 2
      %v346 = vmax.f32 %v344, %v345
      %v347 = vrot.slane %v346, 1
      %v348 = vmax.f32 %v346, %v347
      %v349 = vsub.f32 %v338, %v348
      %v350 = vsub.f32 %v339, %v348
      %v351 = vmul.f32 %v349, 1.442695
      %v352 = vpow.pop %v351
      %v353 = vmul.f32 %v350, 1.442695
      %v354 = vpow.pop %v353
      %v355 = vsel %vm22, %v352, 0.0
      %v356 = vsel %vm22, %v354, 0.0
      %v357 = vadd.f32 %v355, %v356
      %v358 = vrot.slane %v357, 4
      %v359 = vadd.f32 %v357, %v358
      %v360 = vrot.slane %v359, 2
      %v361 = vadd.f32 %v359, %v360
      %v362 = vrot.slane %v361, 1
      %v363 = vadd.f32 %v361, %v362
      %v364 = vlog2.pop %v363
      %v365 = vmul.f32 %v364, 0.6931472
      %v366 = vadd.f32 %v348, %v365
      %v367 = vld [vmem:[#allocation5 + $0x7] sm:$0x1]
      %v368 = vmul.f32 %v366, 0.1
      %v369 = vsub.f32 %v367, %v368
      %370 = vst.msk [vmem:[#allocation2 + $0x7] sm:$0x1] %vm89, %v369
      %v371 = vld [vmem:[#allocation2] sm:$0x1]
      %v372 = vld [vmem:[%s2] sm:$0xff]
      %v373 = vld [vmem:[%s2 + $0x8] sm:$0xff]
      %v374 = vlaneseq
      %v375 = vshrl.u32 %v374, 7
      %v376 = vsub.s32 0, %v375
      %v377 = vrot.slane %v371, %v376
      %v378 = vsub.f32 %v377, %v372
      %v379 = vsub.f32 %v377, %v373
      %v380 = vmul.f32 %v378, 10.0
      %v381 = vmul.f32 %v379, 10.0
      %v382 = vld [vmem:[#allocation2 + $0x1] sm:$0x1]
      %v383 = vld [vmem:[%s93] sm:$0xff]
      %v384 = vld [vmem:[%s93 + $0x8] sm:$0xff]
      %v385 = vlaneseq
      %v386 = vshrl.u32 %v385, 7
      %v387 = vsub.s32 0, %v386
      %v388 = vrot.slane %v382, %v387
      %v389 = vsub.f32 %v388, %v383
      %v390 = vsub.f32 %v388, %v384
      %v391 = vmul.f32 %v389, 10.0
      %v392 = vmul.f32 %v390, 10.0
      %v393 = vmax.f32 %v380, %v391
      %v394 = vmax.f32 %v381, %v392
      %v395 = vld [vmem:[#allocation2 + $0x2] sm:$0x1]
      %v396 = vld [vmem:[%s133] sm:$0xff]
      %v397 = vld [vmem:[%s133 + $0x8] sm:$0xff]
      %v398 = vlaneseq
      %v399 = vshrl.u32 %v398, 7
      %v400 = vsub.s32 0, %v399
      %v401 = vrot.slane %v395, %v400
      %v402 = vsub.f32 %v401, %v396
      %v403 = vsub.f32 %v401, %v397
      %v404 = vmul.f32 %v402, 10.0
      %v405 = vmul.f32 %v403, 10.0
      %v406 = vmax.f32 %v393, %v404
      %v407 = vmax.f32 %v394, %v405
      %v408 = vld [vmem:[#allocation2 + $0x3] sm:$0x1]
      %v409 = vld [vmem:[%s173] sm:$0xff]
      %v410 = vld [vmem:[%s173 + $0x8] sm:$0xff]
      %v411 = vlaneseq
      %v412 = vshrl.u32 %v411, 7
      %v413 = vsub.s32 0, %v412
      %v414 = vrot.slane %v408, %v413
      %v415 = vsub.f32 %v414, %v409
      %v416 = vsub.f32 %v414, %v410
      %v417 = vmul.f32 %v415, 10.0
      %v418 = vmul.f32 %v416, 10.0
      %v419 = vmax.f32 %v406, %v417
      %v420 = vmax.f32 %v407, %v418
      %v421 = vld [vmem:[#allocation2 + $0x4] sm:$0x1]
      %v422 = vld [vmem:[%s213] sm:$0xff]
      %v423 = vld [vmem:[%s213 + $0x8] sm:$0xff]
      %v424 = vlaneseq
      %v425 = vshrl.u32 %v424, 7
      %v426 = vsub.s32 0, %v425
      %v427 = vrot.slane %v421, %v426
      %v428 = vsub.f32 %v427, %v422
      %v429 = vsub.f32 %v427, %v423
      %v430 = vmul.f32 %v428, 10.0
      %v431 = vmul.f32 %v429, 10.0
      %v432 = vmax.f32 %v419, %v430
      %v433 = vmax.f32 %v420, %v431
      %v434 = vld [vmem:[#allocation2 + $0x5] sm:$0x1]
      %v435 = vld [vmem:[%s253] sm:$0xff]
      %v436 = vld [vmem:[%s253 + $0x8] sm:$0xff]
      %v437 = vlaneseq
      %v438 = vshrl.u32 %v437, 7
      %v439 = vsub.s32 0, %v438
      %v440 = vrot.slane %v434, %v439
      %v441 = vsub.f32 %v440, %v435
      %v442 = vsub.f32 %v440, %v436
      %v443 = vmul.f32 %v441, 10.0
      %v444 = vmul.f32 %v442, 10.0
      %v445 = vmax.f32 %v432, %v443
      %v446 = vmax.f32 %v433, %v444
      %v447 = vld [vmem:[#allocation2 + $0x6] sm:$0x1]
      %v448 = vld [vmem:[%s293] sm:$0xff]
      %v449 = vld [vmem:[%s293 + $0x8] sm:$0xff]
      %v450 = vlaneseq
      %v451 = vshrl.u32 %v450, 7
      %v452 = vsub.s32 0, %v451
      %v453 = vrot.slane %v447, %v452
      %v454 = vsub.f32 %v453, %v448
      %v455 = vsub.f32 %v453, %v449
      %v456 = vmul.f32 %v454, 10.0
      %v457 = vmul.f32 %v455, 10.0
      %v458 = vmax.f32 %v445, %v456
      %v459 = vmax.f32 %v446, %v457
      %v460 = vld [vmem:[#allocation2 + $0x7] sm:$0x1]
      %v461 = vld [vmem:[%s333] sm:$0xff]
      %v462 = vld [vmem:[%s333 + $0x8] sm:$0xff]
      %v463 = vlaneseq
      %v464 = vshrl.u32 %v463, 7
      %v465 = vsub.s32 0, %v464
      %v466 = vrot.slane %v460, %v465
      %v467 = vsub.f32 %v466, %v461
      %v468 = vsub.f32 %v466, %v462
      %v469 = vmul.f32 %v467, 10.0
      %v470 = vmul.f32 %v468, 10.0
      %v471 = vmax.f32 %v458, %v469
      %v472 = vmax.f32 %v459, %v470
      %v473 = vsub.f32 %v380, %v471
      %v474 = vsub.f32 %v381, %v472
      %v475 = vmul.f32 %v473, 1.442695
      %v476 = vpow.pop %v475
      %v477 = vmul.f32 %v474, 1.442695
      %v478 = vpow.pop %v477
      %v479 = vadd.f32 %v476, 0.0
      %v480 = vadd.f32 %v478, 0.0
      %v481 = vsub.f32 %v391, %v471
      %v482 = vsub.f32 %v392, %v472
      %v483 = vmul.f32 %v481, 1.442695
      %v484 = vpow.pop %v483
      %v485 = vmul.f32 %v482, 1.442695
      %v486 = vpow.pop %v485
      %v487 = vadd.f32 %v479, %v484
      %v488 = vadd.f32 %v480, %v486
      %v489 = vsub.f32 %v404, %v471
      %v490 = vsub.f32 %v405, %v472
      %v491 = vmul.f32 %v489, 1.442695
      %v492 = vpow.pop %v491
      %v493 = vmul.f32 %v490, 1.442695
      %v494 = vpow.pop %v493
      %v495 = vadd.f32 %v487, %v492
      %v496 = vadd.f32 %v488, %v494
      %v497 = vsub.f32 %v417, %v471
      %v498 = vsub.f32 %v418, %v472
      %v499 = vmul.f32 %v497, 1.442695
      %v500 = vpow.pop %v499
      %v501 = vmul.f32 %v498, 1.442695
      %v502 = vpow.pop %v501
      %v503 = vadd.f32 %v495, %v500
      %v504 = vadd.f32 %v496, %v502
      %v505 = vsub.f32 %v430, %v471
      %v506 = vsub.f32 %v431, %v472
      %v507 = vmul.f32 %v505, 1.442695
      %v508 = vpow.pop %v507
      %v509 = vmul.f32 %v506, 1.442695
      %v510 = vpow.pop %v509
      %v511 = vadd.f32 %v503, %v508
      %v512 = vadd.f32 %v504, %v510
      %v513 = vsub.f32 %v443, %v471
      %v514 = vsub.f32 %v444, %v472
      %v515 = vmul.f32 %v513, 1.442695
      %v516 = vpow.pop %v515
      %v517 = vmul.f32 %v514, 1.442695
      %v518 = vpow.pop %v517
      %v519 = vadd.f32 %v511, %v516
      %v520 = vadd.f32 %v512, %v518
      %v521 = vsub.f32 %v456, %v471
      %v522 = vsub.f32 %v457, %v472
      %v523 = vmul.f32 %v521, 1.442695
      %v524 = vpow.pop %v523
      %v525 = vmul.f32 %v522, 1.442695
      %v526 = vpow.pop %v525
      %v527 = vadd.f32 %v519, %v524
      %v528 = vadd.f32 %v520, %v526
      %v529 = vsub.f32 %v469, %v471
      %v530 = vsub.f32 %v470, %v472
      %v531 = vmul.f32 %v529, 1.442695
      %v532 = vpow.pop %v531
      %v533 = vmul.f32 %v530, 1.442695
      %v534 = vpow.pop %v533
      %v535 = vadd.f32 %v527, %v532
      %v536 = vadd.f32 %v528, %v534
      %v537 = vld [vmem:[#allocation6] sm:$0xff]
      %v538 = vld [vmem:[#allocation6 + $0x8] sm:$0xff]
      %v539 = vlog2.pop %v535
      %v540 = vmul.f32 %v539, 0.6931472
      %v541 = vlog2.pop %v536
      %v542 = vmul.f32 %v541, 0.6931472
      %v543 = vadd.f32 %v471, %v540
      %v544 = vadd.f32 %v472, %v542
      %v545 = vmul.f32 %v543, 0.1
      %v546 = vmul.f32 %v544, 0.1
      %v547 = vsub.f32 %v537, %v545
      %v548 = vsub.f32 %v538, %v546
      %549 = vst.msk [vmem:[#allocation3] sm:$0xff] %vm22, %v547
      %550 = vst.msk [vmem:[#allocation3 + $0x8] sm:$0xff] %vm22, %v548
      %v551 = vld [vmem:[#allocation3] sm:$0xff]
      %v552 = vld [vmem:[#allocation3 + $0x8] sm:$0xff]
      %v553 = vld [vmem:[%s2] sm:$0xff]
      %v554 = vld [vmem:[%s2 + $0x8] sm:$0xff]
      %v555 = vsub.f32 %v551, %v553
      %v556 = vsub.f32 %v552, %v554
      %v557 = vmul.f32 %v555, 10.0
      %v558 = vmul.f32 %v556, 10.0
      %v559 = vsel %vm22, %v557, -inf
      %v560 = vsel %vm22, %v558, -inf
      %v561 = vmax.f32 %v559, %v560
      %v562 = vrot.slane %v561, 4
      %v563 = vmax.f32 %v561, %v562
      %v564 = vrot.slane %v563, 2
      %v565 = vmax.f32 %v563, %v564
      %v566 = vrot.slane %v565, 1
      %v567 = vmax.f32 %v565, %v566
      %v568 = vsub.f32 %v557, %v567
      %v569 = vsub.f32 %v558, %v567
      %v570 = vmul.f32 %v568, 1.442695
      %v571 = vpow.pop %v570
      %v572 = vmul.f32 %v569, 1.442695
      %v573 = vpow.pop %v572
      %v574 = vsel %vm22, %v571, 0.0
      %v575 = vsel %vm22, %v573, 0.0
      %v576 = vadd.f32 %v574, %v575
      %v577 = vrot.slane %v576, 4
      %v578 = vadd.f32 %v576, %v577
      %v579 = vrot.slane %v578, 2
      %v580 = vadd.f32 %v578, %v579
      %v581 = vrot.slane %v580, 1
      %v582 = vadd.f32 %v580, %v581
      %v583 = vlog2.pop %v582
      %v584 = vmul.f32 %v583, 0.6931472
      %v585 = vadd.f32 %v567, %v584
      %v586 = vld [vmem:[#allocation5] sm:$0x1]
      %v587 = vmul.f32 %v585, 0.1
      %v588 = vsub.f32 %v586, %v587
      %589 = vst.msk [vmem:[#allocation2] sm:$0x1] %vm89, %v588
      %v590 = vld [vmem:[#allocation3] sm:$0xff]
      %v591 = vld [vmem:[#allocation3 + $0x8] sm:$0xff]
      %v592 = vld [vmem:[%s93] sm:$0xff]
      %v593 = vld [vmem:[%s93 + $0x8] sm:$0xff]
      %v594 = vsub.f32 %v590, %v592
      %v595 = vsub.f32 %v591, %v593
      %v596 = vmul.f32 %v594, 10.0
      %v597 = vmul.f32 %v595, 10.0
      %v598 = vsel %vm22, %v596, -inf
      %v599 = vsel %vm22, %v597, -inf
      %v600 = vmax.f32 %v598, %v599
      %v601 = vrot.slane %v600, 4
      %v602 = vmax.f32 %v600, %v601
      %v603 = vrot.slane %v602, 2
      %v604 = vmax.f32 %v602, %v603
      %v605 = vrot.slane %v604, 1
      %v606 = vmax.f32 %v604, %v605
      %v607 = vsub.f32 %v596, %v606
      %v608 = vsub.f32 %v597, %v606
      %v609 = vmul.f32 %v607, 1.442695
      %v610 = vpow.pop %v609
      %v611 = vmul.f32 %v608, 1.442695
      %v612 = vpow.pop %v611
      %v613 = vsel %vm22, %v610, 0.0
      %v614 = vsel %vm22, %v612, 0.0
      %v615 = vadd.f32 %v613, %v614
      %v616 = vrot.slane %v615, 4
      %v617 = vadd.f32 %v615, %v616
      %v618 = vrot.slane %v617, 2
      %v619 = vadd.f32 %v617, %v618
      %v620 = vrot.slane %v619, 1
      %v621 = vadd.f32 %v619, %v620
      %v622 = vlog2.pop %v621
      %v623 = vmul.f32 %v622, 0.6931472
      %v624 = vadd.f32 %v606, %v623
      %v625 = vld [vmem:[#allocation5 + $0x1] sm:$0x1]
      %v626 = vmul.f32 %v624, 0.1
      %v627 = vsub.f32 %v625, %v626
      %628 = vst.msk [vmem:[#allocation2 + $0x1] sm:$0x1] %vm89, %v627
      %v629 = vld [vmem:[#allocation3] sm:$0xff]
      %v630 = vld [vmem:[#allocation3 + $0x8] sm:$0xff]
      %v631 = vld [vmem:[%s133] sm:$0xff]
      %v632 = vld [vmem:[%s133 + $0x8] sm:$0xff]
      %v633 = vsub.f32 %v629, %v631
      %v634 = vsub.f32 %v630, %v632
      %v635 = vmul.f32 %v633, 10.0
      %v636 = vmul.f32 %v634, 10.0
      %v637 = vsel %vm22, %v635, -inf
      %v638 = vsel %vm22, %v636, -inf
      %v639 = vmax.f32 %v637, %v638
      %v640 = vrot.slane %v639, 4
      %v641 = vmax.f32 %v639, %v640
      %v642 = vrot.slane %v641, 2
      %v643 = vmax.f32 %v641, %v642
      %v644 = vrot.slane %v643, 1
      %v645 = vmax.f32 %v643, %v644
      %v646 = vsub.f32 %v635, %v645
      %v647 = vsub.f32 %v636, %v645
      %v648 = vmul.f32 %v646, 1.442695
      %v649 = vpow.pop %v648
      %v650 = vmul.f32 %v647, 1.442695
      %v651 = vpow.pop %v650
      %v652 = vsel %vm22, %v649, 0.0
      %v653 = vsel %vm22, %v651, 0.0
      %v654 = vadd.f32 %v652, %v653
      %v655 = vrot.slane %v654, 4
      %v656 = vadd.f32 %v654, %v655
      %v657 = vrot.slane %v656, 2
      %v658 = vadd.f32 %v656, %v657
      %v659 = vrot.slane %v658, 1
      %v660 = vadd.f32 %v658, %v659
      %v661 = vlog2.pop %v660
      %v662 = vmul.f32 %v661, 0.6931472
      %v663 = vadd.f32 %v645, %v662
      %v664 = vld [vmem:[#allocation5 + $0x2] sm:$0x1]
      %v665 = vmul.f32 %v663, 0.1
      %v666 = vsub.f32 %v664, %v665
      %667 = vst.msk [vmem:[#allocation2 + $0x2] sm:$0x1] %vm89, %v666
      %v668 = vld [vmem:[#allocation3] sm:$0xff]
      %v669 = vld [vmem:[#allocation3 + $0x8] sm:$0xff]
      %v670 = vld [vmem:[%s173] sm:$0xff]
      %v671 = vld [vmem:[%s173 + $0x8] sm:$0xff]
      %v672 = vsub.f32 %v668, %v670
      %v673 = vsub.f32 %v669, %v671
      %v674 = vmul.f32 %v672, 10.0
      %v675 = vmul.f32 %v673, 10.0
      %v676 = vsel %vm22, %v674, -inf
      %v677 = vsel %vm22, %v675, -inf
      %v678 = vmax.f32 %v676, %v677
      %v679 = vrot.slane %v678, 4
      %v680 = vmax.f32 %v678, %v679
      %v681 = vrot.slane %v680, 2
      %v682 = vmax.f32 %v680, %v681
      %v683 = vrot.slane %v682, 1
      %v684 = vmax.f32 %v682, %v683
      %v685 = vsub.f32 %v674, %v684
      %v686 = vsub.f32 %v675, %v684
      %v687 = vmul.f32 %v685, 1.442695
      %v688 = vpow.pop %v687
      %v689 = vmul.f32 %v686, 1.442695
      %v690 = vpow.pop %v689
      %v691 = vsel %vm22, %v688, 0.0
      %v692 = vsel %vm22, %v690, 0.0
      %v693 = vadd.f32 %v691, %v692
      %v694 = vrot.slane %v693, 4
      %v695 = vadd.f32 %v693, %v694
      %v696 = vrot.slane %v695, 2
      %v697 = vadd.f32 %v695, %v696
      %v698 = vrot.slane %v697, 1
      %v699 = vadd.f32 %v697, %v698
      %v700 = vlog2.pop %v699
      %v701 = vmul.f32 %v700, 0.6931472
      %v702 = vadd.f32 %v684, %v701
      %v703 = vld [vmem:[#allocation5 + $0x3] sm:$0x1]
      %v704 = vmul.f32 %v702, 0.1
      %v705 = vsub.f32 %v703, %v704
      %706 = vst.msk [vmem:[#allocation2 + $0x3] sm:$0x1] %vm89, %v705
      %v707 = vld [vmem:[#allocation3] sm:$0xff]
      %v708 = vld [vmem:[#allocation3 + $0x8] sm:$0xff]
      %v709 = vld [vmem:[%s213] sm:$0xff]
      %v710 = vld [vmem:[%s213 + $0x8] sm:$0xff]
      %v711 = vsub.f32 %v707, %v709
      %v712 = vsub.f32 %v708, %v710
      %v713 = vmul.f32 %v711, 10.0
      %v714 = vmul.f32 %v712, 10.0
      %v715 = vsel %vm22, %v713, -inf
      %v716 = vsel %vm22, %v714, -inf
      %v717 = vmax.f32 %v715, %v716
      %v718 = vrot.slane %v717, 4
      %v719 = vmax.f32 %v717, %v718
      %v720 = vrot.slane %v719, 2
      %v721 = vmax.f32 %v719, %v720
      %v722 = vrot.slane %v721, 1
      %v723 = vmax.f32 %v721, %v722
      %v724 = vsub.f32 %v713, %v723
      %v725 = vsub.f32 %v714, %v723
      %v726 = vmul.f32 %v724, 1.442695
      %v727 = vpow.pop %v726
      %v728 = vmul.f32 %v725, 1.442695
      %v729 = vpow.pop %v728
      %v730 = vsel %vm22, %v727, 0.0
      %v731 = vsel %vm22, %v729, 0.0
      %v732 = vadd.f32 %v730, %v731
      %v733 = vrot.slane %v732, 4
      %v734 = vadd.f32 %v732, %v733
      %v735 = vrot.slane %v734, 2
      %v736 = vadd.f32 %v734, %v735
      %v737 = vrot.slane %v736, 1
      %v738 = vadd.f32 %v736, %v737
      %v739 = vlog2.pop %v738
      %v740 = vmul.f32 %v739, 0.6931472
      %v741 = vadd.f32 %v723, %v740
      %v742 = vld [vmem:[#allocation5 + $0x4] sm:$0x1]
      %v743 = vmul.f32 %v741, 0.1
      %v744 = vsub.f32 %v742, %v743
      %745 = vst.msk [vmem:[#allocation2 + $0x4] sm:$0x1] %vm89, %v744
      %v746 = vld [vmem:[#allocation3] sm:$0xff]
      %v747 = vld [vmem:[#allocation3 + $0x8] sm:$0xff]
      %v748 = vld [vmem:[%s253] sm:$0xff]
      %v749 = vld [vmem:[%s253 + $0x8] sm:$0xff]
      %v750 = vsub.f32 %v746, %v748
      %v751 = vsub.f32 %v747, %v749
      %v752 = vmul.f32 %v750, 10.0
      %v753 = vmul.f32 %v751, 10.0
      %v754 = vsel %vm22, %v752, -inf
      %v755 = vsel %vm22, %v753, -inf
      %v756 = vmax.f32 %v754, %v755
      %v757 = vrot.slane %v756, 4
      %v758 = vmax.f32 %v756, %v757
      %v759 = vrot.slane %v758, 2
      %v760 = vmax.f32 %v758, %v759
      %v761 = vrot.slane %v760, 1
      %v762 = vmax.f32 %v760, %v761
      %v763 = vsub.f32 %v752, %v762
      %v764 = vsub.f32 %v753, %v762
      %v765 = vmul.f32 %v763, 1.442695
      %v766 = vpow.pop %v765
      %v767 = vmul.f32 %v764, 1.442695
      %v768 = vpow.pop %v767
      %v769 = vsel %vm22, %v766, 0.0
      %v770 = vsel %vm22, %v768, 0.0
      %v771 = vadd.f32 %v769, %v770
      %v772 = vrot.slane %v771, 4
      %v773 = vadd.f32 %v771, %v772
      %v774 = vrot.slane %v773, 2
      %v775 = vadd.f32 %v773, %v774
      %v776 = vrot.slane %v775, 1
      %v777 = vadd.f32 %v775, %v776
      %v778 = vlog2.pop %v777
      %v779 = vmul.f32 %v778, 0.6931472
      %v780 = vadd.f32 %v762, %v779
      %v781 = vld [vmem:[#allocation5 + $0x5] sm:$0x1]
      %v782 = vmul.f32 %v780, 0.1
      %v783 = vsub.f32 %v781, %v782
      %784 = vst.msk [vmem:[#allocation2 + $0x5] sm:$0x1] %vm89, %v783
      %v785 = vld [vmem:[#allocation3] sm:$0xff]
      %v786 = vld [vmem:[#allocation3 + $0x8] sm:$0xff]
      %v787 = vld [vmem:[%s293] sm:$0xff]
      %v788 = vld [vmem:[%s293 + $0x8] sm:$0xff]
      %v789 = vsub.f32 %v785, %v787
      %v790 = vsub.f32 %v786, %v788
      %v791 = vmul.f32 %v789, 10.0
      %v792 = vmul.f32 %v790, 10.0
      %v793 = vsel %vm22, %v791, -inf
      %v794 = vsel %vm22, %v792, -inf
      %v795 = vmax.f32 %v793, %v794
      %v796 = vrot.slane %v795, 4
      %v797 = vmax.f32 %v795, %v796
      %v798 = vrot.slane %v797, 2
      %v799 = vmax.f32 %v797, %v798
      %v800 = vrot.slane %v799, 1
      %v801 = vmax.f32 %v799, %v800
      %v802 = vsub.f32 %v791, %v801
      %v803 = vsub.f32 %v792, %v801
      %v804 = vmul.f32 %v802, 1.442695
      %v805 = vpow.pop %v804
      %v806 = vmul.f32 %v803, 1.442695
      %v807 = vpow.pop %v806
      %v808 = vsel %vm22, %v805, 0.0
      %v809 = vsel %vm22, %v807, 0.0
      %v810 = vadd.f32 %v808, %v809
      %v811 = vrot.slane %v810, 4
      %v812 = vadd.f32 %v810, %v811
      %v813 = vrot.slane %v812, 2
      %v814 = vadd.f32 %v812, %v813
      %v815 = vrot.slane %v814, 1
      %v816 = vadd.f32 %v814, %v815
      %v817 = vlog2.pop %v816
      %v818 = vmul.f32 %v817, 0.6931472
      %v819 = vadd.f32 %v801, %v818
      %v820 = vld [vmem:[#allocation5 + $0x6] sm:$0x1]
      %v821 = vmul.f32 %v819, 0.1
      %v822 = vsub.f32 %v820, %v821
      %823 = vst.msk [vmem:[#allocation2 + $0x6] sm:$0x1] %vm89, %v822
      %v824 = vld [vmem:[#allocation3] sm:$0xff]
      %v825 = vld [vmem:[#allocation3 + $0x8] sm:$0xff]
      %v826 = vld [vmem:[%s333] sm:$0xff]
      %v827 = vld [vmem:[%s333 + $0x8] sm:$0xff]
      %v828 = vsub.f32 %v824, %v826
      %v829 = vsub.f32 %v825, %v827
      %v830 = vmul.f32 %v828, 10.0
      %v831 = vmul.f32 %v829, 10.0
      %v832 = vsel %vm22, %v830, -inf
      %v833 = vsel %vm22, %v831, -inf
      %v834 = vmax.f32 %v832, %v833
      %v835 = vrot.slane %v834, 4
      %v836 = vmax.f32 %v834, %v835
      %v837 = vrot.slane %v836, 2
      %v838 = vmax.f32 %v836, %v837
      %v839 = vrot.slane %v838, 1
      %v840 = vmax.f32 %v838, %v839
      %v841 = vsub.f32 %v830, %v840
      %v842 = vsub.f32 %v831, %v840
      %v843 = vmul.f32 %v841, 1.442695
      %v844 = vpow.pop %v843
      %v845 = vmul.f32 %v842, 1.442695
      %v846 = vpow.pop %v845
      %v847 = vsel %vm22, %v844, 0.0
      %v848 = vsel %vm22, %v846, 0.0
      %v849 = vadd.f32 %v847, %v848
      %v850 = vrot.slane %v849, 4
      %v851 = vadd.f32 %v849, %v850
      %v852 = vrot.slane %v851, 2
      %v853 = vadd.f32 %v851, %v852
      %v854 = vrot.slane %v853, 1
      %v855 = vadd.f32 %v853, %v854
      %v856 = vlog2.pop %v855
      %v857 = vmul.f32 %v856, 0.6931472
      %v858 = vadd.f32 %v840, %v857
      %v859 = vld [vmem:[#allocation5 + $0x7] sm:$0x1]
      %v860 = vmul.f32 %v858, 0.1
      %v861 = vsub.f32 %v859, %v860
      %862 = vst.msk [vmem:[#allocation2 + $0x7] sm:$0x1] %vm89, %v861
      %v863 = vld [vmem:[#allocation2] sm:$0x1]
      %v864 = vld [vmem:[%s2] sm:$0xff]
      %v865 = vld [vmem:[%s2 + $0x8] sm:$0xff]
      %v866 = vlaneseq
      %v867 = vshrl.u32 %v866, 7
      %v868 = vsub.s32 0, %v867
      %v869 = vrot.slane %v863, %v868
      %v870 = vsub.f32 %v869, %v864
      %v871 = vsub.f32 %v869, %v865
      %v872 = vmul.f32 %v870, 10.0
      %v873 = vmul.f32 %v871, 10.0
      %v874 = vld [vmem:[#allocation2 + $0x1] sm:$0x1]
      %v875 = vld [vmem:[%s93] sm:$0xff]
      %v876 = vld [vmem:[%s93 + $0x8] sm:$0xff]
      %v877 = vlaneseq
      %v878 = vshrl.u32 %v877, 7
      %v879 = vsub.s32 0, %v878
      %v880 = vrot.slane %v874, %v879
      %v881 = vsub.f32 %v880, %v875
      %v882 = vsub.f32 %v880, %v876
      %v883 = vmul.f32 %v881, 10.0
      %v884 = vmul.f32 %v882, 10.0
      %v885 = vmax.f32 %v872, %v883
      %v886 = vmax.f32 %v873, %v884
      %v887 = vld [vmem:[#allocation2 + $0x2] sm:$0x1]
      %v888 = vld [vmem:[%s133] sm:$0xff]
      %v889 = vld [vmem:[%s133 + $0x8] sm:$0xff]
      %v890 = vlaneseq
      %v891 = vshrl.u32 %v890, 7
      %v892 = vsub.s32 0, %v891
      %v893 = vrot.slane %v887, %v892
      %v894 = vsub.f32 %v893, %v888
      %v895 = vsub.f32 %v893, %v889
      %v896 = vmul.f32 %v894, 10.0
      %v897 = vmul.f32 %v895, 10.0
      %v898 = vmax.f32 %v885, %v896
      %v899 = vmax.f32 %v886, %v897
      %v900 = vld [vmem:[#allocation2 + $0x3] sm:$0x1]
      %v901 = vld [vmem:[%s173] sm:$0xff]
      %v902 = vld [vmem:[%s173 + $0x8] sm:$0xff]
      %v903 = vlaneseq
      %v904 = vshrl.u32 %v903, 7
      %v905 = vsub.s32 0, %v904
      %v906 = vrot.slane %v900, %v905
      %v907 = vsub.f32 %v906, %v901
      %v908 = vsub.f32 %v906, %v902
      %v909 = vmul.f32 %v907, 10.0
      %v910 = vmul.f32 %v908, 10.0
      %v911 = vmax.f32 %v898, %v909
      %v912 = vmax.f32 %v899, %v910
      %v913 = vld [vmem:[#allocation2 + $0x4] sm:$0x1]
      %v914 = vld [vmem:[%s213] sm:$0xff]
      %v915 = vld [vmem:[%s213 + $0x8] sm:$0xff]
      %v916 = vlaneseq
      %v917 = vshrl.u32 %v916, 7
      %v918 = vsub.s32 0, %v917
      %v919 = vrot.slane %v913, %v918
      %v920 = vsub.f32 %v919, %v914
      %v921 = vsub.f32 %v919, %v915
      %v922 = vmul.f32 %v920, 10.0
      %v923 = vmul.f32 %v921, 10.0
      %v924 = vmax.f32 %v911, %v922
      %v925 = vmax.f32 %v912, %v923
      %v926 = vld [vmem:[#allocation2 + $0x5] sm:$0x1]
      %v927 = vld [vmem:[%s253] sm:$0xff]
      %v928 = vld [vmem:[%s253 + $0x8] sm:$0xff]
      %v929 = vlaneseq
      %v930 = vshrl.u32 %v929, 7
      %v931 = vsub.s32 0, %v930
      %v932 = vrot.slane %v926, %v931
      %v933 = vsub.f32 %v932, %v927
      %v934 = vsub.f32 %v932, %v928
      %v935 = vmul.f32 %v933, 10.0
      %v936 = vmul.f32 %v934, 10.0
      %v937 = vmax.f32 %v924, %v935
      %v938 = vmax.f32 %v925, %v936
      %v939 = vld [vmem:[#allocation2 + $0x6] sm:$0x1]
      %v940 = vld [vmem:[%s293] sm:$0xff]
      %v941 = vld [vmem:[%s293 + $0x8] sm:$0xff]
      %v942 = vlaneseq
      %v943 = vshrl.u32 %v942, 7
      %v944 = vsub.s32 0, %v943
      %v945 = vrot.slane %v939, %v944
      %v946 = vsub.f32 %v945, %v940
      %v947 = vsub.f32 %v945, %v941
      %v948 = vmul.f32 %v946, 10.0
      %v949 = vmul.f32 %v947, 10.0
      %v950 = vmax.f32 %v937, %v948
      %v951 = vmax.f32 %v938, %v949
      %v952 = vld [vmem:[#allocation2 + $0x7] sm:$0x1]
      %v953 = vld [vmem:[%s333] sm:$0xff]
      %v954 = vld [vmem:[%s333 + $0x8] sm:$0xff]
      %v955 = vlaneseq
      %v956 = vshrl.u32 %v955, 7
      %v957 = vsub.s32 0, %v956
      %v958 = vrot.slane %v952, %v957
      %v959 = vsub.f32 %v958, %v953
      %v960 = vsub.f32 %v958, %v954
      %v961 = vmul.f32 %v959, 10.0
      %v962 = vmul.f32 %v960, 10.0
      %v963 = vmax.f32 %v950, %v961
      %v964 = vmax.f32 %v951, %v962
      %v965 = vsub.f32 %v872, %v963
      %v966 = vsub.f32 %v873, %v964
      %v967 = vmul.f32 %v965, 1.442695
      %v968 = vpow.pop %v967
      %v969 = vmul.f32 %v966, 1.442695
      %v970 = vpow.pop %v969
      %v971 = vadd.f32 %v968, 0.0
      %v972 = vadd.f32 %v970, 0.0
      %v973 = vsub.f32 %v883, %v963
      %v974 = vsub.f32 %v884, %v964
      %v975 = vmul.f32 %v973, 1.442695
      %v976 = vpow.pop %v975
      %v977 = vmul.f32 %v974, 1.442695
      %v978 = vpow.pop %v977
      %v979 = vadd.f32 %v971, %v976
      %v980 = vadd.f32 %v972, %v978
      %v981 = vsub.f32 %v896, %v963
      %v982 = vsub.f32 %v897, %v964
      %v983 = vmul.f32 %v981, 1.442695
      %v984 = vpow.pop %v983
      %v985 = vmul.f32 %v982, 1.442695
      %v986 = vpow.pop %v985
      %v987 = vadd.f32 %v979, %v984
      %v988 = vadd.f32 %v980, %v986
      %v989 = vsub.f32 %v909, %v963
      %v990 = vsub.f32 %v910, %v964
      %v991 = vmul.f32 %v989, 1.442695
      %v992 = vpow.pop %v991
      %v993 = vmul.f32 %v990, 1.442695
      %v994 = vpow.pop %v993
      %v995 = vadd.f32 %v987, %v992
      %v996 = vadd.f32 %v988, %v994
      %v997 = vsub.f32 %v922, %v963
      %v998 = vsub.f32 %v923, %v964
      %v999 = vmul.f32 %v997, 1.442695
      %v1000 = vpow.pop %v999
      %v1001 = vmul.f32 %v998, 1.442695
      %v1002 = vpow.pop %v1001
      %v1003 = vadd.f32 %v995, %v1000
      %v1004 = vadd.f32 %v996, %v1002
      %v1005 = vsub.f32 %v935, %v963
      %v1006 = vsub.f32 %v936, %v964
      %v1007 = vmul.f32 %v1005, 1.442695
      %v1008 = vpow.pop %v1007
      %v1009 = vmul.f32 %v1006, 1.442695
      %v1010 = vpow.pop %v1009
      %v1011 = vadd.f32 %v1003, %v1008
      %v1012 = vadd.f32 %v1004, %v1010
      %v1013 = vsub.f32 %v948, %v963
      %v1014 = vsub.f32 %v949, %v964
      %v1015 = vmul.f32 %v1013, 1.442695
      %v1016 = vpow.pop %v1015
      %v1017 = vmul.f32 %v1014, 1.442695
      %v1018 = vpow.pop %v1017
      %v1019 = vadd.f32 %v1011, %v1016
      %v1020 = vadd.f32 %v1012, %v1018
      %v1021 = vsub.f32 %v961, %v963
      %v1022 = vsub.f32 %v962, %v964
      %v1023 = vmul.f32 %v1021, 1.442695
      %v1024 = vpow.pop %v1023
      %v1025 = vmul.f32 %v1022, 1.442695
      %v1026 = vpow.pop %v1025
      %v1027 = vadd.f32 %v1019, %v1024
      %v1028 = vadd.f32 %v1020, %v1026
      %v1029 = vld [vmem:[#allocation6] sm:$0xff]
      %v1030 = vld [vmem:[#allocation6 + $0x8] sm:$0xff]
      %v1031 = vlog2.pop %v1027
      %v1032 = vmul.f32 %v1031, 0.6931472
      %v1033 = vlog2.pop %v1028
      %v1034 = vmul.f32 %v1033, 0.6931472
      %v1035 = vadd.f32 %v963, %v1032
      %v1036 = vadd.f32 %v964, %v1034
      %v1037 = vmul.f32 %v1035, 0.1
      %v1038 = vmul.f32 %v1036, 0.1
      %v1039 = vsub.f32 %v1029, %v1037
      %v1040 = vsub.f32 %v1030, %v1038
      %1041 = vst.msk [vmem:[#allocation3] sm:$0xff] %vm22, %v1039
      %1042 = vst.msk [vmem:[#allocation3 + $0x8] sm:$0xff] %vm22, %v1040
      %v1043 = vld [vmem:[#allocation3] sm:$0xff]
      %v1044 = vld [vmem:[#allocation3 + $0x8] sm:$0xff]
      %v1045 = vld [vmem:[%s2] sm:$0xff]
      %v1046 = vld [vmem:[%s2 + $0x8] sm:$0xff]
      %v1047 = vsub.f32 %v1043, %v1045
      %v1048 = vsub.f32 %v1044, %v1046
      %v1049 = vmul.f32 %v1047, 10.0
      %v1050 = vmul.f32 %v1048, 10.0
      %v1051 = vsel %vm22, %v1049, -inf
      %v1052 = vsel %vm22, %v1050, -inf
      %v1053 = vmax.f32 %v1051, %v1052
      %v1054 = vrot.slane %v1053, 4
      %v1055 = vmax.f32 %v1053, %v1054
      %v1056 = vrot.slane %v1055, 2
      %v1057 = vmax.f32 %v1055, %v1056
      %v1058 = vrot.slane %v1057, 1
      %v1059 = vmax.f32 %v1057, %v1058
      %v1060 = vsub.f32 %v1049, %v1059
      %v1061 = vsub.f32 %v1050, %v1059
      %v1062 = vmul.f32 %v1060, 1.442695
      %v1063 = vpow.pop %v1062
      %v1064 = vmul.f32 %v1061, 1.442695
      %v1065 = vpow.pop %v1064
      %v1066 = vsel %vm22, %v1063, 0.0
      %v1067 = vsel %vm22, %v1065, 0.0
      %v1068 = vadd.f32 %v1066, %v1067
      %v1069 = vrot.slane %v1068, 4
      %v1070 = vadd.f32 %v1068, %v1069
      %v1071 = vrot.slane %v1070, 2
      %v1072 = vadd.f32 %v1070, %v1071
      %v1073 = vrot.slane %v1072, 1
      %v1074 = vadd.f32 %v1072, %v1073
      %v1075 = vlog2.pop %v1074
      %v1076 = vmul.f32 %v1075, 0.6931472
      %v1077 = vadd.f32 %v1059, %v1076
      %v1078 = vld [vmem:[#allocation5] sm:$0x1]
      %v1079 = vmul.f32 %v1077, 0.1
      %v1080 = vsub.f32 %v1078, %v1079
      %1081 = vst.msk [vmem:[#allocation2] sm:$0x1] %vm89, %v1080
      %v1082 = vld [vmem:[#allocation3] sm:$0xff]
      %v1083 = vld [vmem:[#allocation3 + $0x8] sm:$0xff]
      %v1084 = vld [vmem:[%s93] sm:$0xff]
      %v1085 = vld [vmem:[%s93 + $0x8] sm:$0xff]
      %v1086 = vsub.f32 %v1082, %v1084
      %v1087 = vsub.f32 %v1083, %v1085
      %v1088 = vmul.f32 %v1086, 10.0
      %v1089 = vmul.f32 %v1087, 10.0
      %v1090 = vsel %vm22, %v1088, -inf
      %v1091 = vsel %vm22, %v1089, -inf
      %v1092 = vmax.f32 %v1090, %v1091
      %v1093 = vrot.slane %v1092, 4
      %v1094 = vmax.f32 %v1092, %v1093
      %v1095 = vrot.slane %v1094, 2
      %v1096 = vmax.f32 %v1094, %v1095
      %v1097 = vrot.slane %v1096, 1
      %v1098 = vmax.f32 %v1096, %v1097
      %v1099 = vsub.f32 %v1088, %v1098
      %v1100 = vsub.f32 %v1089, %v1098
      %v1101 = vmul.f32 %v1099, 1.442695
      %v1102 = vpow.pop %v1101
      %v1103 = vmul.f32 %v1100, 1.442695
      %v1104 = vpow.pop %v1103
      %v1105 = vsel %vm22, %v1102, 0.0
      %v1106 = vsel %vm22, %v1104, 0.0
      %v1107 = vadd.f32 %v1105, %v1106
      %v1108 = vrot.slane %v1107, 4
      %v1109 = vadd.f32 %v1107, %v1108
      %v1110 = vrot.slane %v1109, 2
      %v1111 = vadd.f32 %v1109, %v1110
      %v1112 = vrot.slane %v1111, 1
      %v1113 = vadd.f32 %v1111, %v1112
      %v1114 = vlog2.pop %v1113
      %v1115 = vmul.f32 %v1114, 0.6931472
      %v1116 = vadd.f32 %v1098, %v1115
      %v1117 = vld [vmem:[#allocation5 + $0x1] sm:$0x1]
      %v1118 = vmul.f32 %v1116, 0.1
      %v1119 = vsub.f32 %v1117, %v1118
      %1120 = vst.msk [vmem:[#allocation2 + $0x1] sm:$0x1] %vm89, %v1119
      %v1121 = vld [vmem:[#allocation3] sm:$0xff]
      %v1122 = vld [vmem:[#allocation3 + $0x8] sm:$0xff]
      %v1123 = vld [vmem:[%s133] sm:$0xff]
      %v1124 = vld [vmem:[%s133 + $0x8] sm:$0xff]
      %v1125 = vsub.f32 %v1121, %v1123
      %v1126 = vsub.f32 %v1122, %v1124
      %v1127 = vmul.f32 %v1125, 10.0
      %v1128 = vmul.f32 %v1126, 10.0
      %v1129 = vsel %vm22, %v1127, -inf
      %v1130 = vsel %vm22, %v1128, -inf
      %v1131 = vmax.f32 %v1129, %v1130
      %v1132 = vrot.slane %v1131, 4
      %v1133 = vmax.f32 %v1131, %v1132
      %v1134 = vrot.slane %v1133, 2
      %v1135 = vmax.f32 %v1133, %v1134
      %v1136 = vrot.slane %v1135, 1
      %v1137 = vmax.f32 %v1135, %v1136
      %v1138 = vsub.f32 %v1127, %v1137
      %v1139 = vsub.f32 %v1128, %v1137
      %v1140 = vmul.f32 %v1138, 1.442695
      %v1141 = vpow.pop %v1140
      %v1142 = vmul.f32 %v1139, 1.442695
      %v1143 = vpow.pop %v1142
      %v1144 = vsel %vm22, %v1141, 0.0
      %v1145 = vsel %vm22, %v1143, 0.0
      %v1146 = vadd.f32 %v1144, %v1145
      %v1147 = vrot.slane %v1146, 4
      %v1148 = vadd.f32 %v1146, %v1147
      %v1149 = vrot.slane %v1148, 2
      %v1150 = vadd.f32 %v1148, %v1149
      %v1151 = vrot.slane %v1150, 1
      %v1152 = vadd.f32 %v1150, %v1151
      %v1153 = vlog2.pop %v1152
      %v1154 = vmul.f32 %v1153, 0.6931472
      %v1155 = vadd.f32 %v1137, %v1154
      %v1156 = vld [vmem:[#allocation5 + $0x2] sm:$0x1]
      %v1157 = vmul.f32 %v1155, 0.1
      %v1158 = vsub.f32 %v1156, %v1157
      %1159 = vst.msk [vmem:[#allocation2 + $0x2] sm:$0x1] %vm89, %v1158
      %v1160 = vld [vmem:[#allocation3] sm:$0xff]
      %v1161 = vld [vmem:[#allocation3 + $0x8] sm:$0xff]
      %v1162 = vld [vmem:[%s173] sm:$0xff]
      %v1163 = vld [vmem:[%s173 + $0x8] sm:$0xff]
      %v1164 = vsub.f32 %v1160, %v1162
      %v1165 = vsub.f32 %v1161, %v1163
      %v1166 = vmul.f32 %v1164, 10.0
      %v1167 = vmul.f32 %v1165, 10.0
      %v1168 = vsel %vm22, %v1166, -inf
      %v1169 = vsel %vm22, %v1167, -inf
      %v1170 = vmax.f32 %v1168, %v1169
      %v1171 = vrot.slane %v1170, 4
      %v1172 = vmax.f32 %v1170, %v1171
      %v1173 = vrot.slane %v1172, 2
      %v1174 = vmax.f32 %v1172, %v1173
      %v1175 = vrot.slane %v1174, 1
      %v1176 = vmax.f32 %v1174, %v1175
      %v1177 = vsub.f32 %v1166, %v1176
      %v1178 = vsub.f32 %v1167, %v1176
      %v1179 = vmul.f32 %v1177, 1.442695
      %v1180 = vpow.pop %v1179
      %v1181 = vmul.f32 %v1178, 1.442695
      %v1182 = vpow.pop %v1181
      %v1183 = vsel %vm22, %v1180, 0.0
      %v1184 = vsel %vm22, %v1182, 0.0
      %v1185 = vadd.f32 %v1183, %v1184
      %v1186 = vrot.slane %v1185, 4
      %v1187 = vadd.f32 %v1185, %v1186
      %v1188 = vrot.slane %v1187, 2
      %v1189 = vadd.f32 %v1187, %v1188
      %v1190 = vrot.slane %v1189, 1
      %v1191 = vadd.f32 %v1189, %v1190
      %v1192 = vlog2.pop %v1191
      %v1193 = vmul.f32 %v1192, 0.6931472
      %v1194 = vadd.f32 %v1176, %v1193
      %v1195 = vld [vmem:[#allocation5 + $0x3] sm:$0x1]
      %v1196 = vmul.f32 %v1194, 0.1
      %v1197 = vsub.f32 %v1195, %v1196
      %1198 = vst.msk [vmem:[#allocation2 + $0x3] sm:$0x1] %vm89, %v1197
      %v1199 = vld [vmem:[#allocation3] sm:$0xff]
      %v1200 = vld [vmem:[#allocation3 + $0x8] sm:$0xff]
      %v1201 = vld [vmem:[%s213] sm:$0xff]
      %v1202 = vld [vmem:[%s213 + $0x8] sm:$0xff]
      %v1203 = vsub.f32 %v1199, %v1201
      %v1204 = vsub.f32 %v1200, %v1202
      %v1205 = vmul.f32 %v1203, 10.0
      %v1206 = vmul.f32 %v1204, 10.0
      %v1207 = vsel %vm22, %v1205, -inf
      %v1208 = vsel %vm22, %v1206, -inf
      %v1209 = vmax.f32 %v1207, %v1208
      %v1210 = vrot.slane %v1209, 4
      %v1211 = vmax.f32 %v1209, %v1210
      %v1212 = vrot.slane %v1211, 2
      %v1213 = vmax.f32 %v1211, %v1212
      %v1214 = vrot.slane %v1213, 1
      %v1215 = vmax.f32 %v1213, %v1214
      %v1216 = vsub.f32 %v1205, %v1215
      %v1217 = vsub.f32 %v1206, %v1215
      %v1218 = vmul.f32 %v1216, 1.442695
      %v1219 = vpow.pop %v1218
      %v1220 = vmul.f32 %v1217, 1.442695
      %v1221 = vpow.pop %v1220
      %v1222 = vsel %vm22, %v1219, 0.0
      %v1223 = vsel %vm22, %v1221, 0.0
      %v1224 = vadd.f32 %v1222, %v1223
      %v1225 = vrot.slane %v1224, 4
      %v1226 = vadd.f32 %v1224, %v1225
      %v1227 = vrot.slane %v1226, 2
      %v1228 = vadd.f32 %v1226, %v1227
      %v1229 = vrot.slane %v1228, 1
      %v1230 = vadd.f32 %v1228, %v1229
      %v1231 = vlog2.pop %v1230
      %v1232 = vmul.f32 %v1231, 0.6931472
      %v1233 = vadd.f32 %v1215, %v1232
      %v1234 = vld [vmem:[#allocation5 + $0x4] sm:$0x1]
      %v1235 = vmul.f32 %v1233, 0.1
      %v1236 = vsub.f32 %v1234, %v1235
      %1237 = vst.msk [vmem:[#allocation2 + $0x4] sm:$0x1] %vm89, %v1236
      %v1238 = vld [vmem:[#allocation3] sm:$0xff]
      %v1239 = vld [vmem:[#allocation3 + $0x8] sm:$0xff]
      %v1240 = vld [vmem:[%s253] sm:$0xff]
      %v1241 = vld [vmem:[%s253 + $0x8] sm:$0xff]
      %v1242 = vsub.f32 %v1238, %v1240
      %v1243 = vsub.f32 %v1239, %v1241
      %v1244 = vmul.f32 %v1242, 10.0
      %v1245 = vmul.f32 %v1243, 10.0
      %v1246 = vsel %vm22, %v1244, -inf
      %v1247 = vsel %vm22, %v1245, -inf
      %v1248 = vmax.f32 %v1246, %v1247
      %v1249 = vrot.slane %v1248, 4
      %v1250 = vmax.f32 %v1248, %v1249
      %v1251 = vrot.slane %v1250, 2
      %v1252 = vmax.f32 %v1250, %v1251
      %v1253 = vrot.slane %v1252, 1
      %v1254 = vmax.f32 %v1252, %v1253
      %v1255 = vsub.f32 %v1244, %v1254
      %v1256 = vsub.f32 %v1245, %v1254
      %v1257 = vmul.f32 %v1255, 1.442695
      %v1258 = vpow.pop %v1257
      %v1259 = vmul.f32 %v1256, 1.442695
      %v1260 = vpow.pop %v1259
      %v1261 = vsel %vm22, %v1258, 0.0
      %v1262 = vsel %vm22, %v1260, 0.0
      %v1263 = vadd.f32 %v1261, %v1262
      %v1264 = vrot.slane %v1263, 4
      %v1265 = vadd.f32 %v1263, %v1264
      %v1266 = vrot.slane %v1265, 2
      %v1267 = vadd.f32 %v1265, %v1266
      %v1268 = vrot.slane %v1267, 1
      %v1269 = vadd.f32 %v1267, %v1268
      %v1270 = vlog2.pop %v1269
      %v1271 = vmul.f32 %v1270, 0.6931472
      %v1272 = vadd.f32 %v1254, %v1271
      %v1273 = vld [vmem:[#allocation5 + $0x5] sm:$0x1]
      %v1274 = vmul.f32 %v1272, 0.1
      %v1275 = vsub.f32 %v1273, %v1274
      %1276 = vst.msk [vmem:[#allocation2 + $0x5] sm:$0x1] %vm89, %v1275
      %v1277 = vld [vmem:[#allocation3] sm:$0xff]
      %v1278 = vld [vmem:[#allocation3 + $0x8] sm:$0xff]
      %v1279 = vld [vmem:[%s293] sm:$0xff]
      %v1280 = vld [vmem:[%s293 + $0x8] sm:$0xff]
      %v1281 = vsub.f32 %v1277, %v1279
      %v1282 = vsub.f32 %v1278, %v1280
      %v1283 = vmul.f32 %v1281, 10.0
      %v1284 = vmul.f32 %v1282, 10.0
      %v1285 = vsel %vm22, %v1283, -inf
      %v1286 = vsel %vm22, %v1284, -inf
      %v1287 = vmax.f32 %v1285, %v1286
      %v1288 = vrot.slane %v1287, 4
      %v1289 = vmax.f32 %v1287, %v1288
      %v1290 = vrot.slane %v1289, 2
      %v1291 = vmax.f32 %v1289, %v1290
      %v1292 = vrot.slane %v1291, 1
      %v1293 = vmax.f32 %v1291, %v1292
      %v1294 = vsub.f32 %v1283, %v1293
      %v1295 = vsub.f32 %v1284, %v1293
      %v1296 = vmul.f32 %v1294, 1.442695
      %v1297 = vpow.pop %v1296
      %v1298 = vmul.f32 %v1295, 1.442695
      %v1299 = vpow.pop %v1298
      %v1300 = vsel %vm22, %v1297, 0.0
      %v1301 = vsel %vm22, %v1299, 0.0
      %v1302 = vadd.f32 %v1300, %v1301
      %v1303 = vrot.slane %v1302, 4
      %v1304 = vadd.f32 %v1302, %v1303
      %v1305 = vrot.slane %v1304, 2
      %v1306 = vadd.f32 %v1304, %v1305
      %v1307 = vrot.slane %v1306, 1
      %v1308 = vadd.f32 %v1306, %v1307
      %v1309 = vlog2.pop %v1308
      %v1310 = vmul.f32 %v1309, 0.6931472
      %v1311 = vadd.f32 %v1293, %v1310
      %v1312 = vld [vmem:[#allocation5 + $0x6] sm:$0x1]
      %v1313 = vmul.f32 %v1311, 0.1
      %v1314 = vsub.f32 %v1312, %v1313
      %1315 = vst.msk [vmem:[#allocation2 + $0x6] sm:$0x1] %vm89, %v1314
      %v1316 = vld [vmem:[#allocation3] sm:$0xff]
      %v1317 = vld [vmem:[#allocation3 + $0x8] sm:$0xff]
      %v1318 = vld [vmem:[%s333] sm:$0xff]
      %v1319 = vld [vmem:[%s333 + $0x8] sm:$0xff]
      %v1320 = vsub.f32 %v1316, %v1318
      %v1321 = vsub.f32 %v1317, %v1319
      %v1322 = vmul.f32 %v1320, 10.0
      %v1323 = vmul.f32 %v1321, 10.0
      %v1324 = vsel %vm22, %v1322, -inf
      %v1325 = vsel %vm22, %v1323, -inf
      %v1326 = vmax.f32 %v1324, %v1325
      %v1327 = vrot.slane %v1326, 4
      %v1328 = vmax.f32 %v1326, %v1327
      %v1329 = vrot.slane %v1328, 2
      %v1330 = vmax.f32 %v1328, %v1329
      %v1331 = vrot.slane %v1330, 1
      %v1332 = vmax.f32 %v1330, %v1331
      %v1333 = vsub.f32 %v1322, %v1332
      %v1334 = vsub.f32 %v1323, %v1332
      %v1335 = vmul.f32 %v1333, 1.442695
      %v1336 = vpow.pop %v1335
      %v1337 = vmul.f32 %v1334, 1.442695
      %v1338 = vpow.pop %v1337
      %v1339 = vsel %vm22, %v1336, 0.0
      %v1340 = vsel %vm22, %v1338, 0.0
      %v1341 = vadd.f32 %v1339, %v1340
      %v1342 = vrot.slane %v1341, 4
      %v1343 = vadd.f32 %v1341, %v1342
      %v1344 = vrot.slane %v1343, 2
      %v1345 = vadd.f32 %v1343, %v1344
      %v1346 = vrot.slane %v1345, 1
      %v1347 = vadd.f32 %v1345, %v1346
      %v1348 = vlog2.pop %v1347
      %v1349 = vmul.f32 %v1348, 0.6931472
      %v1350 = vadd.f32 %v1332, %v1349
      %v1351 = vld [vmem:[#allocation5 + $0x7] sm:$0x1]
      %v1352 = vmul.f32 %v1350, 0.1
      %v1353 = vsub.f32 %v1351, %v1352
      %1354 = vst.msk [vmem:[#allocation2 + $0x7] sm:$0x1] %vm89, %v1353
      %v1355 = vld [vmem:[#allocation2] sm:$0x1]
      %v1356 = vld [vmem:[%s2] sm:$0xff]
      %v1357 = vld [vmem:[%s2 + $0x8] sm:$0xff]
      %v1358 = vlaneseq
      %v1359 = vshrl.u32 %v1358, 7
      %v1360 = vsub.s32 0, %v1359
      %v1361 = vrot.slane %v1355, %v1360
      %v1362 = vsub.f32 %v1361, %v1356
      %v1363 = vsub.f32 %v1361, %v1357
      %v1364 = vmul.f32 %v1362, 10.0
      %v1365 = vmul.f32 %v1363, 10.0
      %v1366 = vld [vmem:[#allocation2 + $0x1] sm:$0x1]
      %v1367 = vld [vmem:[%s93] sm:$0xff]
      %v1368 = vld [vmem:[%s93 + $0x8] sm:$0xff]
      %v1369 = vlaneseq
      %v1370 = vshrl.u32 %v1369, 7
      %v1371 = vsub.s32 0, %v1370
      %v1372 = vrot.slane %v1366, %v1371
      %v1373 = vsub.f32 %v1372, %v1367
      %v1374 = vsub.f32 %v1372, %v1368
      %v1375 = vmul.f32 %v1373, 10.0
      %v1376 = vmul.f32 %v1374, 10.0
      %v1377 = vmax.f32 %v1364, %v1375
      %v1378 = vmax.f32 %v1365, %v1376
      %v1379 = vld [vmem:[#allocation2 + $0x2] sm:$0x1]
      %v1380 = vld [vmem:[%s133] sm:$0xff]
      %v1381 = vld [vmem:[%s133 + $0x8] sm:$0xff]
      %v1382 = vlaneseq
      %v1383 = vshrl.u32 %v1382, 7
      %v1384 = vsub.s32 0, %v1383
      %v1385 = vrot.slane %v1379, %v1384
      %v1386 = vsub.f32 %v1385, %v1380
      %v1387 = vsub.f32 %v1385, %v1381
      %v1388 = vmul.f32 %v1386, 10.0
      %v1389 = vmul.f32 %v1387, 10.0
      %v1390 = vmax.f32 %v1377, %v1388
      %v1391 = vmax.f32 %v1378, %v1389
      %v1392 = vld [vmem:[#allocation2 + $0x3] sm:$0x1]
      %v1393 = vld [vmem:[%s173] sm:$0xff]
      %v1394 = vld [vmem:[%s173 + $0x8] sm:$0xff]
      %v1395 = vlaneseq
      %v1396 = vshrl.u32 %v1395, 7
      %v1397 = vsub.s32 0, %v1396
      %v1398 = vrot.slane %v1392, %v1397
      %v1399 = vsub.f32 %v1398, %v1393
      %v1400 = vsub.f32 %v1398, %v1394
      %v1401 = vmul.f32 %v1399, 10.0
      %v1402 = vmul.f32 %v1400, 10.0
      %v1403 = vmax.f32 %v1390, %v1401
      %v1404 = vmax.f32 %v1391, %v1402
      %v1405 = vld [vmem:[#allocation2 + $0x4] sm:$0x1]
      %v1406 = vld [vmem:[%s213] sm:$0xff]
      %v1407 = vld [vmem:[%s213 + $0x8] sm:$0xff]
      %v1408 = vlaneseq
      %v1409 = vshrl.u32 %v1408, 7
      %v1410 = vsub.s32 0, %v1409
      %v1411 = vrot.slane %v1405, %v1410
      %v1412 = vsub.f32 %v1411, %v1406
      %v1413 = vsub.f32 %v1411, %v1407
      %v1414 = vmul.f32 %v1412, 10.0
      %v1415 = vmul.f32 %v1413, 10.0
      %v1416 = vmax.f32 %v1403, %v1414
      %v1417 = vmax.f32 %v1404, %v1415
      %v1418 = vld [vmem:[#allocation2 + $0x5] sm:$0x1]
      %v1419 = vld [vmem:[%s253] sm:$0xff]
      %v1420 = vld [vmem:[%s253 + $0x8] sm:$0xff]
      %v1421 = vlaneseq
      %v1422 = vshrl.u32 %v1421, 7
      %v1423 = vsub.s32 0, %v1422
      %v1424 = vrot.slane %v1418, %v1423
      %v1425 = vsub.f32 %v1424, %v1419
      %v1426 = vsub.f32 %v1424, %v1420
      %v1427 = vmul.f32 %v1425, 10.0
      %v1428 = vmul.f32 %v1426, 10.0
      %v1429 = vmax.f32 %v1416, %v1427
      %v1430 = vmax.f32 %v1417, %v1428
      %v1431 = vld [vmem:[#allocation2 + $0x6] sm:$0x1]
      %v1432 = vld [vmem:[%s293] sm:$0xff]
      %v1433 = vld [vmem:[%s293 + $0x8] sm:$0xff]
      %v1434 = vlaneseq
      %v1435 = vshrl.u32 %v1434, 7
      %v1436 = vsub.s32 0, %v1435
      %v1437 = vrot.slane %v1431, %v1436
      %v1438 = vsub.f32 %v1437, %v1432
      %v1439 = vsub.f32 %v1437, %v1433
      %v1440 = vmul.f32 %v1438, 10.0
      %v1441 = vmul.f32 %v1439, 10.0
      %v1442 = vmax.f32 %v1429, %v1440
      %v1443 = vmax.f32 %v1430, %v1441
      %v1444 = vld [vmem:[#allocation2 + $0x7] sm:$0x1]
      %v1445 = vld [vmem:[%s333] sm:$0xff]
      %v1446 = vld [vmem:[%s333 + $0x8] sm:$0xff]
      %v1447 = vlaneseq
      %v1448 = vshrl.u32 %v1447, 7
      %v1449 = vsub.s32 0, %v1448
      %v1450 = vrot.slane %v1444, %v1449
      %v1451 = vsub.f32 %v1450, %v1445
      %v1452 = vsub.f32 %v1450, %v1446
      %v1453 = vmul.f32 %v1451, 10.0
      %v1454 = vmul.f32 %v1452, 10.0
      %v1455 = vmax.f32 %v1442, %v1453
      %v1456 = vmax.f32 %v1443, %v1454
      %v1457 = vsub.f32 %v1364, %v1455
      %v1458 = vsub.f32 %v1365, %v1456
      %v1459 = vmul.f32 %v1457, 1.442695
      %v1460 = vpow.pop %v1459
      %v1461 = vmul.f32 %v1458, 1.442695
      %v1462 = vpow.pop %v1461
      %v1463 = vadd.f32 %v1460, 0.0
      %v1464 = vadd.f32 %v1462, 0.0
      %v1465 = vsub.f32 %v1375, %v1455
      %v1466 = vsub.f32 %v1376, %v1456
      %v1467 = vmul.f32 %v1465, 1.442695
      %v1468 = vpow.pop %v1467
      %v1469 = vmul.f32 %v1466, 1.442695
      %v1470 = vpow.pop %v1469
      %v1471 = vadd.f32 %v1463, %v1468
      %v1472 = vadd.f32 %v1464, %v1470
      %v1473 = vsub.f32 %v1388, %v1455
      %v1474 = vsub.f32 %v1389, %v1456
      %v1475 = vmul.f32 %v1473, 1.442695
      %v1476 = vpow.pop %v1475
      %v1477 = vmul.f32 %v1474, 1.442695
      %v1478 = vpow.pop %v1477
      %v1479 = vadd.f32 %v1471, %v1476
      %v1480 = vadd.f32 %v1472, %v1478
      %v1481 = vsub.f32 %v1401, %v1455
      %v1482 = vsub.f32 %v1402, %v1456
      %v1483 = vmul.f32 %v1481, 1.442695
      %v1484 = vpow.pop %v1483
      %v1485 = vmul.f32 %v1482, 1.442695
      %v1486 = vpow.pop %v1485
      %v1487 = vadd.f32 %v1479, %v1484
      %v1488 = vadd.f32 %v1480, %v1486
      %v1489 = vsub.f32 %v1414, %v1455
      %v1490 = vsub.f32 %v1415, %v1456
      %v1491 = vmul.f32 %v1489, 1.442695
      %v1492 = vpow.pop %v1491
      %v1493 = vmul.f32 %v1490, 1.442695
      %v1494 = vpow.pop %v1493
      %v1495 = vadd.f32 %v1487, %v1492
      %v1496 = vadd.f32 %v1488, %v1494
      %v1497 = vsub.f32 %v1427, %v1455
      %v1498 = vsub.f32 %v1428, %v1456
      %v1499 = vmul.f32 %v1497, 1.442695
      %v1500 = vpow.pop %v1499
      %v1501 = vmul.f32 %v1498, 1.442695
      %v1502 = vpow.pop %v1501
      %v1503 = vadd.f32 %v1495, %v1500
      %v1504 = vadd.f32 %v1496, %v1502
      %v1505 = vsub.f32 %v1440, %v1455
      %v1506 = vsub.f32 %v1441, %v1456
      %v1507 = vmul.f32 %v1505, 1.442695
      %v1508 = vpow.pop %v1507
      %v1509 = vmul.f32 %v1506, 1.442695
      %v1510 = vpow.pop %v1509
      %v1511 = vadd.f32 %v1503, %v1508
      %v1512 = vadd.f32 %v1504, %v1510
      %v1513 = vsub.f32 %v1453, %v1455
      %v1514 = vsub.f32 %v1454, %v1456
      %v1515 = vmul.f32 %v1513, 1.442695
      %v1516 = vpow.pop %v1515
      %v1517 = vmul.f32 %v1514, 1.442695
      %v1518 = vpow.pop %v1517
      %v1519 = vadd.f32 %v1511, %v1516
      %v1520 = vadd.f32 %v1512, %v1518
      %v1521 = vld [vmem:[#allocation6] sm:$0xff]
      %v1522 = vld [vmem:[#allocation6 + $0x8] sm:$0xff]
      %v1523 = vlog2.pop %v1519
      %v1524 = vmul.f32 %v1523, 0.6931472
      %v1525 = vlog2.pop %v1520
      %v1526 = vmul.f32 %v1525, 0.6931472
      %v1527 = vadd.f32 %v1455, %v1524
      %v1528 = vadd.f32 %v1456, %v1526
      %v1529 = vmul.f32 %v1527, 0.1
      %v1530 = vmul.f32 %v1528, 0.1
      %v1531 = vsub.f32 %v1521, %v1529
      %v1532 = vsub.f32 %v1522, %v1530
      %1533 = vst.msk [vmem:[#allocation3] sm:$0xff] %vm22, %v1531
      %1534 = vst.msk [vmem:[#allocation3 + $0x8] sm:$0xff] %vm22, %v1532
      %v1535 = vld [vmem:[#allocation3] sm:$0xff]
      %v1536 = vld [vmem:[#allocation3 + $0x8] sm:$0xff]
      %v1537 = vld [vmem:[%s2] sm:$0xff]
      %v1538 = vld [vmem:[%s2 + $0x8] sm:$0xff]
      %v1539 = vsub.f32 %v1535, %v1537
      %v1540 = vsub.f32 %v1536, %v1538
      %v1541 = vmul.f32 %v1539, 10.0
      %v1542 = vmul.f32 %v1540, 10.0
      %v1543 = vsel %vm22, %v1541, -inf
      %v1544 = vsel %vm22, %v1542, -inf
      %v1545 = vmax.f32 %v1543, %v1544
      %v1546 = vrot.slane %v1545, 4
      %v1547 = vmax.f32 %v1545, %v1546
      %v1548 = vrot.slane %v1547, 2
      %v1549 = vmax.f32 %v1547, %v1548
      %v1550 = vrot.slane %v1549, 1
      %v1551 = vmax.f32 %v1549, %v1550
      %v1552 = vsub.f32 %v1541, %v1551
      %v1553 = vsub.f32 %v1542, %v1551
      %v1554 = vmul.f32 %v1552, 1.442695
      %v1555 = vpow.pop %v1554
      %v1556 = vmul.f32 %v1553, 1.442695
      %v1557 = vpow.pop %v1556
      %v1558 = vsel %vm22, %v1555, 0.0
      %v1559 = vsel %vm22, %v1557, 0.0
      %v1560 = vadd.f32 %v1558, %v1559
      %v1561 = vrot.slane %v1560, 4
      %v1562 = vadd.f32 %v1560, %v1561
      %v1563 = vrot.slane %v1562, 2
      %v1564 = vadd.f32 %v1562, %v1563
      %v1565 = vrot.slane %v1564, 1
      %v1566 = vadd.f32 %v1564, %v1565
      %v1567 = vlog2.pop %v1566
      %v1568 = vmul.f32 %v1567, 0.6931472
      %v1569 = vadd.f32 %v1551, %v1568
      %v1570 = vld [vmem:[#allocation5] sm:$0x1]
      %v1571 = vmul.f32 %v1569, 0.1
      %v1572 = vsub.f32 %v1570, %v1571
      %1573 = vst.msk [vmem:[#allocation2] sm:$0x1] %vm89, %v1572
      %v1574 = vld [vmem:[#allocation3] sm:$0xff]
      %v1575 = vld [vmem:[#allocation3 + $0x8] sm:$0xff]
      %v1576 = vld [vmem:[%s93] sm:$0xff]
      %v1577 = vld [vmem:[%s93 + $0x8] sm:$0xff]
      %v1578 = vsub.f32 %v1574, %v1576
      %v1579 = vsub.f32 %v1575, %v1577
      %v1580 = vmul.f32 %v1578, 10.0
      %v1581 = vmul.f32 %v1579, 10.0
      %v1582 = vsel %vm22, %v1580, -inf
      %v1583 = vsel %vm22, %v1581, -inf
      %v1584 = vmax.f32 %v1582, %v1583
      %v1585 = vrot.slane %v1584, 4
      %v1586 = vmax.f32 %v1584, %v1585
      %v1587 = vrot.slane %v1586, 2
      %v1588 = vmax.f32 %v1586, %v1587
      %v1589 = vrot.slane %v1588, 1
      %v1590 = vmax.f32 %v1588, %v1589
      %v1591 = vsub.f32 %v1580, %v1590
      %v1592 = vsub.f32 %v1581, %v1590
      %v1593 = vmul.f32 %v1591, 1.442695
      %v1594 = vpow.pop %v1593
      %v1595 = vmul.f32 %v1592, 1.442695
      %v1596 = vpow.pop %v1595
      %v1597 = vsel %vm22, %v1594, 0.0
      %v1598 = vsel %vm22, %v1596, 0.0
      %v1599 = vadd.f32 %v1597, %v1598
      %v1600 = vrot.slane %v1599, 4
      %v1601 = vadd.f32 %v1599, %v1600
      %v1602 = vrot.slane %v1601, 2
      %v1603 = vadd.f32 %v1601, %v1602
      %v1604 = vrot.slane %v1603, 1
      %v1605 = vadd.f32 %v1603, %v1604
      %v1606 = vlog2.pop %v1605
      %v1607 = vmul.f32 %v1606, 0.6931472
      %v1608 = vadd.f32 %v1590, %v1607
      %v1609 = vld [vmem:[#allocation5 + $0x1] sm:$0x1]
      %v1610 = vmul.f32 %v1608, 0.1
      %v1611 = vsub.f32 %v1609, %v1610
      %1612 = vst.msk [vmem:[#allocation2 + $0x1] sm:$0x1] %vm89, %v1611
      %v1613 = vld [vmem:[#allocation3] sm:$0xff]
      %v1614 = vld [vmem:[#allocation3 + $0x8] sm:$0xff]
      %v1615 = vld [vmem:[%s133] sm:$0xff]
      %v1616 = vld [vmem:[%s133 + $0x8] sm:$0xff]
      %v1617 = vsub.f32 %v1613, %v1615
      %v1618 = vsub.f32 %v1614, %v1616
      %v1619 = vmul.f32 %v1617, 10.0
      %v1620 = vmul.f32 %v1618, 10.0
      %v1621 = vsel %vm22, %v1619, -inf
      %v1622 = vsel %vm22, %v1620, -inf
      %v1623 = vmax.f32 %v1621, %v1622
      %v1624 = vrot.slane %v1623, 4
      %v1625 = vmax.f32 %v1623, %v1624
      %v1626 = vrot.slane %v1625, 2
      %v1627 = vmax.f32 %v1625, %v1626
      %v1628 = vrot.slane %v1627, 1
      %v1629 = vmax.f32 %v1627, %v1628
      %v1630 = vsub.f32 %v1619, %v1629
      %v1631 = vsub.f32 %v1620, %v1629
      %v1632 = vmul.f32 %v1630, 1.442695
      %v1633 = vpow.pop %v1632
      %v1634 = vmul.f32 %v1631, 1.442695
      %v1635 = vpow.pop %v1634
      %v1636 = vsel %vm22, %v1633, 0.0
      %v1637 = vsel %vm22, %v1635, 0.0
      %v1638 = vadd.f32 %v1636, %v1637
      %v1639 = vrot.slane %v1638, 4
      %v1640 = vadd.f32 %v1638, %v1639
      %v1641 = vrot.slane %v1640, 2
      %v1642 = vadd.f32 %v1640, %v1641
      %v1643 = vrot.slane %v1642, 1
      %v1644 = vadd.f32 %v1642, %v1643
      %v1645 = vlog2.pop %v1644
      %v1646 = vmul.f32 %v1645, 0.6931472
      %v1647 = vadd.f32 %v1629, %v1646
      %v1648 = vld [vmem:[#allocation5 + $0x2] sm:$0x1]
      %v1649 = vmul.f32 %v1647, 0.1
      %v1650 = vsub.f32 %v1648, %v1649
      %1651 = vst.msk [vmem:[#allocation2 + $0x2] sm:$0x1] %vm89, %v1650
      %v1652 = vld [vmem:[#allocation3] sm:$0xff]
      %v1653 = vld [vmem:[#allocation3 + $0x8] sm:$0xff]
      %v1654 = vld [vmem:[%s173] sm:$0xff]
      %v1655 = vld [vmem:[%s173 + $0x8] sm:$0xff]
      %v1656 = vsub.f32 %v1652, %v1654
      %v1657 = vsub.f32 %v1653, %v1655
      %v1658 = vmul.f32 %v1656, 10.0
      %v1659 = vmul.f32 %v1657, 10.0
      %v1660 = vsel %vm22, %v1658, -inf
      %v1661 = vsel %vm22, %v1659, -inf
      %v1662 = vmax.f32 %v1660, %v1661
      %v1663 = vrot.slane %v1662, 4
      %v1664 = vmax.f32 %v1662, %v1663
      %v1665 = vrot.slane %v1664, 2
      %v1666 = vmax.f32 %v1664, %v1665
      %v1667 = vrot.slane %v1666, 1
      %v1668 = vmax.f32 %v1666, %v1667
      %v1669 = vsub.f32 %v1658, %v1668
      %v1670 = vsub.f32 %v1659, %v1668
      %v1671 = vmul.f32 %v1669, 1.442695
      %v1672 = vpow.pop %v1671
      %v1673 = vmul.f32 %v1670, 1.442695
      %v1674 = vpow.pop %v1673
      %v1675 = vsel %vm22, %v1672, 0.0
      %v1676 = vsel %vm22, %v1674, 0.0
      %v1677 = vadd.f32 %v1675, %v1676
      %v1678 = vrot.slane %v1677, 4
      %v1679 = vadd.f32 %v1677, %v1678
      %v1680 = vrot.slane %v1679, 2
      %v1681 = vadd.f32 %v1679, %v1680
      %v1682 = vrot.slane %v1681, 1
      %v1683 = vadd.f32 %v1681, %v1682
      %v1684 = vlog2.pop %v1683
      %v1685 = vmul.f32 %v1684, 0.6931472
      %v1686 = vadd.f32 %v1668, %v1685
      %v1687 = vld [vmem:[#allocation5 + $0x3] sm:$0x1]
      %v1688 = vmul.f32 %v1686, 0.1
      %v1689 = vsub.f32 %v1687, %v1688
      %1690 = vst.msk [vmem:[#allocation2 + $0x3] sm:$0x1] %vm89, %v1689
      %v1691 = vld [vmem:[#allocation3] sm:$0xff]
      %v1692 = vld [vmem:[#allocation3 + $0x8] sm:$0xff]
      %v1693 = vld [vmem:[%s213] sm:$0xff]
      %v1694 = vld [vmem:[%s213 + $0x8] sm:$0xff]
      %v1695 = vsub.f32 %v1691, %v1693
      %v1696 = vsub.f32 %v1692, %v1694
      %v1697 = vmul.f32 %v1695, 10.0
      %v1698 = vmul.f32 %v1696, 10.0
      %v1699 = vsel %vm22, %v1697, -inf
      %v1700 = vsel %vm22, %v1698, -inf
      %v1701 = vmax.f32 %v1699, %v1700
      %v1702 = vrot.slane %v1701, 4
      %v1703 = vmax.f32 %v1701, %v1702
      %v1704 = vrot.slane %v1703, 2
      %v1705 = vmax.f32 %v1703, %v1704
      %v1706 = vrot.slane %v1705, 1
      %v1707 = vmax.f32 %v1705, %v1706
      %v1708 = vsub.f32 %v1697, %v1707
      %v1709 = vsub.f32 %v1698, %v1707
      %v1710 = vmul.f32 %v1708, 1.442695
      %v1711 = vpow.pop %v1710
      %v1712 = vmul.f32 %v1709, 1.442695
      %v1713 = vpow.pop %v1712
      %v1714 = vsel %vm22, %v1711, 0.0
      %v1715 = vsel %vm22, %v1713, 0.0
      %v1716 = vadd.f32 %v1714, %v1715
      %v1717 = vrot.slane %v1716, 4
      %v1718 = vadd.f32 %v1716, %v1717
      %v1719 = vrot.slane %v1718, 2
      %v1720 = vadd.f32 %v1718, %v1719
      %v1721 = vrot.slane %v1720, 1
      %v1722 = vadd.f32 %v1720, %v1721
      %v1723 = vlog2.pop %v1722
      %v1724 = vmul.f32 %v1723, 0.6931472
      %v1725 = vadd.f32 %v1707, %v1724
      %v1726 = vld [vmem:[#allocation5 + $0x4] sm:$0x1]
      %v1727 = vmul.f32 %v1725, 0.1
      %v1728 = vsub.f32 %v1726, %v1727
      %1729 = vst.msk [vmem:[#allocation2 + $0x4] sm:$0x1] %vm89, %v1728
      %v1730 = vld [vmem:[#allocation3] sm:$0xff]
      %v1731 = vld [vmem:[#allocation3 + $0x8] sm:$0xff]
      %v1732 = vld [vmem:[%s253] sm:$0xff]
      %v1733 = vld [vmem:[%s253 + $0x8] sm:$0xff]
      %v1734 = vsub.f32 %v1730, %v1732
      %v1735 = vsub.f32 %v1731, %v1733
      %v1736 = vmul.f32 %v1734, 10.0
      %v1737 = vmul.f32 %v1735, 10.0
      %v1738 = vsel %vm22, %v1736, -inf
      %v1739 = vsel %vm22, %v1737, -inf
      %v1740 = vmax.f32 %v1738, %v1739
      %v1741 = vrot.slane %v1740, 4
      %v1742 = vmax.f32 %v1740, %v1741
      %v1743 = vrot.slane %v1742, 2
      %v1744 = vmax.f32 %v1742, %v1743
      %v1745 = vrot.slane %v1744, 1
      %v1746 = vmax.f32 %v1744, %v1745
      %v1747 = vsub.f32 %v1736, %v1746
      %v1748 = vsub.f32 %v1737, %v1746
      %v1749 = vmul.f32 %v1747, 1.442695
      %v1750 = vpow.pop %v1749
      %v1751 = vmul.f32 %v1748, 1.442695
      %v1752 = vpow.pop %v1751
      %v1753 = vsel %vm22, %v1750, 0.0
      %v1754 = vsel %vm22, %v1752, 0.0
      %v1755 = vadd.f32 %v1753, %v1754
      %v1756 = vrot.slane %v1755, 4
      %v1757 = vadd.f32 %v1755, %v1756
      %v1758 = vrot.slane %v1757, 2
      %v1759 = vadd.f32 %v1757, %v1758
      %v1760 = vrot.slane %v1759, 1
      %v1761 = vadd.f32 %v1759, %v1760
      %v1762 = vlog2.pop %v1761
      %v1763 = vmul.f32 %v1762, 0.6931472
      %v1764 = vadd.f32 %v1746, %v1763
      %v1765 = vld [vmem:[#allocation5 + $0x5] sm:$0x1]
      %v1766 = vmul.f32 %v1764, 0.1
      %v1767 = vsub.f32 %v1765, %v1766
      %1768 = vst.msk [vmem:[#allocation2 + $0x5] sm:$0x1] %vm89, %v1767
      %v1769 = vld [vmem:[#allocation3] sm:$0xff]
      %v1770 = vld [vmem:[#allocation3 + $0x8] sm:$0xff]
      %v1771 = vld [vmem:[%s293] sm:$0xff]
      %v1772 = vld [vmem:[%s293 + $0x8] sm:$0xff]
      %v1773 = vsub.f32 %v1769, %v1771
      %v1774 = vsub.f32 %v1770, %v1772
      %v1775 = vmul.f32 %v1773, 10.0
      %v1776 = vmul.f32 %v1774, 10.0
      %v1777 = vsel %vm22, %v1775, -inf
      %v1778 = vsel %vm22, %v1776, -inf
      %v1779 = vmax.f32 %v1777, %v1778
      %v1780 = vrot.slane %v1779, 4
      %v1781 = vmax.f32 %v1779, %v1780
      %v1782 = vrot.slane %v1781, 2
      %v1783 = vmax.f32 %v1781, %v1782
      %v1784 = vrot.slane %v1783, 1
      %v1785 = vmax.f32 %v1783, %v1784
      %v1786 = vsub.f32 %v1775, %v1785
      %v1787 = vsub.f32 %v1776, %v1785
      %v1788 = vmul.f32 %v1786, 1.442695
      %v1789 = vpow.pop %v1788
      %v1790 = vmul.f32 %v1787, 1.442695
      %v1791 = vpow.pop %v1790
      %v1792 = vsel %vm22, %v1789, 0.0
      %v1793 = vsel %vm22, %v1791, 0.0
      %v1794 = vadd.f32 %v1792, %v1793
      %v1795 = vrot.slane %v1794, 4
      %v1796 = vadd.f32 %v1794, %v1795
      %v1797 = vrot.slane %v1796, 2
      %v1798 = vadd.f32 %v1796, %v1797
      %v1799 = vrot.slane %v1798, 1
      %v1800 = vadd.f32 %v1798, %v1799
      %v1801 = vlog2.pop %v1800
      %v1802 = vmul.f32 %v1801, 0.6931472
      %v1803 = vadd.f32 %v1785, %v1802
      %v1804 = vld [vmem:[#allocation5 + $0x6] sm:$0x1]
      %v1805 = vmul.f32 %v1803, 0.1
      %v1806 = vsub.f32 %v1804, %v1805
      %1807 = vst.msk [vmem:[#allocation2 + $0x6] sm:$0x1] %vm89, %v1806
      %v1808 = vld [vmem:[#allocation3] sm:$0xff]
      %v1809 = vld [vmem:[#allocation3 + $0x8] sm:$0xff]
      %v1810 = vld [vmem:[%s333] sm:$0xff]
      %v1811 = vld [vmem:[%s333 + $0x8] sm:$0xff]
      %v1812 = vsub.f32 %v1808, %v1810
      %v1813 = vsub.f32 %v1809, %v1811
      %v1814 = vmul.f32 %v1812, 10.0
      %v1815 = vmul.f32 %v1813, 10.0
      %v1816 = vsel %vm22, %v1814, -inf
      %v1817 = vsel %vm22, %v1815, -inf
      %v1818 = vmax.f32 %v1816, %v1817
      %v1819 = vrot.slane %v1818, 4
      %v1820 = vmax.f32 %v1818, %v1819
      %v1821 = vrot.slane %v1820, 2
      %v1822 = vmax.f32 %v1820, %v1821
      %v1823 = vrot.slane %v1822, 1
      %v1824 = vmax.f32 %v1822, %v1823
      %v1825 = vsub.f32 %v1814, %v1824
      %v1826 = vsub.f32 %v1815, %v1824
      %v1827 = vmul.f32 %v1825, 1.442695
      %v1828 = vpow.pop %v1827
      %v1829 = vmul.f32 %v1826, 1.442695
      %v1830 = vpow.pop %v1829
      %v1831 = vsel %vm22, %v1828, 0.0
      %v1832 = vsel %vm22, %v1830, 0.0
      %v1833 = vadd.f32 %v1831, %v1832
      %v1834 = vrot.slane %v1833, 4
      %v1835 = vadd.f32 %v1833, %v1834
      %v1836 = vrot.slane %v1835, 2
      %v1837 = vadd.f32 %v1835, %v1836
      %v1838 = vrot.slane %v1837, 1
      %v1839 = vadd.f32 %v1837, %v1838
      %v1840 = vlog2.pop %v1839
      %v1841 = vmul.f32 %v1840, 0.6931472
      %v1842 = vadd.f32 %v1824, %v1841
      %v1843 = vld [vmem:[#allocation5 + $0x7] sm:$0x1]
      %v1844 = vmul.f32 %v1842, 0.1
      %v1845 = vsub.f32 %v1843, %v1844
      %1846 = vst.msk [vmem:[#allocation2 + $0x7] sm:$0x1] %vm89, %v1845
      %v1847 = vld [vmem:[#allocation2] sm:$0x1]
      %v1848 = vld [vmem:[%s2] sm:$0xff]
      %v1849 = vld [vmem:[%s2 + $0x8] sm:$0xff]
      %v1850 = vlaneseq
      %v1851 = vshrl.u32 %v1850, 7
      %v1852 = vsub.s32 0, %v1851
      %v1853 = vrot.slane %v1847, %v1852
      %v1854 = vsub.f32 %v1853, %v1848
      %v1855 = vsub.f32 %v1853, %v1849
      %v1856 = vmul.f32 %v1854, 10.0
      %v1857 = vmul.f32 %v1855, 10.0
      %v1858 = vld [vmem:[#allocation2 + $0x1] sm:$0x1]
      %v1859 = vld [vmem:[%s93] sm:$0xff]
      %v1860 = vld [vmem:[%s93 + $0x8] sm:$0xff]
      %v1861 = vlaneseq
      %v1862 = vshrl.u32 %v1861, 7
      %v1863 = vsub.s32 0, %v1862
      %v1864 = vrot.slane %v1858, %v1863
      %v1865 = vsub.f32 %v1864, %v1859
      %v1866 = vsub.f32 %v1864, %v1860
      %v1867 = vmul.f32 %v1865, 10.0
      %v1868 = vmul.f32 %v1866, 10.0
      %v1869 = vmax.f32 %v1856, %v1867
      %v1870 = vmax.f32 %v1857, %v1868
      %v1871 = vld [vmem:[#allocation2 + $0x2] sm:$0x1]
      %v1872 = vld [vmem:[%s133] sm:$0xff]
      %v1873 = vld [vmem:[%s133 + $0x8] sm:$0xff]
      %v1874 = vlaneseq
      %v1875 = vshrl.u32 %v1874, 7
      %v1876 = vsub.s32 0, %v1875
      %v1877 = vrot.slane %v1871, %v1876
      %v1878 = vsub.f32 %v1877, %v1872
      %v1879 = vsub.f32 %v1877, %v1873
      %v1880 = vmul.f32 %v1878, 10.0
      %v1881 = vmul.f32 %v1879, 10.0
      %v1882 = vmax.f32 %v1869, %v1880
      %v1883 = vmax.f32 %v1870, %v1881
      %v1884 = vld [vmem:[#allocation2 + $0x3] sm:$0x1]
      %v1885 = vld [vmem:[%s173] sm:$0xff]
      %v1886 = vld [vmem:[%s173 + $0x8] sm:$0xff]
      %v1887 = vlaneseq
      %v1888 = vshrl.u32 %v1887, 7
      %v1889 = vsub.s32 0, %v1888
      %v1890 = vrot.slane %v1884, %v1889
      %v1891 = vsub.f32 %v1890, %v1885
      %v1892 = vsub.f32 %v1890, %v1886
      %v1893 = vmul.f32 %v1891, 10.0
      %v1894 = vmul.f32 %v1892, 10.0
      %v1895 = vmax.f32 %v1882, %v1893
      %v1896 = vmax.f32 %v1883, %v1894
      %v1897 = vld [vmem:[#allocation2 + $0x4] sm:$0x1]
      %v1898 = vld [vmem:[%s213] sm:$0xff]
      %v1899 = vld [vmem:[%s213 + $0x8] sm:$0xff]
      %v1900 = vlaneseq
      %v1901 = vshrl.u32 %v1900, 7
      %v1902 = vsub.s32 0, %v1901
      %v1903 = vrot.slane %v1897, %v1902
      %v1904 = vsub.f32 %v1903, %v1898
      %v1905 = vsub.f32 %v1903, %v1899
      %v1906 = vmul.f32 %v1904, 10.0
      %v1907 = vmul.f32 %v1905, 10.0
      %v1908 = vmax.f32 %v1895, %v1906
      %v1909 = vmax.f32 %v1896, %v1907
      %v1910 = vld [vmem:[#allocation2 + $0x5] sm:$0x1]
      %v1911 = vld [vmem:[%s253] sm:$0xff]
      %v1912 = vld [vmem:[%s253 + $0x8] sm:$0xff]
      %v1913 = vlaneseq
      %v1914 = vshrl.u32 %v1913, 7
      %v1915 = vsub.s32 0, %v1914
      %v1916 = vrot.slane %v1910, %v1915
      %v1917 = vsub.f32 %v1916, %v1911
      %v1918 = vsub.f32 %v1916, %v1912
      %v1919 = vmul.f32 %v1917, 10.0
      %v1920 = vmul.f32 %v1918, 10.0
      %v1921 = vmax.f32 %v1908, %v1919
      %v1922 = vmax.f32 %v1909, %v1920
      %v1923 = vld [vmem:[#allocation2 + $0x6] sm:$0x1]
      %v1924 = vld [vmem:[%s293] sm:$0xff]
      %v1925 = vld [vmem:[%s293 + $0x8] sm:$0xff]
      %v1926 = vlaneseq
      %v1927 = vshrl.u32 %v1926, 7
      %v1928 = vsub.s32 0, %v1927
      %v1929 = vrot.slane %v1923, %v1928
      %v1930 = vsub.f32 %v1929, %v1924
      %v1931 = vsub.f32 %v1929, %v1925
      %v1932 = vmul.f32 %v1930, 10.0
      %v1933 = vmul.f32 %v1931, 10.0
      %v1934 = vmax.f32 %v1921, %v1932
      %v1935 = vmax.f32 %v1922, %v1933
      %v1936 = vld [vmem:[#allocation2 + $0x7] sm:$0x1]
      %v1937 = vld [vmem:[%s333] sm:$0xff]
      %v1938 = vld [vmem:[%s333 + $0x8] sm:$0xff]
      %v1939 = vlaneseq
      %v1940 = vshrl.u32 %v1939, 7
      %v1941 = vsub.s32 0, %v1940
      %v1942 = vrot.slane %v1936, %v1941
      %v1943 = vsub.f32 %v1942, %v1937
      %v1944 = vsub.f32 %v1942, %v1938
      %v1945 = vmul.f32 %v1943, 10.0
      %v1946 = vmul.f32 %v1944, 10.0
      %v1947 = vmax.f32 %v1934, %v1945
      %v1948 = vmax.f32 %v1935, %v1946
      %v1949 = vsub.f32 %v1856, %v1947
      %v1950 = vsub.f32 %v1857, %v1948
      %v1951 = vmul.f32 %v1949, 1.442695
      %v1952 = vpow.pop %v1951
      %v1953 = vmul.f32 %v1950, 1.442695
      %v1954 = vpow.pop %v1953
      %v1955 = vadd.f32 %v1952, 0.0
      %v1956 = vadd.f32 %v1954, 0.0
      %v1957 = vsub.f32 %v1867, %v1947
      %v1958 = vsub.f32 %v1868, %v1948
      %v1959 = vmul.f32 %v1957, 1.442695
      %v1960 = vpow.pop %v1959
      %v1961 = vmul.f32 %v1958, 1.442695
      %v1962 = vpow.pop %v1961
      %v1963 = vadd.f32 %v1955, %v1960
      %v1964 = vadd.f32 %v1956, %v1962
      %v1965 = vsub.f32 %v1880, %v1947
      %v1966 = vsub.f32 %v1881, %v1948
      %v1967 = vmul.f32 %v1965, 1.442695
      %v1968 = vpow.pop %v1967
      %v1969 = vmul.f32 %v1966, 1.442695
      %v1970 = vpow.pop %v1969
      %v1971 = vadd.f32 %v1963, %v1968
      %v1972 = vadd.f32 %v1964, %v1970
      %v1973 = vsub.f32 %v1893, %v1947
      %v1974 = vsub.f32 %v1894, %v1948
      %v1975 = vmul.f32 %v1973, 1.442695
      %v1976 = vpow.pop %v1975
      %v1977 = vmul.f32 %v1974, 1.442695
      %v1978 = vpow.pop %v1977
      %v1979 = vadd.f32 %v1971, %v1976
      %v1980 = vadd.f32 %v1972, %v1978
      %v1981 = vsub.f32 %v1906, %v1947
      %v1982 = vsub.f32 %v1907, %v1948
      %v1983 = vmul.f32 %v1981, 1.442695
      %v1984 = vpow.pop %v1983
      %v1985 = vmul.f32 %v1982, 1.442695
      %v1986 = vpow.pop %v1985
      %v1987 = vadd.f32 %v1979, %v1984
      %v1988 = vadd.f32 %v1980, %v1986
      %v1989 = vsub.f32 %v1919, %v1947
      %v1990 = vsub.f32 %v1920, %v1948
      %v1991 = vmul.f32 %v1989, 1.442695
      %v1992 = vpow.pop %v1991
      %v1993 = vmul.f32 %v1990, 1.442695
      %v1994 = vpow.pop %v1993
      %v1995 = vadd.f32 %v1987, %v1992
      %v1996 = vadd.f32 %v1988, %v1994
      %v1997 = vsub.f32 %v1932, %v1947
      %v1998 = vsub.f32 %v1933, %v1948
      %v1999 = vmul.f32 %v1997, 1.442695
      %v2000 = vpow.pop %v1999
      %v2001 = vmul.f32 %v1998, 1.442695
      %v2002 = vpow.pop %v2001
      %v2003 = vadd.f32 %v1995, %v2000
      %v2004 = vadd.f32 %v1996, %v2002
      %v2005 = vsub.f32 %v1945, %v1947
      %v2006 = vsub.f32 %v1946, %v1948
      %v2007 = vmul.f32 %v2005, 1.442695
      %v2008 = vpow.pop %v2007
      %v2009 = vmul.f32 %v2006, 1.442695
      %v2010 = vpow.pop %v2009
      %v2011 = vadd.f32 %v2003, %v2008
      %v2012 = vadd.f32 %v2004, %v2010
      %v2013 = vld [vmem:[#allocation6] sm:$0xff]
      %v2014 = vld [vmem:[#allocation6 + $0x8] sm:$0xff]
      %v2015 = vlog2.pop %v2011
      %v2016 = vmul.f32 %v2015, 0.6931472
      %v2017 = vlog2.pop %v2012
      %v2018 = vmul.f32 %v2017, 0.6931472
      %v2019 = vadd.f32 %v1947, %v2016
      %v2020 = vadd.f32 %v1948, %v2018
      %v2021 = vmul.f32 %v2019, 0.1
      %v2022 = vmul.f32 %v2020, 0.1
      %v2023 = vsub.f32 %v2013, %v2021
      %v2024 = vsub.f32 %v2014, %v2022
      %2025 = vst.msk [vmem:[#allocation3] sm:$0xff] %vm22, %v2023
      %2026 = vst.msk [vmem:[#allocation3 + $0x8] sm:$0xff] %vm22, %v2024
      %v2027 = vld [vmem:[#allocation2] sm:$0xff]
      %v2028 = vld [vmem:[#allocation4] sm:$0xff]
      %v2029 = vsub.f32 %v2027, %v2028
      %v2030 = vand.u32 2147483647, %v2029
      %v2031 = vsel %vm22, %v2030, 0.0
      %2032 = vadd.xlane.f32.xlu0 %v2031
      %v2033 = vpop.xlane.xlu0 %2032
      %v2034 = vrot.slane %v2033, 4
      %v2035 = vadd.f32 %v2033, %v2034
      %v2036 = vrot.slane %v2035, 2
      %v2037 = vadd.f32 %v2035, %v2036
      %v2038 = vrot.slane %v2037, 1
      %v2039 = vadd.f32 %v2037, %v2038
      %s2040 = vtos %v2039
    $region18: #{tpu_custom_call.1} parent=1 // loop_footer
      _
    $region19: #{tpu_custom_call.1} parent=1 // loop_footer_branch
      %39 = sbr.rel target = $region15
    $region20: #{tpu_custom_call.1} parent=1 // loop_exit
      _
    %v2041 = vld [vmem:[#allocation2] sm:$0x1]
    %v2042 = vld [vmem:[#allocation3] sm:$0xff]
    %v2043 = vld [vmem:[#allocation3 + $0x8] sm:$0xff]
    %v2044 = vlaneseq
    %v2045 = vshrl.u32 %v2044, 7
    %v2046 = vsub.s32 0, %v2045
    %v2047 = vrot.slane %v2041, %v2046
    %v2048 = vadd.f32 %v2047, %v2042
    %v2049 = vadd.f32 %v2047, %v2043
    %v2050 = vld [vmem:[%s2] sm:$0xff]
    %v2051 = vld [vmem:[%s2 + $0x8] sm:$0xff]
    %v2052 = vsub.f32 %v2048, %v2050
    %v2053 = vsub.f32 %v2049, %v2051
    %v2054 = vmul.f32 %v2052, 10.0
    %v2055 = vmul.f32 %v2053, 10.0
    %v2056 = vmul.f32 %v2054, 1.442695
    %v2057 = vpow.pop %v2056
    %v2058 = vmul.f32 %v2055, 1.442695
    %v2059 = vpow.pop %v2058
    %2060 = vst.msk [vmem:[%s4] sm:$0xff] %vm22, %v2057
    %2061 = vst.msk [vmem:[%s4 + $0x8] sm:$0xff] %vm22, %v2059
    %v2062 = vld [vmem:[%s2] sm:$0xff]
    %v2063 = vld [vmem:[%s2 + $0x8] sm:$0xff]
    %v2064 = vmul.f32 %v2057, %v2062
    %v2065 = vmul.f32 %v2059, %v2063
    %v2066 = vsel %vm22, %v2064, 0.0
    %v2067 = vsel %vm22, %v2065, 0.0
    %v2068 = vadd.f32 %v2066, %v2067
    %v2069 = vrot.slane %v2068, 4
    %v2070 = vadd.f32 %v2068, %v2069
    %v2071 = vrot.slane %v2070, 2
    %v2072 = vadd.f32 %v2070, %v2071
    %v2073 = vrot.slane %v2072, 1
    %v2074 = vadd.f32 %v2072, %v2073
    %v2075 = vadd.f32 %v2074, 0.0
    %v2076 = vld [vmem:[#allocation2 + $0x1] sm:$0x1]
    %v2077 = vld [vmem:[#allocation3] sm:$0xff]
    %v2078 = vld [vmem:[#allocation3 + $0x8] sm:$0xff]
    %v2079 = vlaneseq
    %v2080 = vshrl.u32 %v2079, 7
    %v2081 = vsub.s32 0, %v2080
    %v2082 = vrot.slane %v2076, %v2081
    %v2083 = vadd.f32 %v2082, %v2077
    %v2084 = vadd.f32 %v2082, %v2078
    %s2085 = scalar_lea.vmem %s2, 16
    %v2086 = vld [vmem:[%s2085] sm:$0xff]
    %v2087 = vld [vmem:[%s2085 + $0x8] sm:$0xff]
    %v2088 = vsub.f32 %v2083, %v2086
    %v2089 = vsub.f32 %v2084, %v2087
    %v2090 = vmul.f32 %v2088, 10.0
    %v2091 = vmul.f32 %v2089, 10.0
    %v2092 = vmul.f32 %v2090, 1.442695
    %v2093 = vpow.pop %v2092
    %v2094 = vmul.f32 %v2091, 1.442695
    %v2095 = vpow.pop %v2094
    %s2096 = scalar_lea.vmem %s4, 16
    %2097 = vst.msk [vmem:[%s2096] sm:$0xff] %vm22, %v2093
    %2098 = vst.msk [vmem:[%s2096 + $0x8] sm:$0xff] %vm22, %v2095
    %v2099 = vld [vmem:[%s2085] sm:$0xff]
    %v2100 = vld [vmem:[%s2085 + $0x8] sm:$0xff]
    %v2101 = vmul.f32 %v2093, %v2099
    %v2102 = vmul.f32 %v2095, %v2100
    %v2103 = vsel %vm22, %v2101, 0.0
    %v2104 = vsel %vm22, %v2102, 0.0
    %v2105 = vadd.f32 %v2103, %v2104
    %v2106 = vrot.slane %v2105, 4
    %v2107 = vadd.f32 %v2105, %v2106
    %v2108 = vrot.slane %v2107, 2
    %v2109 = vadd.f32 %v2107, %v2108
    %v2110 = vrot.slane %v2109, 1
    %v2111 = vadd.f32 %v2109, %v2110
    %v2112 = vadd.f32 %v2075, %v2111
    %v2113 = vld [vmem:[#allocation2 + $0x2] sm:$0x1]
    %v2114 = vld [vmem:[#allocation3] sm:$0xff]
    %v2115 = vld [vmem:[#allocation3 + $0x8] sm:$0xff]
    %v2116 = vlaneseq
    %v2117 = vshrl.u32 %v2116, 7
    %v2118 = vsub.s32 0, %v2117
    %v2119 = vrot.slane %v2113, %v2118
    %v2120 = vadd.f32 %v2119, %v2114
    %v2121 = vadd.f32 %v2119, %v2115
    %s2122 = scalar_lea.vmem %s2, 32
    %v2123 = vld [vmem:[%s2122] sm:$0xff]
    %v2124 = vld [vmem:[%s2122 + $0x8] sm:$0xff]
    %v2125 = vsub.f32 %v2120, %v2123
    %v2126 = vsub.f32 %v2121, %v2124
    %v2127 = vmul.f32 %v2125, 10.0
    %v2128 = vmul.f32 %v2126, 10.0
    %v2129 = vmul.f32 %v2127, 1.442695
    %v2130 = vpow.pop %v2129
    %v2131 = vmul.f32 %v2128, 1.442695
    %v2132 = vpow.pop %v2131
    %s2133 = scalar_lea.vmem %s4, 32
    %2134 = vst.msk [vmem:[%s2133] sm:$0xff] %vm22, %v2130
    %2135 = vst.msk [vmem:[%s2133 + $0x8] sm:$0xff] %vm22, %v2132
    %v2136 = vld [vmem:[%s2122] sm:$0xff]
    %v2137 = vld [vmem:[%s2122 + $0x8] sm:$0xff]
    %v2138 = vmul.f32 %v2130, %v2136
    %v2139 = vmul.f32 %v2132, %v2137
    %v2140 = vsel %vm22, %v2138, 0.0
    %v2141 = vsel %vm22, %v2139, 0.0
    %v2142 = vadd.f32 %v2140, %v2141
    %v2143 = vrot.slane %v2142, 4
    %v2144 = vadd.f32 %v2142, %v2143
    %v2145 = vrot.slane %v2144, 2
    %v2146 = vadd.f32 %v2144, %v2145
    %v2147 = vrot.slane %v2146, 1
    %v2148 = vadd.f32 %v2146, %v2147
    %v2149 = vadd.f32 %v2112, %v2148
    %v2150 = vld [vmem:[#allocation2 + $0x3] sm:$0x1]
    %v2151 = vld [vmem:[#allocation3] sm:$0xff]
    %v2152 = vld [vmem:[#allocation3 + $0x8] sm:$0xff]
    %v2153 = vlaneseq
    %v2154 = vshrl.u32 %v2153, 7
    %v2155 = vsub.s32 0, %v2154
    %v2156 = vrot.slane %v2150, %v2155
    %v2157 = vadd.f32 %v2156, %v2151
    %v2158 = vadd.f32 %v2156, %v2152
    %s2159 = scalar_lea.vmem %s2, 48
    %v2160 = vld [vmem:[%s2159] sm:$0xff]
    %v2161 = vld [vmem:[%s2159 + $0x8] sm:$0xff]
    %v2162 = vsub.f32 %v2157, %v2160
    %v2163 = vsub.f32 %v2158, %v2161
    %v2164 = vmul.f32 %v2162, 10.0
    %v2165 = vmul.f32 %v2163, 10.0
    %v2166 = vmul.f32 %v2164, 1.442695
    %v2167 = vpow.pop %v2166
    %v2168 = vmul.f32 %v2165, 1.442695
    %v2169 = vpow.pop %v2168
    %s2170 = scalar_lea.vmem %s4, 48
    %2171 = vst.msk [vmem:[%s2170] sm:$0xff] %vm22, %v2167
    %2172 = vst.msk [vmem:[%s2170 + $0x8] sm:$0xff] %vm22, %v2169
    %v2173 = vld [vmem:[%s2159] sm:$0xff]
    %v2174 = vld [vmem:[%s2159 + $0x8] sm:$0xff]
    %v2175 = vmul.f32 %v2167, %v2173
    %v2176 = vmul.f32 %v2169, %v2174
    %v2177 = vsel %vm22, %v2175, 0.0
    %v2178 = vsel %vm22, %v2176, 0.0
    %v2179 = vadd.f32 %v2177, %v2178
    %v2180 = vrot.slane %v2179, 4
    %v2181 = vadd.f32 %v2179, %v2180
    %v2182 = vrot.slane %v2181, 2
    %v2183 = vadd.f32 %v2181, %v2182
    %v2184 = vrot.slane %v2183, 1
    %v2185 = vadd.f32 %v2183, %v2184
    %v2186 = vadd.f32 %v2149, %v2185
    %v2187 = vld [vmem:[#allocation2 + $0x4] sm:$0x1]
    %v2188 = vld [vmem:[#allocation3] sm:$0xff]
    %v2189 = vld [vmem:[#allocation3 + $0x8] sm:$0xff]
    %v2190 = vlaneseq
    %v2191 = vshrl.u32 %v2190, 7
    %v2192 = vsub.s32 0, %v2191
    %v2193 = vrot.slane %v2187, %v2192
    %v2194 = vadd.f32 %v2193, %v2188
    %v2195 = vadd.f32 %v2193, %v2189
    %s2196 = scalar_lea.vmem %s2, 64
    %v2197 = vld [vmem:[%s2196] sm:$0xff]
    %v2198 = vld [vmem:[%s2196 + $0x8] sm:$0xff]
    %v2199 = vsub.f32 %v2194, %v2197
    %v2200 = vsub.f32 %v2195, %v2198
    %v2201 = vmul.f32 %v2199, 10.0
    %v2202 = vmul.f32 %v2200, 10.0
    %v2203 = vmul.f32 %v2201, 1.442695
    %v2204 = vpow.pop %v2203
    %v2205 = vmul.f32 %v2202, 1.442695
    %v2206 = vpow.pop %v2205
    %s2207 = scalar_lea.vmem %s4, 64
    %2208 = vst.msk [vmem:[%s2207] sm:$0xff] %vm22, %v2204
    %2209 = vst.msk [vmem:[%s2207 + $0x8] sm:$0xff] %vm22, %v2206
    %v2210 = vld [vmem:[%s2196] sm:$0xff]
    %v2211 = vld [vmem:[%s2196 + $0x8] sm:$0xff]
    %v2212 = vmul.f32 %v2204, %v2210
    %v2213 = vmul.f32 %v2206, %v2211
    %v2214 = vsel %vm22, %v2212, 0.0
    %v2215 = vsel %vm22, %v2213, 0.0
    %v2216 = vadd.f32 %v2214, %v2215
    %v2217 = vrot.slane %v2216, 4
    %v2218 = vadd.f32 %v2216, %v2217
    %v2219 = vrot.slane %v2218, 2
    %v2220 = vadd.f32 %v2218, %v2219
    %v2221 = vrot.slane %v2220, 1
    %v2222 = vadd.f32 %v2220, %v2221
    %v2223 = vadd.f32 %v2186, %v2222
    %v2224 = vld [vmem:[#allocation2 + $0x5] sm:$0x1]
    %v2225 = vld [vmem:[#allocation3] sm:$0xff]
    %v2226 = vld [vmem:[#allocation3 + $0x8] sm:$0xff]
    %v2227 = vlaneseq
    %v2228 = vshrl.u32 %v2227, 7
    %v2229 = vsub.s32 0, %v2228
    %v2230 = vrot.slane %v2224, %v2229
    %v2231 = vadd.f32 %v2230, %v2225
    %v2232 = vadd.f32 %v2230, %v2226
    %s2233 = scalar_lea.vmem %s2, 80
    %v2234 = vld [vmem:[%s2233] sm:$0xff]
    %v2235 = vld [vmem:[%s2233 + $0x8] sm:$0xff]
    %v2236 = vsub.f32 %v2231, %v2234
    %v2237 = vsub.f32 %v2232, %v2235
    %v2238 = vmul.f32 %v2236, 10.0
    %v2239 = vmul.f32 %v2237, 10.0
    %v2240 = vmul.f32 %v2238, 1.442695
    %v2241 = vpow.pop %v2240
    %v2242 = vmul.f32 %v2239, 1.442695
    %v2243 = vpow.pop %v2242
    %s2244 = scalar_lea.vmem %s4, 80
    %2245 = vst.msk [vmem:[%s2244] sm:$0xff] %vm22, %v2241
    %2246 = vst.msk [vmem:[%s2244 + $0x8] sm:$0xff] %vm22, %v2243
    %v2247 = vld [vmem:[%s2233] sm:$0xff]
    %v2248 = vld [vmem:[%s2233 + $0x8] sm:$0xff]
    %v2249 = vmul.f32 %v2241, %v2247
    %v2250 = vmul.f32 %v2243, %v2248
    %v2251 = vsel %vm22, %v2249, 0.0
    %v2252 = vsel %vm22, %v2250, 0.0
    %v2253 = vadd.f32 %v2251, %v2252
    %v2254 = vrot.slane %v2253, 4
    %v2255 = vadd.f32 %v2253, %v2254
    %v2256 = vrot.slane %v2255, 2
    %v2257 = vadd.f32 %v2255, %v2256
    %v2258 = vrot.slane %v2257, 1
    %v2259 = vadd.f32 %v2257, %v2258
    %v2260 = vadd.f32 %v2223, %v2259
    %v2261 = vld [vmem:[#allocation2 + $0x6] sm:$0x1]
    %v2262 = vld [vmem:[#allocation3] sm:$0xff]
    %v2263 = vld [vmem:[#allocation3 + $0x8] sm:$0xff]
    %v2264 = vlaneseq
    %v2265 = vshrl.u32 %v2264, 7
    %v2266 = vsub.s32 0, %v2265
    %v2267 = vrot.slane %v2261, %v2266
    %v2268 = vadd.f32 %v2267, %v2262
    %v2269 = vadd.f32 %v2267, %v2263
    %s2270 = scalar_lea.vmem %s2, 96
    %v2271 = vld [vmem:[%s2270] sm:$0xff]
    %v2272 = vld [vmem:[%s2270 + $0x8] sm:$0xff]
    %v2273 = vsub.f32 %v2268, %v2271
    %v2274 = vsub.f32 %v2269, %v2272
    %v2275 = vmul.f32 %v2273, 10.0
    %v2276 = vmul.f32 %v2274, 10.0
    %v2277 = vmul.f32 %v2275, 1.442695
    %v2278 = vpow.pop %v2277
    %v2279 = vmul.f32 %v2276, 1.442695
    %v2280 = vpow.pop %v2279
    %s2281 = scalar_lea.vmem %s4, 96
    %2282 = vst.msk [vmem:[%s2281] sm:$0xff] %vm22, %v2278
    %2283 = vst.msk [vmem:[%s2281 + $0x8] sm:$0xff] %vm22, %v2280
    %v2284 = vld [vmem:[%s2270] sm:$0xff]
    %v2285 = vld [vmem:[%s2270 + $0x8] sm:$0xff]
    %v2286 = vmul.f32 %v2278, %v2284
    %v2287 = vmul.f32 %v2280, %v2285
    %v2288 = vsel %vm22, %v2286, 0.0
    %v2289 = vsel %vm22, %v2287, 0.0
    %v2290 = vadd.f32 %v2288, %v2289
    %v2291 = vrot.slane %v2290, 4
    %v2292 = vadd.f32 %v2290, %v2291
    %v2293 = vrot.slane %v2292, 2
    %v2294 = vadd.f32 %v2292, %v2293
    %v2295 = vrot.slane %v2294, 1
    %v2296 = vadd.f32 %v2294, %v2295
    %v2297 = vadd.f32 %v2260, %v2296
    %v2298 = vld [vmem:[#allocation2 + $0x7] sm:$0x1]
    %v2299 = vld [vmem:[#allocation3] sm:$0xff]
    %v2300 = vld [vmem:[#allocation3 + $0x8] sm:$0xff]
    %v2301 = vlaneseq
    %v2302 = vshrl.u32 %v2301, 7
    %v2303 = vsub.s32 0, %v2302
    %v2304 = vrot.slane %v2298, %v2303
    %v2305 = vadd.f32 %v2304, %v2299
    %v2306 = vadd.f32 %v2304, %v2300
    %s2307 = scalar_lea.vmem %s2, 112
    %v2308 = vld [vmem:[%s2307] sm:$0xff]
    %v2309 = vld [vmem:[%s2307 + $0x8] sm:$0xff]
    %v2310 = vsub.f32 %v2305, %v2308
    %v2311 = vsub.f32 %v2306, %v2309
    %v2312 = vmul.f32 %v2310, 10.0
    %v2313 = vmul.f32 %v2311, 10.0
    %v2314 = vmul.f32 %v2312, 1.442695
    %v2315 = vpow.pop %v2314
    %v2316 = vmul.f32 %v2313, 1.442695
    %v2317 = vpow.pop %v2316
    %s2318 = scalar_lea.vmem %s4, 112
    %2319 = vst.msk [vmem:[%s2318] sm:$0xff] %vm22, %v2315
    %2320 = vst.msk [vmem:[%s2318 + $0x8] sm:$0xff] %vm22, %v2317
    %v2321 = vld [vmem:[%s2307] sm:$0xff]
    %v2322 = vld [vmem:[%s2307 + $0x8] sm:$0xff]
    %v2323 = vmul.f32 %v2315, %v2321
    %v2324 = vmul.f32 %v2317, %v2322
    %v2325 = vsel %vm22, %v2323, 0.0
    %v2326 = vsel %vm22, %v2324, 0.0
    %v2327 = vadd.f32 %v2325, %v2326
    %v2328 = vrot.slane %v2327, 4
    %v2329 = vadd.f32 %v2327, %v2328
    %v2330 = vrot.slane %v2329, 2
    %v2331 = vadd.f32 %v2329, %v2330
    %v2332 = vrot.slane %v2331, 1
    %v2333 = vadd.f32 %v2331, %v2332
    %v2334 = vadd.f32 %v2297, %v2333
    %vm2335 = vcmask 24576
    %2336 = vst.msk [vmem:[#allocation7] sm:$0x1] %vm2335, %v2334
    // Predicated region
    $region21: #{tpu_custom_call.1} parent=1 // pred_check
      _
    $region22: #{tpu_custom_call.1} parent=1 // pred_check_branch
      %2338 = sbr.rel (0) target = $region24
    $region23: #{tpu_custom_call.1} parent=1 // pred_region
      %s2340 = ssub.s32 16, 16
      %2341 = vsyncadd [#allocation8], %s2340
      %s2343 = sshll.u32 [#allocation7], 4
      %s2344 = int_to_ptr.vmem [resolvable:$true] %s2343
      %2346 = dma.vmem_to_hbm [thread:$0]  %s2344, 16, %s3, [#allocation8]
    $region24: #{tpu_custom_call.1} parent=1 // pred_fallthru
      _
    // Predicated region
    $region25: #{tpu_custom_call.1} parent=1 // pred_check
      _
    $region26: #{tpu_custom_call.1} parent=1 // pred_check_branch
      %2348 = sbr.rel (0) target = $region28
    $region27: #{tpu_custom_call.1} parent=1 // pred_region
      _
    $region28: #{tpu_custom_call.1} parent=1 // pred_fallthru
      _
    // Predicated region
    $region29: #{tpu_custom_call.1} parent=1 // pred_check
      _
    $region30: #{tpu_custom_call.1} parent=1 // pred_check_branch
      %2350 = sbr.rel (0) target = $region32
    $region31: #{tpu_custom_call.1} parent=1 // pred_region
      %2351 = dma.done [#allocation8], 16
    $region32: #{tpu_custom_call.1} parent=1 // pred_fallthru
      _
    // Predicated region
    $region33: #{tpu_custom_call.1} parent=1 // pred_check
      _
    $region34: #{tpu_custom_call.1} parent=1 // pred_check_branch
      %2353 = sbr.rel (0) target = $region36
    $region35: #{tpu_custom_call.1} parent=1 // pred_region
      _
    $region36: #{tpu_custom_call.1} parent=1 // pred_fallthru
      _
    %2354 = vsyncpa [#allocation8], 1

</llo_original>
